<compile_context>
chip_gen: v6e
topology: v6e:2x2x1
jax: 0.10.0
libtpu: 0.0.40
codegen_flags: <defaults>
</compile_context>

<pallas_src>
import jax
import jax.numpy as jnp
from jax import lax
from jax.experimental import pallas as pl
from jax.experimental.pallas import tpu as pltpu

CW = 128  # every channel axis is padded to one full lane tile inside the kernel


# ----------------------------- host-side helpers --------------------------- #
def _pad_mat(m):
    """(r, c) -> (CW, CW) zero-padded f32."""
    r, c = m.shape
    assert r <= CW and c <= CW
    return jnp.zeros((CW, CW), jnp.float32).at[:r, :c].set(m.astype(jnp.float32))


def _pad_vec(v):
    v = jnp.asarray(v, jnp.float32).reshape(-1)
    assert v.shape[0] <= CW
    return jnp.zeros((CW,), jnp.float32).at[:v.shape[0]].set(v)


def _num_grid_steps(batch):
    """1 grid step on v5e/v6e (single TensorCore), 2 'parallel' steps on v7x."""
    try:
        kind = jax.devices()[0].device_kind.lower()
    except Exception:
        return 1
    if batch % 2 == 0 and "v7" in kind:
        return 2
    return 1


# ------------------------- fused forward (one kernel) ----------------------- #
def densenet1d_forward(params, x, *, eps=1e-5, grid_steps=None):
    """x: (B, C_in, L) float32, PyTorch NCL layout. Returns (B, num_classes)."""
    B, C_in, L0 = x.shape
    assert L0 % 2 == 0
    G = _num_grid_steps(B) if grid_steps is None else grid_steps
    if B % G != 0:
        G = 1
    Bp = B // G  # samples folded into the matmul M axis per grid step

    # channels-last + lane-padded input (the only host-side layout change)
    x_nlc = jnp.transpose(x, (0, 2, 1)).astype(jnp.float32)        # (B, L0, C_in)
    x_pad = jnp.pad(x_nlc, ((0, 0), (0, 0), (0, CW - C_in)))       # (B, L0, 128)

    # ---- pack weights: one (n_mat,128,128) slab + one (n_vec,128) slab ----
    mats, vecs = [], []

    def add_conv(w):                      # (C_out, C_in, K) -> per-tap (C_in, C_out)
        row0 = len(mats)
        for k in range(w.shape[2]):
            mats.append(_pad_mat(jnp.transpose(w[:, :, k])))
        return row0

    def add_mat(m):
        mats.append(_pad_mat(m))
        return len(mats) - 1

    def add_vec(v):
        vecs.append(_pad_vec(v))
        return len(vecs) - 1

    w0, b0 = params["conv0"]
    K0 = w0.shape[2]
    P0 = (K0 - 1) // 2
    i_w0, i_b0 = add_conv(w0), add_vec(b0)

    meta_blocks = []
    C_cur, L_cur = w0.shape[0], L0 // 2                              # after pool0
    for blk, trans in params["blocks"]:
        w1, b1 = blk["conv1"]
        w2, b2 = blk["conv2"]
        g, K1 = w1.shape[0], w1.shape[2]
        P1 = (K1 - 1) // 2
        entry = dict(C=C_cur, g=g, K=K1, P=P1, L=L_cur,
                     w1=add_conv(w1), b1=add_vec(b1),
                     w2=add_conv(w2), b2=add_vec(b2), trans=None)
        if trans is not None:
            wt, bt = trans
            # split the 1x1 transition conv over the two concat channel groups
            entry["trans"] = (add_mat(jnp.transpose(wt[:, :C_cur, 0])),
                              add_mat(jnp.transpose(wt[:, C_cur:C_cur + g, 0])),
                              add_vec(bt))
            C_cur, L_cur = wt.shape[0], L_cur // 2
        else:
            C_cur = C_cur + g
        meta_blocks.append(entry)

    # head: fold eval-mode BatchNorm1d to scale/shift; split classifier by group
    last = meta_blocks[-1]
    C_a, g_b, L_last = last["C"], last["g"], last["L"]
    gamma, beta, rm, rv = params["bn"]
    scale = gamma / jnp.sqrt(rv + eps)
    shift = beta - rm * scale
    w_cls, b_cls = params["cls"]
    N = w_cls.shape[0]
    i_sa, i_ha = add_vec(scale[:C_a]), add_vec(shift[:C_a])
    i_sb, i_hb = add_vec(scale[C_a:C_a + g_b]), add_vec(shift[C_a:C_a + g_b])
    i_wa = add_mat(jnp.transpose(w_cls[:, :C_a]))
    i_wb = add_mat(jnp.transpose(w_cls[:, C_a:C_a + g_b]))
    i_bc = add_vec(b_cls)

    w_pack = jnp.stack(mats, axis=0)                                # (n_mat,128,128)
    v_pack = jnp.stack(vecs, axis=0)                                # (n_vec,128)
    n_mat, n_vec = w_pack.shape[0], v_pack.shape[0]
    meta = tuple((e["K"], e["P"], e["L"], e["w1"], e["b1"],
                  e["w2"], e["b2"], e["trans"]) for e in meta_blocks)

    def kernel(x_ref, w_ref, v_ref, o_ref, pad_ref):
        def vrow(i):                      # (1, CW) bias / scale / shift row
            return v_ref[i:i + 1, :]

        def conv_relu(x2d, L, K, P, w_row0, b_row):
            """Conv1d('same') + ReLU on a batch-folded (Bp*L, CW) slab via K
            shifted full-width matmuls against a per-sample padded scratch."""
            if P > 0:
                z = jnp.zeros((Bp, P, CW), jnp.float32)
                pad_ref[:, 0:P, :] = z                     # only border rows zeroed
                pad_ref[:, L + P:L + 2 * P, :] = z
            for s in range(Bp):                            # Bp full-width stores
                pad_ref[s, P:P + L, :] = x2d[s * L:(s + 1) * L, :]
            y = None
            for k in range(K):
                tap = pad_ref[:, k:k + L, :].reshape(Bp * L, CW)
                t = jnp.dot(tap, w_ref[w_row0 + k],
                            preferred_element_type=jnp.float32)
                y = t if y is None else y + t
            return jnp.maximum(y + vrow(b_row), 0.0)

        def maxpool2(x2d):
            """MaxPool1d(k=2,s=2): even/odd row selection via two tiny 0/1
            matmuls (lane-dense, no strided or masked memory ops) + max."""
            R = x2d.shape[0]
            Rh = R // 2
            r = lax.broadcasted_iota(jnp.int32, (Rh, R), 0)
            c = lax.broadcasted_iota(jnp.int32, (Rh, R), 1)
            se = jnp.where(c == 2 * r, 1.0, 0.0).astype(jnp.float32)
            so = jnp.where(c == 2 * r + 1, 1.0, 0.0).astype(jnp.float32)
            ev = jnp.dot(se, x2d, preferred_element_type=jnp.float32)
            od = jnp.dot(so, x2d, preferred_element_type=jnp.float32)
            return jnp.maximum(ev, od)

        def avg_rows(x2d, L):
            """adaptive_avg_pool1d(1): per-sample mean over L rows as a matmul."""
            R = x2d.shape[0]
            r = lax.broadcasted_iota(jnp.int32, (Bp, R), 0)
            c = lax.broadcasted_iota(jnp.int32, (Bp, R), 1)
            a = jnp.where((c >= r * L) & (c < r * L + L),
                          1.0 / L, 0.0).astype(jnp.float32)
            return jnp.dot(a, x2d, preferred_element_type=jnp.float32)  # (Bp, CW)

        # conv0 + relu0 + pool0
        h = conv_relu(x_ref[...].reshape(Bp * L0, CW), L0, K0, P0, i_w0, i_b0)
        h = maxpool2(h)

        h_last = o2_last = None
        for (K1, P1, L, iw1, ib1, iw2, ib2, trans) in meta:
            # DenseBlock: conv1 -> relu -> conv2 -> relu
            o1 = conv_relu(h, L, K1, P1, iw1, ib1)
            o2 = conv_relu(o1, L, K1, P1, iw2, ib2)
            if trans is not None:
                # TransitionBlock on the *virtual* concat [h | o2]: contraction
                # split by channel group (concat never materialized), then pool.
                ita, itb, ibt = trans
                t = (jnp.dot(h, w_ref[ita], preferred_element_type=jnp.float32)
                     + jnp.dot(o2, w_ref[itb], preferred_element_type=jnp.float32)
                     + vrow(ibt))
                h = maxpool2(jnp.maximum(t, 0.0))
            else:
                h_last, o2_last = h, o2

        # norm5 (folded eval BN) + adaptive_avg_pool1d(1) + classifier,
        # split over the two concat groups; lane-dense (Bp, 128) output.
        m_a = avg_rows(h_last, L_last)
        m_b = avg_rows(o2_last, L_last)
        y = (jnp.dot(m_a * vrow(i_sa) + vrow(i_ha), w_ref[i_wa],
                     preferred_element_type=jnp.float32)
             + jnp.dot(m_b * vrow(i_sb) + vrow(i_hb), w_ref[i_wb],
                       preferred_element_type=jnp.float32)
             + vrow(i_bc))
        o_ref[...] = y

    out128 = pl.pallas_call(
        kernel,
        out_shape=jax.ShapeDtypeStruct((B, CW), jnp.float32),
        grid=(G,),
        in_specs=[
            pl.BlockSpec((Bp, L0, CW), lambda i: (i, 0, 0)),
            pl.BlockSpec((n_mat, CW, CW), lambda i: (0, 0, 0)),
            pl.BlockSpec((n_vec, CW), lambda i: (0, 0)),
        ],
        out_specs=pl.BlockSpec((Bp, CW), lambda i: (i, 0)),
        scratch_shapes=[pltpu.VMEM((Bp, L0 + 2 * P0, CW), jnp.float32)],
        compiler_params=pltpu.CompilerParams(
            dimension_semantics=("parallel",)),
    )(x_pad, w_pack, v_pack)
    return out128[:, :N]


# ----------------------- pure-JAX reference (correctness) ------------------- #
def _reference_forward(params, x, eps=1e-5):
    def conv_relu(h, w, b, padding):
        K = w.shape[2]
        L_out = h.shape[2] + 2 * padding - (K - 1)
        hp = jnp.pad(h, ((0, 0), (0, 0), (padding, padding)))
        out = jnp.zeros((h.shape[0], w.shape[0], L_out), jnp.float32)
        for k in range(K):
            out = out + jnp.einsum("oc,bcl->bol", w[:, :, k], hp[:, :, k:k + L_out])
        return jnp.maximum(out + b[None, :, None], 0.0)

    def pool2(h):
        B, C, L = h.shape
        L2 = L // 2
        return h[:, :, :2 * L2].reshape(B, C, L2, 2).max(axis=-1)

    w0, b0 = params["conv0"]
    h = pool2(conv_relu(x, w0, b0, 3))
    for blk, trans in params["blocks"]:
        w1, b1 = blk["conv1"]
        w2, b2 = blk["conv2"]
        out = conv_relu(conv_relu(h, w1, b1, 1), w2, b2, 1)
        h = jnp.concatenate([h, out], axis=1)
        if trans is not None:
            wt, bt = trans
            h = pool2(conv_relu(h, wt, bt, 0))
    gamma, beta, rm, rv = params["bn"]
    inv = gamma / jnp.sqrt(rv + eps)
    hn = h * inv[None, :, None] + (beta - rm * inv)[None, :, None]
    m = jnp.mean(hn, axis=2)
    w_cls, b_cls = params["cls"]
    return m @ w_cls.T + b_cls[None, :]


# ----------------------- deterministic parameter init ----------------------- #
def _init_conv(key, c_out, c_in, k):
    kw, kb = jax.random.split(key)
    bound = 1.0 / jnp.sqrt(float(c_in * k))
    w = jax.random.uniform(kw, (c_out, c_in, k), jnp.float32, -bound, bound)
    b = jax.random.uniform(kb, (c_out,), jnp.float32, -bound, bound)
    return w, b


def init_densenet1d(key, in_channels, growth_rate, block_config, num_classes):
    keys = jax.random.split(key, 3 * len(block_config) + 2)
    ki = iter(keys)
    params = {"conv0": _init_conv(next(ki), 64, in_channels, 7)}
    num_features = 64
    blocks = []
    for i, num_layers in enumerate(block_config):
        blk = {
            "conv1": _init_conv(next(ki), growth_rate, num_features, 3),
            "conv2": _init_conv(next(ki), growth_rate, growth_rate, 3),
        }
        num_features += num_layers * growth_rate   # mirrors PyTorch bookkeeping
        trans = None
        if i != len(block_config) - 1:
            trans = _init_conv(next(ki), num_features // 2, num_features, 1)
            num_features //= 2
        blocks.append((blk, trans))
    params["blocks"] = blocks
    params["bn"] = (jnp.ones(num_features, jnp.float32),   # gamma
                    jnp.zeros(num_features, jnp.float32),  # beta
                    jnp.zeros(num_features, jnp.float32),  # running_mean
                    jnp.ones(num_features, jnp.float32))   # running_var
    kw, kb = jax.random.split(next(ki))
    bound = 1.0 / jnp.sqrt(float(num_features))
    params["cls"] = (
        jax.random.uniform(kw, (num_classes, num_features), jnp.float32, -bound, bound),
        jax.random.uniform(kb, (num_classes,), jnp.float32, -bound, bound),
    )
    return params


if __name__ == "__main__":
    key = jax.random.PRNGKey(0)
    kp, kx = jax.random.split(key)

    in_channels, growth_rate, block_config, num_classes = 4, 8, (1, 1), 10
    params = init_densenet1d(kp, in_channels, growth_rate, block_config,
                             num_classes)

    # Input (B, C, L) — NCL, matching PyTorch Conv1d. L=32 so both pooling
    # stages keep per-sample row counts 8-aligned inside the kernel.
    x = jax.random.normal(kx, (2, in_channels, 32), jnp.float32)

    fwd = jax.jit(densenet1d_forward)
    out = fwd(params, x)
    jax.block_until_ready(out)
    assert out.shape == (2, num_classes), out.shape

    ref = _reference_forward(params, x)
    err = float(jnp.max(jnp.abs(out - ref)))
    assert err < 2e-3, f"max abs diff vs reference: {err}"
    print("KERNEL_OK")
</pallas_src>

<mosaic_0001>
module attributes {stable_mosaic.version = 11 : i64} {
  func.func @kernel(%arg0: i32, %arg1: memref<2x32x128xf32, #tpu.memory_space<vmem>>, %arg2: memref<23x128x128xf32, #tpu.memory_space<vmem>>, %arg3: memref<11x128xf32, #tpu.memory_space<vmem>>, %arg4: memref<2x128xf32, #tpu.memory_space<vmem>>, %arg5: memref<2x38x128xf32, #tpu.memory_space<vmem>>) attributes {dimension_semantics = [#tpu.dimension_semantics<parallel>], iteration_bounds = array<i64: 1>, scalar_prefetch = 0 : i64, scratch_operands = 1 : i64, tpu.core_type = #tpu.core_type<tc>, window_params = [{transform_indices = @transform_0, window_bounds = array<i64: 2, 32, 128>}, {pipeline_mode = #tpu.pipeline_mode<synchronous>, transform_indices = @transform_1, window_bounds = array<i64: 23, 128, 128>}, {pipeline_mode = #tpu.pipeline_mode<synchronous>, transform_indices = @transform_2, window_bounds = array<i64: 11, 128>}, {transform_indices = @transform_3, window_bounds = array<i64: 2, 128>}]} {
    %c0 = arith.constant 0 : index
    %c0_0 = arith.constant 0 : index
    %c0_1 = arith.constant 0 : index
    %0 = vector.load %arg1[%c0, %c0_0, %c0_1] : memref<2x32x128xf32, #tpu.memory_space<vmem>>, vector<2x32x128xf32>
    %1 = vector.shape_cast %0 : vector<2x32x128xf32> to vector<64x128xf32>
    %cst = arith.constant 0.000000e+00 : f32
    %2 = vector.broadcast %cst : f32 to vector<2x3x128xf32>
    %c0_2 = arith.constant 0 : index
    %c0_3 = arith.constant 0 : index
    %c0_4 = arith.constant 0 : index
    %3 = vector.load %arg5[%c0_2, %c0_3, %c0_4] : memref<2x38x128xf32, #tpu.memory_space<vmem>>, vector<2x3x128xf32>
    tpu.vector_store %arg5[%c0_2, %c0_3, %c0_4], %2 {strides = array<i32>} : memref<2x38x128xf32, #tpu.memory_space<vmem>>, vector<2x3x128xf32>,
    %c0_5 = arith.constant 0 : index
    %c35 = arith.constant 35 : index
    %c0_6 = arith.constant 0 : index
    %4 = vector.load %arg5[%c0_5, %c35, %c0_6] : memref<2x38x128xf32, #tpu.memory_space<vmem>>, vector<2x3x128xf32>
    tpu.vector_store %arg5[%c0_5, %c35, %c0_6], %2 {strides = array<i32>} : memref<2x38x128xf32, #tpu.memory_space<vmem>>, vector<2x3x128xf32>,
    %5 = vector.extract_strided_slice %1 {offsets = [0, 0], sizes = [32, 128], strides = [1, 1]} : vector<64x128xf32> to vector<32x128xf32>
    %c0_7 = arith.constant 0 : index
    %c3 = arith.constant 3 : index
    %c0_8 = arith.constant 0 : index
    %6 = vector.load %arg5[%c0_7, %c3, %c0_8] : memref<2x38x128xf32, #tpu.memory_space<vmem>>, vector<1x32x128xf32>
    %7 = vector.shape_cast %6 : vector<1x32x128xf32> to vector<32x128xf32>
    %8 = vector.shape_cast %5 : vector<32x128xf32> to vector<1x32x128xf32>
    tpu.vector_store %arg5[%c0_7, %c3, %c0_8], %8 {strides = array<i32>} : memref<2x38x128xf32, #tpu.memory_space<vmem>>, vector<1x32x128xf32>,
    %9 = vector.extract_strided_slice %1 {offsets = [32, 0], sizes = [32, 128], strides = [1, 1]} : vector<64x128xf32> to vector<32x128xf32>
    %c1 = arith.constant 1 : index
    %c3_9 = arith.constant 3 : index
    %c0_10 = arith.constant 0 : index
    %10 = vector.load %arg5[%c1, %c3_9, %c0_10] : memref<2x38x128xf32, #tpu.memory_space<vmem>>, vector<1x32x128xf32>
    %11 = vector.shape_cast %10 : vector<1x32x128xf32> to vector<32x128xf32>
    %12 = vector.shape_cast %9 : vector<32x128xf32> to vector<1x32x128xf32>
    tpu.vector_store %arg5[%c1, %c3_9, %c0_10], %12 {strides = array<i32>} : memref<2x38x128xf32, #tpu.memory_space<vmem>>, vector<1x32x128xf32>,
    %c0_11 = arith.constant 0 : index
    %c0_12 = arith.constant 0 : index
    %c0_13 = arith.constant 0 : index
    %13 = vector.load %arg5[%c0_11, %c0_12, %c0_13] : memref<2x38x128xf32, #tpu.memory_space<vmem>>, vector<2x32x128xf32>
    %14 = vector.shape_cast %13 : vector<2x32x128xf32> to vector<64x128xf32>
    %c0_14 = arith.constant 0 : index
    %c0_15 = arith.constant 0 : index
    %c0_16 = arith.constant 0 : index
    %15 = vector.load %arg2[%c0_14, %c0_15, %c0_16] : memref<23x128x128xf32, #tpu.memory_space<vmem>>, vector<1x128x128xf32>
    %16 = vector.shape_cast %15 : vector<1x128x128xf32> to vector<128x128xf32>
    %cst_17 = arith.constant dense<0.000000e+00> : vector<64x128xf32>
    %17 = tpu.matmul %14, %16, %cst_17 {dimension_numbers = #tpu.dot_dimension_numbers<[1], [0], [0], [1], [0, 0, 1, 1], [], []>} : vector<64x128xf32>, vector<128x128xf32>, vector<64x128xf32> -> vector<64x128xf32>
    %c0_18 = arith.constant 0 : index
    %c1_19 = arith.constant 1 : index
    %c0_20 = arith.constant 0 : index
    %18 = vector.load %arg5[%c0_18, %c1_19, %c0_20] : memref<2x38x128xf32, #tpu.memory_space<vmem>>, vector<2x32x128xf32>
    %19 = vector.shape_cast %18 : vector<2x32x128xf32> to vector<64x128xf32>
    %c1_21 = arith.constant 1 : index
    %c0_22 = arith.constant 0 : index
    %c0_23 = arith.constant 0 : index
    %20 = vector.load %arg2[%c1_21, %c0_22, %c0_23] : memref<23x128x128xf32, #tpu.memory_space<vmem>>, vector<1x128x128xf32>
    %21 = vector.shape_cast %20 : vector<1x128x128xf32> to vector<128x128xf32>
    %cst_24 = arith.constant dense<0.000000e+00> : vector<64x128xf32>
    %22 = tpu.matmul %19, %21, %cst_24 {dimension_numbers = #tpu.dot_dimension_numbers<[1], [0], [0], [1], [0, 0, 1, 1], [], []>} : vector<64x128xf32>, vector<128x128xf32>, vector<64x128xf32> -> vector<64x128xf32>
    %23 = arith.addf %17, %22 : vector<64x128xf32>
    %c0_25 = arith.constant 0 : index
    %c2 = arith.constant 2 : index
    %c0_26 = arith.constant 0 : index
    %24 = vector.load %arg5[%c0_25, %c2, %c0_26] : memref<2x38x128xf32, #tpu.memory_space<vmem>>, vector<2x32x128xf32>
    %25 = vector.shape_cast %24 : vector<2x32x128xf32> to vector<64x128xf32>
    %c2_27 = arith.constant 2 : index
    %c0_28 = arith.constant 0 : index
    %c0_29 = arith.constant 0 : index
    %26 = vector.load %arg2[%c2_27, %c0_28, %c0_29] : memref<23x128x128xf32, #tpu.memory_space<vmem>>, vector<1x128x128xf32>
    %27 = vector.shape_cast %26 : vector<1x128x128xf32> to vector<128x128xf32>
    %cst_30 = arith.constant dense<0.000000e+00> : vector<64x128xf32>
    %28 = tpu.matmul %25, %27, %cst_30 {dimension_numbers = #tpu.dot_dimension_numbers<[1], [0], [0], [1], [0, 0, 1, 1], [], []>} : vector<64x128xf32>, vector<128x128xf32>, vector<64x128xf32> -> vector<64x128xf32>
    %29 = arith.addf %23, %28 : vector<64x128xf32>
    %c0_31 = arith.constant 0 : index
    %c3_32 = arith.constant 3 : index
    %c0_33 = arith.constant 0 : index
    %30 = vector.load %arg5[%c0_31, %c3_32, %c0_33] : memref<2x38x128xf32, #tpu.memory_space<vmem>>, vector<2x32x128xf32>
    %31 = vector.shape_cast %30 : vector<2x32x128xf32> to vector<64x128xf32>
    %c3_34 = arith.constant 3 : index
    %c0_35 = arith.constant 0 : index
    %c0_36 = arith.constant 0 : index
    %32 = vector.load %arg2[%c3_34, %c0_35, %c0_36] : memref<23x128x128xf32, #tpu.memory_space<vmem>>, vector<1x128x128xf32>
    %33 = vector.shape_cast %32 : vector<1x128x128xf32> to vector<128x128xf32>
    %cst_37 = arith.constant dense<0.000000e+00> : vector<64x128xf32>
    %34 = tpu.matmul %31, %33, %cst_37 {dimension_numbers = #tpu.dot_dimension_numbers<[1], [0], [0], [1], [0, 0, 1, 1], [], []>} : vector<64x128xf32>, vector<128x128xf32>, vector<64x128xf32> -> vector<64x128xf32>
    %35 = arith.addf %29, %34 : vector<64x128xf32>
    %c0_38 = arith.constant 0 : index
    %c4 = arith.constant 4 : index
    %c0_39 = arith.constant 0 : index
    %36 = vector.load %arg5[%c0_38, %c4, %c0_39] : memref<2x38x128xf32, #tpu.memory_space<vmem>>, vector<2x32x128xf32>
    %37 = vector.shape_cast %36 : vector<2x32x128xf32> to vector<64x128xf32>
    %c4_40 = arith.constant 4 : index
    %c0_41 = arith.constant 0 : index
    %c0_42 = arith.constant 0 : index
    %38 = vector.load %arg2[%c4_40, %c0_41, %c0_42] : memref<23x128x128xf32, #tpu.memory_space<vmem>>, vector<1x128x128xf32>
    %39 = vector.shape_cast %38 : vector<1x128x128xf32> to vector<128x128xf32>
    %cst_43 = arith.constant dense<0.000000e+00> : vector<64x128xf32>
    %40 = tpu.matmul %37, %39, %cst_43 {dimension_numbers = #tpu.dot_dimension_numbers<[1], [0], [0], [1], [0, 0, 1, 1], [], []>} : vector<64x128xf32>, vector<128x128xf32>, vector<64x128xf32> -> vector<64x128xf32>
    %41 = arith.addf %35, %40 : vector<64x128xf32>
    %c0_44 = arith.constant 0 : index
    %c5 = arith.constant 5 : index
    %c0_45 = arith.constant 0 : index
    %42 = vector.load %arg5[%c0_44, %c5, %c0_45] : memref<2x38x128xf32, #tpu.memory_space<vmem>>, vector<2x32x128xf32>
    %43 = vector.shape_cast %42 : vector<2x32x128xf32> to vector<64x128xf32>
    %c5_46 = arith.constant 5 : index
    %c0_47 = arith.constant 0 : index
    %c0_48 = arith.constant 0 : index
    %44 = vector.load %arg2[%c5_46, %c0_47, %c0_48] : memref<23x128x128xf32, #tpu.memory_space<vmem>>, vector<1x128x128xf32>
    %45 = vector.shape_cast %44 : vector<1x128x128xf32> to vector<128x128xf32>
    %cst_49 = arith.constant dense<0.000000e+00> : vector<64x128xf32>
    %46 = tpu.matmul %43, %45, %cst_49 {dimension_numbers = #tpu.dot_dimension_numbers<[1], [0], [0], [1], [0, 0, 1, 1], [], []>} : vector<64x128xf32>, vector<128x128xf32>, vector<64x128xf32> -> vector<64x128xf32>
    %47 = arith.addf %41, %46 : vector<64x128xf32>
    %c0_50 = arith.constant 0 : index
    %c6 = arith.constant 6 : index
    %c0_51 = arith.constant 0 : index
    %48 = vector.load %arg5[%c0_50, %c6, %c0_51] : memref<2x38x128xf32, #tpu.memory_space<vmem>>, vector<2x32x128xf32>
    %49 = vector.shape_cast %48 : vector<2x32x128xf32> to vector<64x128xf32>
    %c6_52 = arith.constant 6 : index
    %c0_53 = arith.constant 0 : index
    %c0_54 = arith.constant 0 : index
    %50 = vector.load %arg2[%c6_52, %c0_53, %c0_54] : memref<23x128x128xf32, #tpu.memory_space<vmem>>, vector<1x128x128xf32>
    %51 = vector.shape_cast %50 : vector<1x128x128xf32> to vector<128x128xf32>
    %cst_55 = arith.constant dense<0.000000e+00> : vector<64x128xf32>
    %52 = tpu.matmul %49, %51, %cst_55 {dimension_numbers = #tpu.dot_dimension_numbers<[1], [0], [0], [1], [0, 0, 1, 1], [], []>} : vector<64x128xf32>, vector<128x128xf32>, vector<64x128xf32> -> vector<64x128xf32>
    %53 = arith.addf %47, %52 : vector<64x128xf32>
    %c0_56 = arith.constant 0 : index
    %c0_57 = arith.constant 0 : index
    %54 = vector.load %arg3[%c0_56, %c0_57] : memref<11x128xf32, #tpu.memory_space<vmem>>, vector<1x128xf32>
    %55 = vector.broadcast %54 : vector<1x128xf32> to vector<64x128xf32>
    %56 = arith.addf %53, %55 : vector<64x128xf32>
    %cst_58 = arith.constant 0.000000e+00 : f32
    %57 = vector.broadcast %cst_58 : f32 to vector<64x128xf32>
    %58 = arith.maximumf %56, %57 : vector<64x128xf32>
    %59 = tpu.iota {dimensions = array<i32: 0>} : vector<32x64xi32>
    %60 = tpu.iota {dimensions = array<i32: 1>} : vector<32x64xi32>
    %c2_i32 = arith.constant 2 : i32
    %61 = vector.broadcast %c2_i32 : i32 to vector<32x64xi32>
    %62 = arith.muli %61, %59 : vector<32x64xi32>
    %63 = arith.cmpi eq, %60, %62 : vector<32x64xi32>
    %cst_59 = arith.constant 1.000000e+00 : f32
    %cst_60 = arith.constant 0.000000e+00 : f32
    %64 = vector.broadcast %cst_59 : f32 to vector<32x64xf32>
    %65 = vector.broadcast %cst_60 : f32 to vector<32x64xf32>
    %66 = arith.select %63, %64, %65 : vector<32x64xi1>, vector<32x64xf32>
    %c2_i32_61 = arith.constant 2 : i32
    %67 = vector.broadcast %c2_i32_61 : i32 to vector<32x64xi32>
    %68 = arith.muli %67, %59 : vector<32x64xi32>
    %c1_i32 = arith.constant 1 : i32
    %69 = vector.broadcast %c1_i32 : i32 to vector<32x64xi32>
    %70 = arith.addi %68, %69 : vector<32x64xi32>
    %71 = arith.cmpi eq, %60, %70 : vector<32x64xi32>
    %cst_62 = arith.constant 1.000000e+00 : f32
    %cst_63 = arith.constant 0.000000e+00 : f32
    %72 = vector.broadcast %cst_62 : f32 to vector<32x64xf32>
    %73 = vector.broadcast %cst_63 : f32 to vector<32x64xf32>
    %74 = arith.select %71, %72, %73 : vector<32x64xi1>, vector<32x64xf32>
    %cst_64 = arith.constant dense<0.000000e+00> : vector<32x128xf32>
    %75 = tpu.matmul %66, %58, %cst_64 {dimension_numbers = #tpu.dot_dimension_numbers<[1], [0], [0], [1], [0, 0, 1, 1], [], []>} : vector<32x64xf32>, vector<64x128xf32>, vector<32x128xf32> -> vector<32x128xf32>
    %cst_65 = arith.constant dense<0.000000e+00> : vector<32x128xf32>
    %76 = tpu.matmul %74, %58, %cst_65 {dimension_numbers = #tpu.dot_dimension_numbers<[1], [0], [0], [1], [0, 0, 1, 1], [], []>} : vector<32x64xf32>, vector<64x128xf32>, vector<32x128xf32> -> vector<32x128xf32>
    %77 = arith.maximumf %75, %76 : vector<32x128xf32>
    %cst_66 = arith.constant 0.000000e+00 : f32
    %78 = vector.broadcast %cst_66 : f32 to vector<2x1x128xf32>
    %c0_67 = arith.constant 0 : index
    %c0_68 = arith.constant 0 : index
    %c0_69 = arith.constant 0 : index
    %79 = vector.load %arg5[%c0_67, %c0_68, %c0_69] : memref<2x38x128xf32, #tpu.memory_space<vmem>>, vector<2x1x128xf32>
    tpu.vector_store %arg5[%c0_67, %c0_68, %c0_69], %78 {strides = array<i32>} : memref<2x38x128xf32, #tpu.memory_space<vmem>>, vector<2x1x128xf32>,
    %c0_70 = arith.constant 0 : index
    %c17 = arith.constant 17 : index
    %c0_71 = arith.constant 0 : index
    %80 = vector.load %arg5[%c0_70, %c17, %c0_71] : memref<2x38x128xf32, #tpu.memory_space<vmem>>, vector<2x1x128xf32>
    tpu.vector_store %arg5[%c0_70, %c17, %c0_71], %78 {strides = array<i32>} : memref<2x38x128xf32, #tpu.memory_space<vmem>>, vector<2x1x128xf32>,
    %81 = vector.extract_strided_slice %77 {offsets = [0, 0], sizes = [16, 128], strides = [1, 1]} : vector<32x128xf32> to vector<16x128xf32>
    %c0_72 = arith.constant 0 : index
    %c1_73 = arith.constant 1 : index
    %c0_74 = arith.constant 0 : index
    %82 = vector.load %arg5[%c0_72, %c1_73, %c0_74] : memref<2x38x128xf32, #tpu.memory_space<vmem>>, vector<1x16x128xf32>
    %83 = vector.shape_cast %82 : vector<1x16x128xf32> to vector<16x128xf32>
    %84 = vector.shape_cast %81 : vector<16x128xf32> to vector<1x16x128xf32>
    tpu.vector_store %arg5[%c0_72, %c1_73, %c0_74], %84 {strides = array<i32>} : memref<2x38x128xf32, #tpu.memory_space<vmem>>, vector<1x16x128xf32>,
    %85 = vector.extract_strided_slice %77 {offsets = [16, 0], sizes = [16, 128], strides = [1, 1]} : vector<32x128xf32> to vector<16x128xf32>
    %c1_75 = arith.constant 1 : index
    %c1_76 = arith.constant 1 : index
    %c0_77 = arith.constant 0 : index
    %86 = vector.load %arg5[%c1_75, %c1_76, %c0_77] : memref<2x38x128xf32, #tpu.memory_space<vmem>>, vector<1x16x128xf32>
    %87 = vector.shape_cast %86 : vector<1x16x128xf32> to vector<16x128xf32>
    %88 = vector.shape_cast %85 : vector<16x128xf32> to vector<1x16x128xf32>
    tpu.vector_store %arg5[%c1_75, %c1_76, %c0_77], %88 {strides = array<i32>} : memref<2x38x128xf32, #tpu.memory_space<vmem>>, vector<1x16x128xf32>,
    %c0_78 = arith.constant 0 : index
    %c0_79 = arith.constant 0 : index
    %c0_80 = arith.constant 0 : index
    %89 = vector.load %arg5[%c0_78, %c0_79, %c0_80] : memref<2x38x128xf32, #tpu.memory_space<vmem>>, vector<2x16x128xf32>
    %90 = vector.shape_cast %89 : vector<2x16x128xf32> to vector<32x128xf32>
    %c7 = arith.constant 7 : index
    %c0_81 = arith.constant 0 : index
    %c0_82 = arith.constant 0 : index
    %91 = vector.load %arg2[%c7, %c0_81, %c0_82] : memref<23x128x128xf32, #tpu.memory_space<vmem>>, vector<1x128x128xf32>
    %92 = vector.shape_cast %91 : vector<1x128x128xf32> to vector<128x128xf32>
    %cst_83 = arith.constant dense<0.000000e+00> : vector<32x128xf32>
    %93 = tpu.matmul %90, %92, %cst_83 {dimension_numbers = #tpu.dot_dimension_numbers<[1], [0], [0], [1], [0, 0, 1, 1], [], []>} : vector<32x128xf32>, vector<128x128xf32>, vector<32x128xf32> -> vector<32x128xf32>
    %c0_84 = arith.constant 0 : index
    %c1_85 = arith.constant 1 : index
    %c0_86 = arith.constant 0 : index
    %94 = vector.load %arg5[%c0_84, %c1_85, %c0_86] : memref<2x38x128xf32, #tpu.memory_space<vmem>>, vector<2x16x128xf32>
    %95 = vector.shape_cast %94 : vector<2x16x128xf32> to vector<32x128xf32>
    %c8 = arith.constant 8 : index
    %c0_87 = arith.constant 0 : index
    %c0_88 = arith.constant 0 : index
    %96 = vector.load %arg2[%c8, %c0_87, %c0_88] : memref<23x128x128xf32, #tpu.memory_space<vmem>>, vector<1x128x128xf32>
    %97 = vector.shape_cast %96 : vector<1x128x128xf32> to vector<128x128xf32>
    %cst_89 = arith.constant dense<0.000000e+00> : vector<32x128xf32>
    %98 = tpu.matmul %95, %97, %cst_89 {dimension_numbers = #tpu.dot_dimension_numbers<[1], [0], [0], [1], [0, 0, 1, 1], [], []>} : vector<32x128xf32>, vector<128x128xf32>, vector<32x128xf32> -> vector<32x128xf32>
    %99 = arith.addf %93, %98 : vector<32x128xf32>
    %c0_90 = arith.constant 0 : index
    %c2_91 = arith.constant 2 : index
    %c0_92 = arith.constant 0 : index
    %100 = vector.load %arg5[%c0_90, %c2_91, %c0_92] : memref<2x38x128xf32, #tpu.memory_space<vmem>>, vector<2x16x128xf32>
    %101 = vector.shape_cast %100 : vector<2x16x128xf32> to vector<32x128xf32>
    %c9 = arith.constant 9 : index
    %c0_93 = arith.constant 0 : index
    %c0_94 = arith.constant 0 : index
    %102 = vector.load %arg2[%c9, %c0_93, %c0_94] : memref<23x128x128xf32, #tpu.memory_space<vmem>>, vector<1x128x128xf32>
    %103 = vector.shape_cast %102 : vector<1x128x128xf32> to vector<128x128xf32>
    %cst_95 = arith.constant dense<0.000000e+00> : vector<32x128xf32>
    %104 = tpu.matmul %101, %103, %cst_95 {dimension_numbers = #tpu.dot_dimension_numbers<[1], [0], [0], [1], [0, 0, 1, 1], [], []>} : vector<32x128xf32>, vector<128x128xf32>, vector<32x128xf32> -> vector<32x128xf32>
    %105 = arith.addf %99, %104 : vector<32x128xf32>
    %c1_96 = arith.constant 1 : index
    %c0_97 = arith.constant 0 : index
    %106 = vector.load %arg3[%c1_96, %c0_97] : memref<11x128xf32, #tpu.memory_space<vmem>>, vector<1x128xf32>
    %107 = vector.broadcast %106 : vector<1x128xf32> to vector<32x128xf32>
    %108 = arith.addf %105, %107 : vector<32x128xf32>
    %cst_98 = arith.constant 0.000000e+00 : f32
    %109 = vector.broadcast %cst_98 : f32 to vector<32x128xf32>
    %110 = arith.maximumf %108, %109 : vector<32x128xf32>
    %cst_99 = arith.constant 0.000000e+00 : f32
    %111 = vector.broadcast %cst_99 : f32 to vector<2x1x128xf32>
    %c0_100 = arith.constant 0 : index
    %c0_101 = arith.constant 0 : index
    %c0_102 = arith.constant 0 : index
    %112 = vector.load %arg5[%c0_100, %c0_101, %c0_102] : memref<2x38x128xf32, #tpu.memory_space<vmem>>, vector<2x1x128xf32>
    tpu.vector_store %arg5[%c0_100, %c0_101, %c0_102], %111 {strides = array<i32>} : memref<2x38x128xf32, #tpu.memory_space<vmem>>, vector<2x1x128xf32>,
    %c0_103 = arith.constant 0 : index
    %c17_104 = arith.constant 17 : index
    %c0_105 = arith.constant 0 : index
    %113 = vector.load %arg5[%c0_103, %c17_104, %c0_105] : memref<2x38x128xf32, #tpu.memory_space<vmem>>, vector<2x1x128xf32>
    tpu.vector_store %arg5[%c0_103, %c17_104, %c0_105], %111 {strides = array<i32>} : memref<2x38x128xf32, #tpu.memory_space<vmem>>, vector<2x1x128xf32>,
    %114 = vector.extract_strided_slice %110 {offsets = [0, 0], sizes = [16, 128], strides = [1, 1]} : vector<32x128xf32> to vector<16x128xf32>
    %c0_106 = arith.constant 0 : index
    %c1_107 = arith.constant 1 : index
    %c0_108 = arith.constant 0 : index
    %115 = vector.load %arg5[%c0_106, %c1_107, %c0_108] : memref<2x38x128xf32, #tpu.memory_space<vmem>>, vector<1x16x128xf32>
    %116 = vector.shape_cast %115 : vector<1x16x128xf32> to vector<16x128xf32>
    %117 = vector.shape_cast %114 : vector<16x128xf32> to vector<1x16x128xf32>
    tpu.vector_store %arg5[%c0_106, %c1_107, %c0_108], %117 {strides = array<i32>} : memref<2x38x128xf32, #tpu.memory_space<vmem>>, vector<1x16x128xf32>,
    %118 = vector.extract_strided_slice %110 {offsets = [16, 0], sizes = [16, 128], strides = [1, 1]} : vector<32x128xf32> to vector<16x128xf32>
    %c1_109 = arith.constant 1 : index
    %c1_110 = arith.constant 1 : index
    %c0_111 = arith.constant 0 : index
    %119 = vector.load %arg5[%c1_109, %c1_110, %c0_111] : memref<2x38x128xf32, #tpu.memory_space<vmem>>, vector<1x16x128xf32>
    %120 = vector.shape_cast %119 : vector<1x16x128xf32> to vector<16x128xf32>
    %121 = vector.shape_cast %118 : vector<16x128xf32> to vector<1x16x128xf32>
    tpu.vector_store %arg5[%c1_109, %c1_110, %c0_111], %121 {strides = array<i32>} : memref<2x38x128xf32, #tpu.memory_space<vmem>>, vector<1x16x128xf32>,
    %c0_112 = arith.constant 0 : index
    %c0_113 = arith.constant 0 : index
    %c0_114 = arith.constant 0 : index
    %122 = vector.load %arg5[%c0_112, %c0_113, %c0_114] : memref<2x38x128xf32, #tpu.memory_space<vmem>>, vector<2x16x128xf32>
    %123 = vector.shape_cast %122 : vector<2x16x128xf32> to vector<32x128xf32>
    %c10 = arith.constant 10 : index
    %c0_115 = arith.constant 0 : index
    %c0_116 = arith.constant 0 : index
    %124 = vector.load %arg2[%c10, %c0_115, %c0_116] : memref<23x128x128xf32, #tpu.memory_space<vmem>>, vector<1x128x128xf32>
    %125 = vector.shape_cast %124 : vector<1x128x128xf32> to vector<128x128xf32>
    %cst_117 = arith.constant dense<0.000000e+00> : vector<32x128xf32>
    %126 = tpu.matmul %123, %125, %cst_117 {dimension_numbers = #tpu.dot_dimension_numbers<[1], [0], [0], [1], [0, 0, 1, 1], [], []>} : vector<32x128xf32>, vector<128x128xf32>, vector<32x128xf32> -> vector<32x128xf32>
    %c0_118 = arith.constant 0 : index
    %c1_119 = arith.constant 1 : index
    %c0_120 = arith.constant 0 : index
    %127 = vector.load %arg5[%c0_118, %c1_119, %c0_120] : memref<2x38x128xf32, #tpu.memory_space<vmem>>, vector<2x16x128xf32>
    %128 = vector.shape_cast %127 : vector<2x16x128xf32> to vector<32x128xf32>
    %c11 = arith.constant 11 : index
    %c0_121 = arith.constant 0 : index
    %c0_122 = arith.constant 0 : index
    %129 = vector.load %arg2[%c11, %c0_121, %c0_122] : memref<23x128x128xf32, #tpu.memory_space<vmem>>, vector<1x128x128xf32>
    %130 = vector.shape_cast %129 : vector<1x128x128xf32> to vector<128x128xf32>
    %cst_123 = arith.constant dense<0.000000e+00> : vector<32x128xf32>
    %131 = tpu.matmul %128, %130, %cst_123 {dimension_numbers = #tpu.dot_dimension_numbers<[1], [0], [0], [1], [0, 0, 1, 1], [], []>} : vector<32x128xf32>, vector<128x128xf32>, vector<32x128xf32> -> vector<32x128xf32>
    %132 = arith.addf %126, %131 : vector<32x128xf32>
    %c0_124 = arith.constant 0 : index
    %c2_125 = arith.constant 2 : index
    %c0_126 = arith.constant 0 : index
    %133 = vector.load %arg5[%c0_124, %c2_125, %c0_126] : memref<2x38x128xf32, #tpu.memory_space<vmem>>, vector<2x16x128xf32>
    %134 = vector.shape_cast %133 : vector<2x16x128xf32> to vector<32x128xf32>
    %c12 = arith.constant 12 : index
    %c0_127 = arith.constant 0 : index
    %c0_128 = arith.constant 0 : index
    %135 = vector.load %arg2[%c12, %c0_127, %c0_128] : memref<23x128x128xf32, #tpu.memory_space<vmem>>, vector<1x128x128xf32>
    %136 = vector.shape_cast %135 : vector<1x128x128xf32> to vector<128x128xf32>
    %cst_129 = arith.constant dense<0.000000e+00> : vector<32x128xf32>
    %137 = tpu.matmul %134, %136, %cst_129 {dimension_numbers = #tpu.dot_dimension_numbers<[1], [0], [0], [1], [0, 0, 1, 1], [], []>} : vector<32x128xf32>, vector<128x128xf32>, vector<32x128xf32> -> vector<32x128xf32>
    %138 = arith.addf %132, %137 : vector<32x128xf32>
    %c2_130 = arith.constant 2 : index
    %c0_131 = arith.constant 0 : index
    %139 = vector.load %arg3[%c2_130, %c0_131] : memref<11x128xf32, #tpu.memory_space<vmem>>, vector<1x128xf32>
    %140 = vector.broadcast %139 : vector<1x128xf32> to vector<32x128xf32>
    %141 = arith.addf %138, %140 : vector<32x128xf32>
    %cst_132 = arith.constant 0.000000e+00 : f32
    %142 = vector.broadcast %cst_132 : f32 to vector<32x128xf32>
    %143 = arith.maximumf %141, %142 : vector<32x128xf32>
    %c13 = arith.constant 13 : index
    %c0_133 = arith.constant 0 : index
    %c0_134 = arith.constant 0 : index
    %144 = vector.load %arg2[%c13, %c0_133, %c0_134] : memref<23x128x128xf32, #tpu.memory_space<vmem>>, vector<1x128x128xf32>
    %145 = vector.shape_cast %144 : vector<1x128x128xf32> to vector<128x128xf32>
    %cst_135 = arith.constant dense<0.000000e+00> : vector<32x128xf32>
    %146 = tpu.matmul %77, %145, %cst_135 {dimension_numbers = #tpu.dot_dimension_numbers<[1], [0], [0], [1], [0, 0, 1, 1], [], []>} : vector<32x128xf32>, vector<128x128xf32>, vector<32x128xf32> -> vector<32x128xf32>
    %c14 = arith.constant 14 : index
    %c0_136 = arith.constant 0 : index
    %c0_137 = arith.constant 0 : index
    %147 = vector.load %arg2[%c14, %c0_136, %c0_137] : memref<23x128x128xf32, #tpu.memory_space<vmem>>, vector<1x128x128xf32>
    %148 = vector.shape_cast %147 : vector<1x128x128xf32> to vector<128x128xf32>
    %cst_138 = arith.constant dense<0.000000e+00> : vector<32x128xf32>
    %149 = tpu.matmul %143, %148, %cst_138 {dimension_numbers = #tpu.dot_dimension_numbers<[1], [0], [0], [1], [0, 0, 1, 1], [], []>} : vector<32x128xf32>, vector<128x128xf32>, vector<32x128xf32> -> vector<32x128xf32>
    %150 = arith.addf %146, %149 : vector<32x128xf32>
    %c3_139 = arith.constant 3 : index
    %c0_140 = arith.constant 0 : index
    %151 = vector.load %arg3[%c3_139, %c0_140] : memref<11x128xf32, #tpu.memory_space<vmem>>, vector<1x128xf32>
    %152 = vector.broadcast %151 : vector<1x128xf32> to vector<32x128xf32>
    %153 = arith.addf %150, %152 : vector<32x128xf32>
    %cst_141 = arith.constant 0.000000e+00 : f32
    %154 = vector.broadcast %cst_141 : f32 to vector<32x128xf32>
    %155 = arith.maximumf %153, %154 : vector<32x128xf32>
    %156 = tpu.iota {dimensions = array<i32: 0>} : vector<16x32xi32>
    %157 = tpu.iota {dimensions = array<i32: 1>} : vector<16x32xi32>
    %c2_i32_142 = arith.constant 2 : i32
    %158 = vector.broadcast %c2_i32_142 : i32 to vector<16x32xi32>
    %159 = arith.muli %158, %156 : vector<16x32xi32>
    %160 = arith.cmpi eq, %157, %159 : vector<16x32xi32>
    %cst_143 = arith.constant 1.000000e+00 : f32
    %cst_144 = arith.constant 0.000000e+00 : f32
    %161 = vector.broadcast %cst_143 : f32 to vector<16x32xf32>
    %162 = vector.broadcast %cst_144 : f32 to vector<16x32xf32>
    %163 = arith.select %160, %161, %162 : vector<16x32xi1>, vector<16x32xf32>
    %c2_i32_145 = arith.constant 2 : i32
    %164 = vector.broadcast %c2_i32_145 : i32 to vector<16x32xi32>
    %165 = arith.muli %164, %156 : vector<16x32xi32>
    %c1_i32_146 = arith.constant 1 : i32
    %166 = vector.broadcast %c1_i32_146 : i32 to vector<16x32xi32>
    %167 = arith.addi %165, %166 : vector<16x32xi32>
    %168 = arith.cmpi eq, %157, %167 : vector<16x32xi32>
    %cst_147 = arith.constant 1.000000e+00 : f32
    %cst_148 = arith.constant 0.000000e+00 : f32
    %169 = vector.broadcast %cst_147 : f32 to vector<16x32xf32>
    %170 = vector.broadcast %cst_148 : f32 to vector<16x32xf32>
    %171 = arith.select %168, %169, %170 : vector<16x32xi1>, vector<16x32xf32>
    %cst_149 = arith.constant dense<0.000000e+00> : vector<16x128xf32>
    %172 = tpu.matmul %163, %155, %cst_149 {dimension_numbers = #tpu.dot_dimension_numbers<[1], [0], [0], [1], [0, 0, 1, 1], [], []>} : vector<16x32xf32>, vector<32x128xf32>, vector<16x128xf32> -> vector<16x128xf32>
    %cst_150 = arith.constant dense<0.000000e+00> : vector<16x128xf32>
    %173 = tpu.matmul %171, %155, %cst_150 {dimension_numbers = #tpu.dot_dimension_numbers<[1], [0], [0], [1], [0, 0, 1, 1], [], []>} : vector<16x32xf32>, vector<32x128xf32>, vector<16x128xf32> -> vector<16x128xf32>
    %174 = arith.maximumf %172, %173 : vector<16x128xf32>
    %cst_151 = arith.constant 0.000000e+00 : f32
    %175 = vector.broadcast %cst_151 : f32 to vector<2x1x128xf32>
    %c0_152 = arith.constant 0 : index
    %c0_153 = arith.constant 0 : index
    %c0_154 = arith.constant 0 : index
    %176 = vector.load %arg5[%c0_152, %c0_153, %c0_154] : memref<2x38x128xf32, #tpu.memory_space<vmem>>, vector<2x1x128xf32>
    tpu.vector_store %arg5[%c0_152, %c0_153, %c0_154], %175 {strides = array<i32>} : memref<2x38x128xf32, #tpu.memory_space<vmem>>, vector<2x1x128xf32>,
    %c0_155 = arith.constant 0 : index
    %c9_156 = arith.constant 9 : index
    %c0_157 = arith.constant 0 : index
    %177 = vector.load %arg5[%c0_155, %c9_156, %c0_157] : memref<2x38x128xf32, #tpu.memory_space<vmem>>, vector<2x1x128xf32>
    tpu.vector_store %arg5[%c0_155, %c9_156, %c0_157], %175 {strides = array<i32>} : memref<2x38x128xf32, #tpu.memory_space<vmem>>, vector<2x1x128xf32>,
    %178 = vector.extract_strided_slice %174 {offsets = [0, 0], sizes = [8, 128], strides = [1, 1]} : vector<16x128xf32> to vector<8x128xf32>
    %c0_158 = arith.constant 0 : index
    %c1_159 = arith.constant 1 : index
    %c0_160 = arith.constant 0 : index
    %179 = vector.load %arg5[%c0_158, %c1_159, %c0_160] : memref<2x38x128xf32, #tpu.memory_space<vmem>>, vector<1x8x128xf32>
    %180 = vector.shape_cast %179 : vector<1x8x128xf32> to vector<8x128xf32>
    %181 = vector.shape_cast %178 : vector<8x128xf32> to vector<1x8x128xf32>
    tpu.vector_store %arg5[%c0_158, %c1_159, %c0_160], %181 {strides = array<i32>} : memref<2x38x128xf32, #tpu.memory_space<vmem>>, vector<1x8x128xf32>,
    %182 = vector.extract_strided_slice %174 {offsets = [8, 0], sizes = [8, 128], strides = [1, 1]} : vector<16x128xf32> to vector<8x128xf32>
    %c1_161 = arith.constant 1 : index
    %c1_162 = arith.constant 1 : index
    %c0_163 = arith.constant 0 : index
    %183 = vector.load %arg5[%c1_161, %c1_162, %c0_163] : memref<2x38x128xf32, #tpu.memory_space<vmem>>, vector<1x8x128xf32>
    %184 = vector.shape_cast %183 : vector<1x8x128xf32> to vector<8x128xf32>
    %185 = vector.shape_cast %182 : vector<8x128xf32> to vector<1x8x128xf32>
    tpu.vector_store %arg5[%c1_161, %c1_162, %c0_163], %185 {strides = array<i32>} : memref<2x38x128xf32, #tpu.memory_space<vmem>>, vector<1x8x128xf32>,
    %c0_164 = arith.constant 0 : index
    %c0_165 = arith.constant 0 : index
    %c0_166 = arith.constant 0 : index
    %186 = vector.load %arg5[%c0_164, %c0_165, %c0_166] : memref<2x38x128xf32, #tpu.memory_space<vmem>>, vector<2x8x128xf32>
    %187 = vector.shape_cast %186 : vector<2x8x128xf32> to vector<16x128xf32>
    %c15 = arith.constant 15 : index
    %c0_167 = arith.constant 0 : index
    %c0_168 = arith.constant 0 : index
    %188 = vector.load %arg2[%c15, %c0_167, %c0_168] : memref<23x128x128xf32, #tpu.memory_space<vmem>>, vector<1x128x128xf32>
    %189 = vector.shape_cast %188 : vector<1x128x128xf32> to vector<128x128xf32>
    %cst_169 = arith.constant dense<0.000000e+00> : vector<16x128xf32>
    %190 = tpu.matmul %187, %189, %cst_169 {dimension_numbers = #tpu.dot_dimension_numbers<[1], [0], [0], [1], [0, 0, 1, 1], [], []>} : vector<16x128xf32>, vector<128x128xf32>, vector<16x128xf32> -> vector<16x128xf32>
    %c0_170 = arith.constant 0 : index
    %c1_171 = arith.constant 1 : index
    %c0_172 = arith.constant 0 : index
    %191 = vector.load %arg5[%c0_170, %c1_171, %c0_172] : memref<2x38x128xf32, #tpu.memory_space<vmem>>, vector<2x8x128xf32>
    %192 = vector.shape_cast %191 : vector<2x8x128xf32> to vector<16x128xf32>
    %c16 = arith.constant 16 : index
    %c0_173 = arith.constant 0 : index
    %c0_174 = arith.constant 0 : index
    %193 = vector.load %arg2[%c16, %c0_173, %c0_174] : memref<23x128x128xf32, #tpu.memory_space<vmem>>, vector<1x128x128xf32>
    %194 = vector.shape_cast %193 : vector<1x128x128xf32> to vector<128x128xf32>
    %cst_175 = arith.constant dense<0.000000e+00> : vector<16x128xf32>
    %195 = tpu.matmul %192, %194, %cst_175 {dimension_numbers = #tpu.dot_dimension_numbers<[1], [0], [0], [1], [0, 0, 1, 1], [], []>} : vector<16x128xf32>, vector<128x128xf32>, vector<16x128xf32> -> vector<16x128xf32>
    %196 = arith.addf %190, %195 : vector<16x128xf32>
    %c0_176 = arith.constant 0 : index
    %c2_177 = arith.constant 2 : index
    %c0_178 = arith.constant 0 : index
    %197 = vector.load %arg5[%c0_176, %c2_177, %c0_178] : memref<2x38x128xf32, #tpu.memory_space<vmem>>, vector<2x8x128xf32>
    %198 = vector.shape_cast %197 : vector<2x8x128xf32> to vector<16x128xf32>
    %c17_179 = arith.constant 17 : index
    %c0_180 = arith.constant 0 : index
    %c0_181 = arith.constant 0 : index
    %199 = vector.load %arg2[%c17_179, %c0_180, %c0_181] : memref<23x128x128xf32, #tpu.memory_space<vmem>>, vector<1x128x128xf32>
    %200 = vector.shape_cast %199 : vector<1x128x128xf32> to vector<128x128xf32>
    %cst_182 = arith.constant dense<0.000000e+00> : vector<16x128xf32>
    %201 = tpu.matmul %198, %200, %cst_182 {dimension_numbers = #tpu.dot_dimension_numbers<[1], [0], [0], [1], [0, 0, 1, 1], [], []>} : vector<16x128xf32>, vector<128x128xf32>, vector<16x128xf32> -> vector<16x128xf32>
    %202 = arith.addf %196, %201 : vector<16x128xf32>
    %c4_183 = arith.constant 4 : index
    %c0_184 = arith.constant 0 : index
    %203 = vector.load %arg3[%c4_183, %c0_184] : memref<11x128xf32, #tpu.memory_space<vmem>>, vector<1x128xf32>
    %204 = vector.broadcast %203 : vector<1x128xf32> to vector<16x128xf32>
    %205 = arith.addf %202, %204 : vector<16x128xf32>
    %cst_185 = arith.constant 0.000000e+00 : f32
    %206 = vector.broadcast %cst_185 : f32 to vector<16x128xf32>
    %207 = arith.maximumf %205, %206 : vector<16x128xf32>
    %cst_186 = arith.constant 0.000000e+00 : f32
    %208 = vector.broadcast %cst_186 : f32 to vector<2x1x128xf32>
    %c0_187 = arith.constant 0 : index
    %c0_188 = arith.constant 0 : index
    %c0_189 = arith.constant 0 : index
    %209 = vector.load %arg5[%c0_187, %c0_188, %c0_189] : memref<2x38x128xf32, #tpu.memory_space<vmem>>, vector<2x1x128xf32>
    tpu.vector_store %arg5[%c0_187, %c0_188, %c0_189], %208 {strides = array<i32>} : memref<2x38x128xf32, #tpu.memory_space<vmem>>, vector<2x1x128xf32>,
    %c0_190 = arith.constant 0 : index
    %c9_191 = arith.constant 9 : index
    %c0_192 = arith.constant 0 : index
    %210 = vector.load %arg5[%c0_190, %c9_191, %c0_192] : memref<2x38x128xf32, #tpu.memory_space<vmem>>, vector<2x1x128xf32>
    tpu.vector_store %arg5[%c0_190, %c9_191, %c0_192], %208 {strides = array<i32>} : memref<2x38x128xf32, #tpu.memory_space<vmem>>, vector<2x1x128xf32>,
    %211 = vector.extract_strided_slice %207 {offsets = [0, 0], sizes = [8, 128], strides = [1, 1]} : vector<16x128xf32> to vector<8x128xf32>
    %c0_193 = arith.constant 0 : index
    %c1_194 = arith.constant 1 : index
    %c0_195 = arith.constant 0 : index
    %212 = vector.load %arg5[%c0_193, %c1_194, %c0_195] : memref<2x38x128xf32, #tpu.memory_space<vmem>>, vector<1x8x128xf32>
    %213 = vector.shape_cast %212 : vector<1x8x128xf32> to vector<8x128xf32>
    %214 = vector.shape_cast %211 : vector<8x128xf32> to vector<1x8x128xf32>
    tpu.vector_store %arg5[%c0_193, %c1_194, %c0_195], %214 {strides = array<i32>} : memref<2x38x128xf32, #tpu.memory_space<vmem>>, vector<1x8x128xf32>,
    %215 = vector.extract_strided_slice %207 {offsets = [8, 0], sizes = [8, 128], strides = [1, 1]} : vector<16x128xf32> to vector<8x128xf32>
    %c1_196 = arith.constant 1 : index
    %c1_197 = arith.constant 1 : index
    %c0_198 = arith.constant 0 : index
    %216 = vector.load %arg5[%c1_196, %c1_197, %c0_198] : memref<2x38x128xf32, #tpu.memory_space<vmem>>, vector<1x8x128xf32>
    %217 = vector.shape_cast %216 : vector<1x8x128xf32> to vector<8x128xf32>
    %218 = vector.shape_cast %215 : vector<8x128xf32> to vector<1x8x128xf32>
    tpu.vector_store %arg5[%c1_196, %c1_197, %c0_198], %218 {strides = array<i32>} : memref<2x38x128xf32, #tpu.memory_space<vmem>>, vector<1x8x128xf32>,
    %c0_199 = arith.constant 0 : index
    %c0_200 = arith.constant 0 : index
    %c0_201 = arith.constant 0 : index
    %219 = vector.load %arg5[%c0_199, %c0_200, %c0_201] : memref<2x38x128xf32, #tpu.memory_space<vmem>>, vector<2x8x128xf32>
    %220 = vector.shape_cast %219 : vector<2x8x128xf32> to vector<16x128xf32>
    %c18 = arith.constant 18 : index
    %c0_202 = arith.constant 0 : index
    %c0_203 = arith.constant 0 : index
    %221 = vector.load %arg2[%c18, %c0_202, %c0_203] : memref<23x128x128xf32, #tpu.memory_space<vmem>>, vector<1x128x128xf32>
    %222 = vector.shape_cast %221 : vector<1x128x128xf32> to vector<128x128xf32>
    %cst_204 = arith.constant dense<0.000000e+00> : vector<16x128xf32>
    %223 = tpu.matmul %220, %222, %cst_204 {dimension_numbers = #tpu.dot_dimension_numbers<[1], [0], [0], [1], [0, 0, 1, 1], [], []>} : vector<16x128xf32>, vector<128x128xf32>, vector<16x128xf32> -> vector<16x128xf32>
    %c0_205 = arith.constant 0 : index
    %c1_206 = arith.constant 1 : index
    %c0_207 = arith.constant 0 : index
    %224 = vector.load %arg5[%c0_205, %c1_206, %c0_207] : memref<2x38x128xf32, #tpu.memory_space<vmem>>, vector<2x8x128xf32>
    %225 = vector.shape_cast %224 : vector<2x8x128xf32> to vector<16x128xf32>
    %c19 = arith.constant 19 : index
    %c0_208 = arith.constant 0 : index
    %c0_209 = arith.constant 0 : index
    %226 = vector.load %arg2[%c19, %c0_208, %c0_209] : memref<23x128x128xf32, #tpu.memory_space<vmem>>, vector<1x128x128xf32>
    %227 = vector.shape_cast %226 : vector<1x128x128xf32> to vector<128x128xf32>
    %cst_210 = arith.constant dense<0.000000e+00> : vector<16x128xf32>
    %228 = tpu.matmul %225, %227, %cst_210 {dimension_numbers = #tpu.dot_dimension_numbers<[1], [0], [0], [1], [0, 0, 1, 1], [], []>} : vector<16x128xf32>, vector<128x128xf32>, vector<16x128xf32> -> vector<16x128xf32>
    %229 = arith.addf %223, %228 : vector<16x128xf32>
    %c0_211 = arith.constant 0 : index
    %c2_212 = arith.constant 2 : index
    %c0_213 = arith.constant 0 : index
    %230 = vector.load %arg5[%c0_211, %c2_212, %c0_213] : memref<2x38x128xf32, #tpu.memory_space<vmem>>, vector<2x8x128xf32>
    %231 = vector.shape_cast %230 : vector<2x8x128xf32> to vector<16x128xf32>
    %c20 = arith.constant 20 : index
    %c0_214 = arith.constant 0 : index
    %c0_215 = arith.constant 0 : index
    %232 = vector.load %arg2[%c20, %c0_214, %c0_215] : memref<23x128x128xf32, #tpu.memory_space<vmem>>, vector<1x128x128xf32>
    %233 = vector.shape_cast %232 : vector<1x128x128xf32> to vector<128x128xf32>
    %cst_216 = arith.constant dense<0.000000e+00> : vector<16x128xf32>
    %234 = tpu.matmul %231, %233, %cst_216 {dimension_numbers = #tpu.dot_dimension_numbers<[1], [0], [0], [1], [0, 0, 1, 1], [], []>} : vector<16x128xf32>, vector<128x128xf32>, vector<16x128xf32> -> vector<16x128xf32>
    %235 = arith.addf %229, %234 : vector<16x128xf32>
    %c5_217 = arith.constant 5 : index
    %c0_218 = arith.constant 0 : index
    %236 = vector.load %arg3[%c5_217, %c0_218] : memref<11x128xf32, #tpu.memory_space<vmem>>, vector<1x128xf32>
    %237 = vector.broadcast %236 : vector<1x128xf32> to vector<16x128xf32>
    %238 = arith.addf %235, %237 : vector<16x128xf32>
    %cst_219 = arith.constant 0.000000e+00 : f32
    %239 = vector.broadcast %cst_219 : f32 to vector<16x128xf32>
    %240 = arith.maximumf %238, %239 : vector<16x128xf32>
    %241 = tpu.iota {dimensions = array<i32: 0>} : vector<2x16xi32>
    %242 = tpu.iota {dimensions = array<i32: 1>} : vector<2x16xi32>
    %c8_i32 = arith.constant 8 : i32
    %243 = vector.broadcast %c8_i32 : i32 to vector<2x16xi32>
    %244 = arith.muli %241, %243 : vector<2x16xi32>
    %245 = arith.cmpi sge, %242, %244 : vector<2x16xi32>
    %c8_i32_220 = arith.constant 8 : i32
    %246 = vector.broadcast %c8_i32_220 : i32 to vector<2x16xi32>
    %247 = arith.muli %241, %246 : vector<2x16xi32>
    %c8_i32_221 = arith.constant 8 : i32
    %248 = vector.broadcast %c8_i32_221 : i32 to vector<2x16xi32>
    %249 = arith.addi %247, %248 : vector<2x16xi32>
    %250 = arith.cmpi slt, %242, %249 : vector<2x16xi32>
    %251 = arith.andi %245, %250 : vector<2x16xi1>
    %cst_222 = arith.constant 1.250000e-01 : f32
    %cst_223 = arith.constant 0.000000e+00 : f32
    %252 = vector.broadcast %cst_222 : f32 to vector<2x16xf32>
    %253 = vector.broadcast %cst_223 : f32 to vector<2x16xf32>
    %254 = arith.select %251, %252, %253 : vector<2x16xi1>, vector<2x16xf32>
    %cst_224 = arith.constant dense<0.000000e+00> : vector<2x128xf32>
    %255 = tpu.matmul %254, %174, %cst_224 {dimension_numbers = #tpu.dot_dimension_numbers<[1], [0], [0], [1], [0, 0, 1, 1], [], []>} : vector<2x16xf32>, vector<16x128xf32>, vector<2x128xf32> -> vector<2x128xf32>
    %256 = tpu.iota {dimensions = array<i32: 0>} : vector<2x16xi32>
    %257 = tpu.iota {dimensions = array<i32: 1>} : vector<2x16xi32>
    %c8_i32_225 = arith.constant 8 : i32
    %258 = vector.broadcast %c8_i32_225 : i32 to vector<2x16xi32>
    %259 = arith.muli %256, %258 : vector<2x16xi32>
    %260 = arith.cmpi sge, %257, %259 : vector<2x16xi32>
    %c8_i32_226 = arith.constant 8 : i32
    %261 = vector.broadcast %c8_i32_226 : i32 to vector<2x16xi32>
    %262 = arith.muli %256, %261 : vector<2x16xi32>
    %c8_i32_227 = arith.constant 8 : i32
    %263 = vector.broadcast %c8_i32_227 : i32 to vector<2x16xi32>
    %264 = arith.addi %262, %263 : vector<2x16xi32>
    %265 = arith.cmpi slt, %257, %264 : vector<2x16xi32>
    %266 = arith.andi %260, %265 : vector<2x16xi1>
    %cst_228 = arith.constant 1.250000e-01 : f32
    %cst_229 = arith.constant 0.000000e+00 : f32
    %267 = vector.broadcast %cst_228 : f32 to vector<2x16xf32>
    %268 = vector.broadcast %cst_229 : f32 to vector<2x16xf32>
    %269 = arith.select %266, %267, %268 : vector<2x16xi1>, vector<2x16xf32>
    %cst_230 = arith.constant dense<0.000000e+00> : vector<2x128xf32>
    %270 = tpu.matmul %269, %240, %cst_230 {dimension_numbers = #tpu.dot_dimension_numbers<[1], [0], [0], [1], [0, 0, 1, 1], [], []>} : vector<2x16xf32>, vector<16x128xf32>, vector<2x128xf32> -> vector<2x128xf32>
    %c6_231 = arith.constant 6 : index
    %c0_232 = arith.constant 0 : index
    %271 = vector.load %arg3[%c6_231, %c0_232] : memref<11x128xf32, #tpu.memory_space<vmem>>, vector<1x128xf32>
    %272 = vector.broadcast %271 : vector<1x128xf32> to vector<2x128xf32>
    %273 = arith.mulf %255, %272 : vector<2x128xf32>
    %c7_233 = arith.constant 7 : index
    %c0_234 = arith.constant 0 : index
    %274 = vector.load %arg3[%c7_233, %c0_234] : memref<11x128xf32, #tpu.memory_space<vmem>>, vector<1x128xf32>
    %275 = vector.broadcast %274 : vector<1x128xf32> to vector<2x128xf32>
    %276 = arith.addf %273, %275 : vector<2x128xf32>
    %c21 = arith.constant 21 : index
    %c0_235 = arith.constant 0 : index
    %c0_236 = arith.constant 0 : index
    %277 = vector.load %arg2[%c21, %c0_235, %c0_236] : memref<23x128x128xf32, #tpu.memory_space<vmem>>, vector<1x128x128xf32>
    %278 = vector.shape_cast %277 : vector<1x128x128xf32> to vector<128x128xf32>
    %cst_237 = arith.constant dense<0.000000e+00> : vector<2x128xf32>
    %279 = tpu.matmul %276, %278, %cst_237 {dimension_numbers = #tpu.dot_dimension_numbers<[1], [0], [0], [1], [0, 0, 1, 1], [], []>} : vector<2x128xf32>, vector<128x128xf32>, vector<2x128xf32> -> vector<2x128xf32>
    %c8_238 = arith.constant 8 : index
    %c0_239 = arith.constant 0 : index
    %280 = vector.load %arg3[%c8_238, %c0_239] : memref<11x128xf32, #tpu.memory_space<vmem>>, vector<1x128xf32>
    %281 = vector.broadcast %280 : vector<1x128xf32> to vector<2x128xf32>
    %282 = arith.mulf %270, %281 : vector<2x128xf32>
    %c9_240 = arith.constant 9 : index
    %c0_241 = arith.constant 0 : index
    %283 = vector.load %arg3[%c9_240, %c0_241] : memref<11x128xf32, #tpu.memory_space<vmem>>, vector<1x128xf32>
    %284 = vector.broadcast %283 : vector<1x128xf32> to vector<2x128xf32>
    %285 = arith.addf %282, %284 : vector<2x128xf32>
    %c22 = arith.constant 22 : index
    %c0_242 = arith.constant 0 : index
    %c0_243 = arith.constant 0 : index
    %286 = vector.load %arg2[%c22, %c0_242, %c0_243] : memref<23x128x128xf32, #tpu.memory_space<vmem>>, vector<1x128x128xf32>
    %287 = vector.shape_cast %286 : vector<1x128x128xf32> to vector<128x128xf32>
    %cst_244 = arith.constant dense<0.000000e+00> : vector<2x128xf32>
    %288 = tpu.matmul %285, %287, %cst_244 {dimension_numbers = #tpu.dot_dimension_numbers<[1], [0], [0], [1], [0, 0, 1, 1], [], []>} : vector<2x128xf32>, vector<128x128xf32>, vector<2x128xf32> -> vector<2x128xf32>
    %289 = arith.addf %279, %288 : vector<2x128xf32>
    %c10_245 = arith.constant 10 : index
    %c0_246 = arith.constant 0 : index
    %290 = vector.load %arg3[%c10_245, %c0_246] : memref<11x128xf32, #tpu.memory_space<vmem>>, vector<1x128xf32>
    %291 = vector.broadcast %290 : vector<1x128xf32> to vector<2x128xf32>
    %292 = arith.addf %289, %291 : vector<2x128xf32>
    %c0_247 = arith.constant 0 : index
    %c0_248 = arith.constant 0 : index
    %293 = vector.load %arg4[%c0_247, %c0_248] : memref<2x128xf32, #tpu.memory_space<vmem>>, vector<2x128xf32>
    tpu.vector_store %arg4[%c0_247, %c0_248], %292 {strides = array<i32>} : memref<2x128xf32, #tpu.memory_space<vmem>>, vector<2x128xf32>,
    return
  }
  func.func @transform_0(%arg0: i32) -> (i32, i32, i32) {
    %c0_i32 = arith.constant 0 : i32
    %c0_i32_0 = arith.constant 0 : i32
    %c0_i32_1 = arith.constant 0 : i32
    return %arg0, %c0_i32, %c0_i32_0 : i32, i32, i32
  }
  func.func @transform_1(%arg0: i32) -> (i32, i32, i32) {
    %c0_i32 = arith.constant 0 : i32
    %c0_i32_0 = arith.constant 0 : i32
    %c0_i32_1 = arith.constant 0 : i32
    %c0_i32_2 = arith.constant 0 : i32
    return %c0_i32, %c0_i32_0, %c0_i32_1 : i32, i32, i32
  }
  func.func @transform_2(%arg0: i32) -> (i32, i32) {
    %c0_i32 = arith.constant 0 : i32
    %c0_i32_0 = arith.constant 0 : i32
    %c0_i32_1 = arith.constant 0 : i32
    return %c0_i32, %c0_i32_0 : i32, i32
  }
  func.func @transform_3(%arg0: i32) -> (i32, i32) {
    %c0_i32 = arith.constant 0 : i32
    %c0_i32_0 = arith.constant 0 : i32
    return %arg0, %c0_i32 : i32, i32
  }
}

</mosaic_0001>

<llo_original>
// kernel: densenet1d_forward.1
$region0: #{densenet1d_forward.1}
  #allocation0 [shape = 'u32[]', space=smem, size = 0x4, offset = 0x4, fixed_abs, tag = 'smem constant byte address 0x4 - core index']
  #allocation1 [shape = 'u32[144,128]{1,0:T(1,128)}', space=vmem, size = 0x12000, scoped, tag = 'internal scratch']
  #allocation2 [shape = 'f32[2,38,128]{2,1,0:T(8,128)}', space=vmem, size = 0xa000, scoped, tag = 'scratch operand']
  %s0 = inlined_call_operand.vmem [shape: f32[2,32,128], index: 0, kind: input, shape index: {}]
  %s1 = inlined_call_operand.vmem [shape: f32[23,128,128], index: 1, kind: input, shape index: {}]
  %s2 = inlined_call_operand.vmem [shape: f32[11,128], index: 2, kind: input, shape index: {}]
  %s3 = inlined_call_operand.hbm [shape: f32[2,128], index: 3, kind: output, shape index: {}]
  %s4 = sld [smem:[#allocation0]]
  $region22: #{densenet1d_forward.1} parent=0
    _
  %s6 = ssub.s32 1, %s4
  %s7 = scalar_select 0, %s6, %s4
  $region1: #{densenet1d_forward.1} parent=0
    #allocation3 [shape = 'u8[1024]{0}', space=vmem, size = 0x400, scoped, tag = 'output window, operand 0, single buffered']
    #allocation4 [shape = 's32[1]{0}', space=sflag, size = 0x4, scoped, tag = 'scoped memory for densenet1d_forward.1']
    %8 = vsyncpa [#allocation4], 0
    // Predicated region
    $region2: #{densenet1d_forward.1} parent=1 // pred_check
      _
    $region3: #{densenet1d_forward.1} parent=1 // pred_check_branch
      %10 = sbr.rel (0) target = $region5
    $region4: #{densenet1d_forward.1} parent=1 // pred_region
      _
    $region5: #{densenet1d_forward.1} parent=1 // pred_fallthru
      _
    // Predicated region
    $region6: #{densenet1d_forward.1} parent=1 // pred_check
      _
    $region7: #{densenet1d_forward.1} parent=1 // pred_check_branch
      %12 = sbr.rel (0) target = $region9
    $region8: #{densenet1d_forward.1} parent=1 // pred_region
      _
    $region9: #{densenet1d_forward.1} parent=1 // pred_fallthru
      _
    // Predicated region
    $region10: #{densenet1d_forward.1} parent=1 // pred_check
      _
    $region11: #{densenet1d_forward.1} parent=1 // pred_check_branch
      %14 = sbr.rel (0) target = $region13
    $region12: #{densenet1d_forward.1} parent=1 // pred_region
      _
    $region13: #{densenet1d_forward.1} parent=1 // pred_fallthru
      _
    %v15 = vld [vmem:[%s0] sm:$0xff]
    %v16 = vld [vmem:[%s0 + $0x8] sm:$0xff]
    %v17 = vld [vmem:[%s0 + $0x10] sm:$0xff]
    %v18 = vld [vmem:[%s0 + $0x18] sm:$0xff]
    %v19 = vld [vmem:[%s0 + $0x20] sm:$0xff]
    %v20 = vld [vmem:[%s0 + $0x28] sm:$0xff]
    %v21 = vld [vmem:[%s0 + $0x30] sm:$0xff]
    %v22 = vld [vmem:[%s0 + $0x38] sm:$0xff]
    %23 = vst [vmem:[#allocation2] sm:$0x7] 0.0
    %24 = vst [vmem:[#allocation2 + $0x28] sm:$0x7] 0.0
    %25 = vst [vmem:[#allocation2 + $0x23] sm:$0x7] 0.0
    %26 = vst [vmem:[#allocation2 + $0x4b] sm:$0x7] 0.0
    %27 = vst [vmem:[#allocation2 + $0x3] sm:$0xff] %v15
    %28 = vst [vmem:[#allocation2 + $0xb] sm:$0xff] %v16
    %29 = vst [vmem:[#allocation2 + $0x13] sm:$0xff] %v17
    %30 = vst [vmem:[#allocation2 + $0x1b] sm:$0xff] %v18
    %s31 = scalar_lea.vmem [#allocation2], 40
    %32 = vst [vmem:[%s31 + $0x3] sm:$0xff] %v19
    %33 = vst [vmem:[%s31 + $0xb] sm:$0xff] %v20
    %34 = vst [vmem:[%s31 + $0x13] sm:$0xff] %v21
    %35 = vst [vmem:[%s31 + $0x1b] sm:$0xff] %v22
    %v36 = vld [vmem:[#allocation2] sm:$0xff]
    %v37 = vld [vmem:[#allocation2 + $0x8] sm:$0xff]
    %v38 = vld [vmem:[#allocation2 + $0x10] sm:$0xff]
    %v39 = vld [vmem:[#allocation2 + $0x18] sm:$0xff]
    %v40 = vld [vmem:[#allocation2 + $0x28] sm:$0xff]
    %v41 = vld [vmem:[#allocation2 + $0x30] sm:$0xff]
    %v42 = vld [vmem:[#allocation2 + $0x38] sm:$0xff]
    %v43 = vld [vmem:[#allocation2 + $0x40] sm:$0xff]
    %v44 = vld [vmem:[%s1] sm:$0xff]
    %v45 = vld [vmem:[%s1 + $0x8] sm:$0xff]
    %v46 = vld [vmem:[%s1 + $0x10] sm:$0xff]
    %v47 = vld [vmem:[%s1 + $0x18] sm:$0xff]
    %v48 = vld [vmem:[%s1 + $0x20] sm:$0xff]
    %v49 = vld [vmem:[%s1 + $0x28] sm:$0xff]
    %v50 = vld [vmem:[%s1 + $0x30] sm:$0xff]
    %v51 = vld [vmem:[%s1 + $0x38] sm:$0xff]
    %v52 = vld [vmem:[%s1 + $0x40] sm:$0xff]
    %v53 = vld [vmem:[%s1 + $0x48] sm:$0xff]
    %v54 = vld [vmem:[%s1 + $0x50] sm:$0xff]
    %v55 = vld [vmem:[%s1 + $0x58] sm:$0xff]
    %v56 = vld [vmem:[%s1 + $0x60] sm:$0xff]
    %v57 = vld [vmem:[%s1 + $0x68] sm:$0xff]
    %v58 = vld [vmem:[%s1 + $0x70] sm:$0xff]
    %v59 = vld [vmem:[%s1 + $0x78] sm:$0xff]
    %v60 = vld [vmem:[#allocation2 + $0x1] sm:$0xff]
    %v61 = vld [vmem:[#allocation2 + $0x9] sm:$0xff]
    %v62 = vld [vmem:[#allocation2 + $0x11] sm:$0xff]
    %v63 = vld [vmem:[#allocation2 + $0x19] sm:$0xff]
    %v64 = vld [vmem:[#allocation2 + $0x29] sm:$0xff]
    %v65 = vld [vmem:[#allocation2 + $0x31] sm:$0xff]
    %v66 = vld [vmem:[#allocation2 + $0x39] sm:$0xff]
    %v67 = vld [vmem:[#allocation2 + $0x41] sm:$0xff]
    %s68 = scalar_lea.vmem %s1, 128
    %v69 = vld [vmem:[%s68] sm:$0xff]
    %v70 = vld [vmem:[%s68 + $0x8] sm:$0xff]
    %v71 = vld [vmem:[%s68 + $0x10] sm:$0xff]
    %v72 = vld [vmem:[%s68 + $0x18] sm:$0xff]
    %v73 = vld [vmem:[%s68 + $0x20] sm:$0xff]
    %v74 = vld [vmem:[%s68 + $0x28] sm:$0xff]
    %v75 = vld [vmem:[%s68 + $0x30] sm:$0xff]
    %v76 = vld [vmem:[%s68 + $0x38] sm:$0xff]
    %v77 = vld [vmem:[%s68 + $0x40] sm:$0xff]
    %v78 = vld [vmem:[%s68 + $0x48] sm:$0xff]
    %v79 = vld [vmem:[%s68 + $0x50] sm:$0xff]
    %v80 = vld [vmem:[%s68 + $0x58] sm:$0xff]
    %v81 = vld [vmem:[%s68 + $0x60] sm:$0xff]
    %v82 = vld [vmem:[%s68 + $0x68] sm:$0xff]
    %v83 = vld [vmem:[%s68 + $0x70] sm:$0xff]
    %v84 = vld [vmem:[%s68 + $0x78] sm:$0xff]
    %85 = vmatprep.subr.mxu0 0.0
    %86 = vmatpush1.msra.mxu0 %v84
    %87 = vmatprep.subr.mxu0 0.0
    %88 = vmatpush1.msra.mxu0 %v83
    %89 = vmatprep.subr.mxu0 0.0
    %90 = vmatpush1.msra.mxu0 %v82
    %91 = vmatprep.subr.mxu0 0.0
    %92 = vmatpush1.msra.mxu0 %v81
    %93 = vmatprep.subr.mxu0 0.0
    %94 = vmatpush1.msra.mxu0 %v80
    %95 = vmatprep.subr.mxu0 0.0
    %96 = vmatpush1.msra.mxu0 %v79
    %97 = vmatprep.subr.mxu0 0.0
    %98 = vmatpush1.msra.mxu0 %v78
    %99 = vmatprep.subr.mxu0 0.0
    %100 = vmatpush1.msra.mxu0 %v77
    %101 = vmatprep.subr.mxu0 0.0
    %102 = vmatpush1.msra.mxu0 %v76
    %103 = vmatprep.subr.mxu0 0.0
    %104 = vmatpush1.msra.mxu0 %v75
    %105 = vmatprep.subr.mxu0 0.0
    %106 = vmatpush1.msra.mxu0 %v74
    %107 = vmatprep.subr.mxu0 0.0
    %108 = vmatpush1.msra.mxu0 %v73
    %109 = vmatprep.subr.mxu0 0.0
    %110 = vmatpush1.msra.mxu0 %v72
    %111 = vmatprep.subr.mxu0 0.0
    %112 = vmatpush1.msra.mxu0 %v71
    %113 = vmatprep.subr.mxu0 0.0
    %114 = vmatpush1.msra.mxu0 %v70
    %115 = vmatprep.subr.mxu0 0.0
    %116 = vmatpush1.msra.mxu0 %v69
    %117 = vmatprep.subr.mxu0 0.0
    %118 = vmatpush2.msra.mxu0 0.0
    %119 = vmatprep.subr.mxu0 0.0
    %120 = vmatpush2.msra.mxu0 0.0
    %121 = vmatprep.subr.mxu0 0.0
    %122 = vmatpush2.msra.mxu0 0.0
    %123 = vmatprep.subr.mxu0 0.0
    %124 = vmatpush2.msra.mxu0 0.0
    %125 = vmatprep.subr.mxu0 0.0
    %126 = vmatpush2.msra.mxu0 0.0
    %127 = vmatprep.subr.mxu0 0.0
    %128 = vmatpush2.msra.mxu0 0.0
    %129 = vmatprep.subr.mxu0 0.0
    %130 = vmatpush2.msra.mxu0 0.0
    %131 = vmatprep.subr.mxu0 0.0
    %132 = vmatpush2.msra.mxu0 0.0
    %133 = vmatprep.subr.mxu0 0.0
    %134 = vmatpush2.msra.mxu0 0.0
    %135 = vmatprep.subr.mxu0 0.0
    %136 = vmatpush2.msra.mxu0 0.0
    %137 = vmatprep.subr.mxu0 0.0
    %138 = vmatpush2.msra.mxu0 0.0
    %139 = vmatprep.subr.mxu0 0.0
    %140 = vmatpush2.msra.mxu0 0.0
    %141 = vmatprep.subr.mxu0 0.0
    %142 = vmatpush2.msra.mxu0 0.0
    %143 = vmatprep.subr.mxu0 0.0
    %144 = vmatpush2.msra.mxu0 0.0
    %145 = vmatprep.subr.mxu0 0.0
    %146 = vmatpush2.msra.mxu0 0.0
    %147 = vmatprep.subr.mxu0 0.0
    %148 = vmatpush2.msra.mxu0 0.0
    %149 = vmatprep.mubr.f32.mxu0 0.0
    %150 = vmatmul.mubr.f32.gmra.mxu0 %v60
    %v151 = vpop.f32.mrf.mxu0
    %v152 = vadd.f32 0.0, %v151
    %v153 = vpop.f32.mrf.mxu0
    %154 = vmatprep.mubr.f32.mxu0 0.0
    %155 = vmatmul.mubr.f32.gmra.mxu0 %v61
    %v156 = vpop.f32.mrf.mxu0
    %v157 = vadd.f32 0.0, %v156
    %v158 = vpop.f32.mrf.mxu0
    %159 = vmatprep.mubr.f32.mxu0 0.0
    %160 = vmatmul.mubr.f32.gmra.mxu0 %v62
    %v161 = vpop.f32.mrf.mxu0
    %v162 = vadd.f32 0.0, %v161
    %v163 = vpop.f32.mrf.mxu0
    %164 = vmatprep.mubr.f32.mxu0 0.0
    %165 = vmatmul.mubr.f32.gmra.mxu0 %v63
    %v166 = vpop.f32.mrf.mxu0
    %v167 = vadd.f32 0.0, %v166
    %v168 = vpop.f32.mrf.mxu0
    %169 = vmatprep.mubr.f32.mxu0 0.0
    %170 = vmatmul.mubr.f32.gmra.mxu0 %v64
    %v171 = vpop.f32.mrf.mxu0
    %v172 = vadd.f32 0.0, %v171
    %v173 = vpop.f32.mrf.mxu0
    %174 = vmatprep.mubr.f32.mxu0 0.0
    %175 = vmatmul.mubr.f32.gmra.mxu0 %v65
    %v176 = vpop.f32.mrf.mxu0
    %v177 = vadd.f32 0.0, %v176
    %v178 = vpop.f32.mrf.mxu0
    %179 = vmatprep.mubr.f32.mxu0 0.0
    %180 = vmatmul.mubr.f32.gmra.mxu0 %v66
    %v181 = vpop.f32.mrf.mxu0
    %v182 = vadd.f32 0.0, %v181
    %v183 = vpop.f32.mrf.mxu0
    %184 = vmatprep.mubr.f32.mxu0 0.0
    %185 = vmatmul.mubr.f32.gmra.mxu0 %v67
    %v186 = vpop.f32.mrf.mxu0
    %v187 = vadd.f32 0.0, %v186
    %v188 = vpop.f32.mrf.mxu0
    %189 = vdwg.mxu0
    %190 = vmatprep.subr.mxu0 0.0
    %191 = vmatpush1.msra.mxu0 %v59
    %192 = vmatprep.subr.mxu0 0.0
    %193 = vmatpush1.msra.mxu0 %v58
    %194 = vmatprep.subr.mxu0 0.0
    %195 = vmatpush1.msra.mxu0 %v57
    %196 = vmatprep.subr.mxu0 0.0
    %197 = vmatpush1.msra.mxu0 %v56
    %198 = vmatprep.subr.mxu0 0.0
    %199 = vmatpush1.msra.mxu0 %v55
    %200 = vmatprep.subr.mxu0 0.0
    %201 = vmatpush1.msra.mxu0 %v54
    %202 = vmatprep.subr.mxu0 0.0
    %203 = vmatpush1.msra.mxu0 %v53
    %204 = vmatprep.subr.mxu0 0.0
    %205 = vmatpush1.msra.mxu0 %v52
    %206 = vmatprep.subr.mxu0 0.0
    %207 = vmatpush1.msra.mxu0 %v51
    %208 = vmatprep.subr.mxu0 0.0
    %209 = vmatpush1.msra.mxu0 %v50
    %210 = vmatprep.subr.mxu0 0.0
    %211 = vmatpush1.msra.mxu0 %v49
    %212 = vmatprep.subr.mxu0 0.0
    %213 = vmatpush1.msra.mxu0 %v48
    %214 = vmatprep.subr.mxu0 0.0
    %215 = vmatpush1.msra.mxu0 %v47
    %216 = vmatprep.subr.mxu0 0.0
    %217 = vmatpush1.msra.mxu0 %v46
    %218 = vmatprep.subr.mxu0 0.0
    %219 = vmatpush1.msra.mxu0 %v45
    %220 = vmatprep.subr.mxu0 0.0
    %221 = vmatpush1.msra.mxu0 %v44
    %222 = vmatprep.subr.mxu0 0.0
    %223 = vmatpush2.msra.mxu0 0.0
    %224 = vmatprep.subr.mxu0 0.0
    %225 = vmatpush2.msra.mxu0 0.0
    %226 = vmatprep.subr.mxu0 0.0
    %227 = vmatpush2.msra.mxu0 0.0
    %228 = vmatprep.subr.mxu0 0.0
    %229 = vmatpush2.msra.mxu0 0.0
    %230 = vmatprep.subr.mxu0 0.0
    %231 = vmatpush2.msra.mxu0 0.0
    %232 = vmatprep.subr.mxu0 0.0
    %233 = vmatpush2.msra.mxu0 0.0
    %234 = vmatprep.subr.mxu0 0.0
    %235 = vmatpush2.msra.mxu0 0.0
    %236 = vmatprep.subr.mxu0 0.0
    %237 = vmatpush2.msra.mxu0 0.0
    %238 = vmatprep.subr.mxu0 0.0
    %239 = vmatpush2.msra.mxu0 0.0
    %240 = vmatprep.subr.mxu0 0.0
    %241 = vmatpush2.msra.mxu0 0.0
    %242 = vmatprep.subr.mxu0 0.0
    %243 = vmatpush2.msra.mxu0 0.0
    %244 = vmatprep.subr.mxu0 0.0
    %245 = vmatpush2.msra.mxu0 0.0
    %246 = vmatprep.subr.mxu0 0.0
    %247 = vmatpush2.msra.mxu0 0.0
    %248 = vmatprep.subr.mxu0 0.0
    %249 = vmatpush2.msra.mxu0 0.0
    %250 = vmatprep.subr.mxu0 0.0
    %251 = vmatpush2.msra.mxu0 0.0
    %252 = vmatprep.subr.mxu0 0.0
    %253 = vmatpush2.msra.mxu0 0.0
    %254 = vmatprep.mubr.f32.mxu0 0.0
    %255 = vmatmul.mubr.f32.gmra.mxu0 %v36
    %v256 = vpop.f32.mrf.mxu0
    %v257 = vadd.f32 %v152, %v256
    %v258 = vpop.f32.mrf.mxu0
    %259 = vmatprep.mubr.f32.mxu0 0.0
    %260 = vmatmul.mubr.f32.gmra.mxu0 %v37
    %v261 = vpop.f32.mrf.mxu0
    %v262 = vadd.f32 %v157, %v261
    %v263 = vpop.f32.mrf.mxu0
    %264 = vmatprep.mubr.f32.mxu0 0.0
    %265 = vmatmul.mubr.f32.gmra.mxu0 %v38
    %v266 = vpop.f32.mrf.mxu0
    %v267 = vadd.f32 %v162, %v266
    %v268 = vpop.f32.mrf.mxu0
    %269 = vmatprep.mubr.f32.mxu0 0.0
    %270 = vmatmul.mubr.f32.gmra.mxu0 %v39
    %v271 = vpop.f32.mrf.mxu0
    %v272 = vadd.f32 %v167, %v271
    %v273 = vpop.f32.mrf.mxu0
    %274 = vmatprep.mubr.f32.mxu0 0.0
    %275 = vmatmul.mubr.f32.gmra.mxu0 %v40
    %v276 = vpop.f32.mrf.mxu0
    %v277 = vadd.f32 %v172, %v276
    %v278 = vpop.f32.mrf.mxu0
    %279 = vmatprep.mubr.f32.mxu0 0.0
    %280 = vmatmul.mubr.f32.gmra.mxu0 %v41
    %v281 = vpop.f32.mrf.mxu0
    %v282 = vadd.f32 %v177, %v281
    %v283 = vpop.f32.mrf.mxu0
    %284 = vmatprep.mubr.f32.mxu0 0.0
    %285 = vmatmul.mubr.f32.gmra.mxu0 %v42
    %v286 = vpop.f32.mrf.mxu0
    %v287 = vadd.f32 %v182, %v286
    %v288 = vpop.f32.mrf.mxu0
    %289 = vmatprep.mubr.f32.mxu0 0.0
    %290 = vmatmul.mubr.f32.gmra.mxu0 %v43
    %v291 = vpop.f32.mrf.mxu0
    %v292 = vadd.f32 %v187, %v291
    %v293 = vpop.f32.mrf.mxu0
    %294 = vdwg.mxu0
    %v295 = vld [vmem:[#allocation2 + $0x2] sm:$0xff]
    %v296 = vld [vmem:[#allocation2 + $0xa] sm:$0xff]
    %v297 = vld [vmem:[#allocation2 + $0x12] sm:$0xff]
    %v298 = vld [vmem:[#allocation2 + $0x1a] sm:$0xff]
    %v299 = vld [vmem:[#allocation2 + $0x2a] sm:$0xff]
    %v300 = vld [vmem:[#allocation2 + $0x32] sm:$0xff]
    %v301 = vld [vmem:[#allocation2 + $0x3a] sm:$0xff]
    %v302 = vld [vmem:[#allocation2 + $0x42] sm:$0xff]
    %s303 = scalar_lea.vmem %s1, 256
    %v304 = vld [vmem:[%s303] sm:$0xff]
    %v305 = vld [vmem:[%s303 + $0x8] sm:$0xff]
    %v306 = vld [vmem:[%s303 + $0x10] sm:$0xff]
    %v307 = vld [vmem:[%s303 + $0x18] sm:$0xff]
    %v308 = vld [vmem:[%s303 + $0x20] sm:$0xff]
    %v309 = vld [vmem:[%s303 + $0x28] sm:$0xff]
    %v310 = vld [vmem:[%s303 + $0x30] sm:$0xff]
    %v311 = vld [vmem:[%s303 + $0x38] sm:$0xff]
    %v312 = vld [vmem:[%s303 + $0x40] sm:$0xff]
    %v313 = vld [vmem:[%s303 + $0x48] sm:$0xff]
    %v314 = vld [vmem:[%s303 + $0x50] sm:$0xff]
    %v315 = vld [vmem:[%s303 + $0x58] sm:$0xff]
    %v316 = vld [vmem:[%s303 + $0x60] sm:$0xff]
    %v317 = vld [vmem:[%s303 + $0x68] sm:$0xff]
    %v318 = vld [vmem:[%s303 + $0x70] sm:$0xff]
    %v319 = vld [vmem:[%s303 + $0x78] sm:$0xff]
    %320 = vmatprep.subr.mxu0 0.0
    %321 = vmatpush1.msra.mxu0 %v319
    %322 = vmatprep.subr.mxu0 0.0
    %323 = vmatpush1.msra.mxu0 %v318
    %324 = vmatprep.subr.mxu0 0.0
    %325 = vmatpush1.msra.mxu0 %v317
    %326 = vmatprep.subr.mxu0 0.0
    %327 = vmatpush1.msra.mxu0 %v316
    %328 = vmatprep.subr.mxu0 0.0
    %329 = vmatpush1.msra.mxu0 %v315
    %330 = vmatprep.subr.mxu0 0.0
    %331 = vmatpush1.msra.mxu0 %v314
    %332 = vmatprep.subr.mxu0 0.0
    %333 = vmatpush1.msra.mxu0 %v313
    %334 = vmatprep.subr.mxu0 0.0
    %335 = vmatpush1.msra.mxu0 %v312
    %336 = vmatprep.subr.mxu0 0.0
    %337 = vmatpush1.msra.mxu0 %v311
    %338 = vmatprep.subr.mxu0 0.0
    %339 = vmatpush1.msra.mxu0 %v310
    %340 = vmatprep.subr.mxu0 0.0
    %341 = vmatpush1.msra.mxu0 %v309
    %342 = vmatprep.subr.mxu0 0.0
    %343 = vmatpush1.msra.mxu0 %v308
    %344 = vmatprep.subr.mxu0 0.0
    %345 = vmatpush1.msra.mxu0 %v307
    %346 = vmatprep.subr.mxu0 0.0
    %347 = vmatpush1.msra.mxu0 %v306
    %348 = vmatprep.subr.mxu0 0.0
    %349 = vmatpush1.msra.mxu0 %v305
    %350 = vmatprep.subr.mxu0 0.0
    %351 = vmatpush1.msra.mxu0 %v304
    %352 = vmatprep.subr.mxu0 0.0
    %353 = vmatpush2.msra.mxu0 0.0
    %354 = vmatprep.subr.mxu0 0.0
    %355 = vmatpush2.msra.mxu0 0.0
    %356 = vmatprep.subr.mxu0 0.0
    %357 = vmatpush2.msra.mxu0 0.0
    %358 = vmatprep.subr.mxu0 0.0
    %359 = vmatpush2.msra.mxu0 0.0
    %360 = vmatprep.subr.mxu0 0.0
    %361 = vmatpush2.msra.mxu0 0.0
    %362 = vmatprep.subr.mxu0 0.0
    %363 = vmatpush2.msra.mxu0 0.0
    %364 = vmatprep.subr.mxu0 0.0
    %365 = vmatpush2.msra.mxu0 0.0
    %366 = vmatprep.subr.mxu0 0.0
    %367 = vmatpush2.msra.mxu0 0.0
    %368 = vmatprep.subr.mxu0 0.0
    %369 = vmatpush2.msra.mxu0 0.0
    %370 = vmatprep.subr.mxu0 0.0
    %371 = vmatpush2.msra.mxu0 0.0
    %372 = vmatprep.subr.mxu0 0.0
    %373 = vmatpush2.msra.mxu0 0.0
    %374 = vmatprep.subr.mxu0 0.0
    %375 = vmatpush2.msra.mxu0 0.0
    %376 = vmatprep.subr.mxu0 0.0
    %377 = vmatpush2.msra.mxu0 0.0
    %378 = vmatprep.subr.mxu0 0.0
    %379 = vmatpush2.msra.mxu0 0.0
    %380 = vmatprep.subr.mxu0 0.0
    %381 = vmatpush2.msra.mxu0 0.0
    %382 = vmatprep.subr.mxu0 0.0
    %383 = vmatpush2.msra.mxu0 0.0
    %384 = vmatprep.mubr.f32.mxu0 0.0
    %385 = vmatmul.mubr.f32.gmra.mxu0 %v295
    %v386 = vpop.f32.mrf.mxu0
    %v387 = vadd.f32 0.0, %v386
    %v388 = vpop.f32.mrf.mxu0
    %389 = vmatprep.mubr.f32.mxu0 0.0
    %390 = vmatmul.mubr.f32.gmra.mxu0 %v296
    %v391 = vpop.f32.mrf.mxu0
    %v392 = vadd.f32 0.0, %v391
    %v393 = vpop.f32.mrf.mxu0
    %394 = vmatprep.mubr.f32.mxu0 0.0
    %395 = vmatmul.mubr.f32.gmra.mxu0 %v297
    %v396 = vpop.f32.mrf.mxu0
    %v397 = vadd.f32 0.0, %v396
    %v398 = vpop.f32.mrf.mxu0
    %399 = vmatprep.mubr.f32.mxu0 0.0
    %400 = vmatmul.mubr.f32.gmra.mxu0 %v298
    %v401 = vpop.f32.mrf.mxu0
    %v402 = vadd.f32 0.0, %v401
    %v403 = vpop.f32.mrf.mxu0
    %404 = vmatprep.mubr.f32.mxu0 0.0
    %405 = vmatmul.mubr.f32.gmra.mxu0 %v299
    %v406 = vpop.f32.mrf.mxu0
    %v407 = vadd.f32 0.0, %v406
    %v408 = vpop.f32.mrf.mxu0
    %409 = vmatprep.mubr.f32.mxu0 0.0
    %410 = vmatmul.mubr.f32.gmra.mxu0 %v300
    %v411 = vpop.f32.mrf.mxu0
    %v412 = vadd.f32 0.0, %v411
    %v413 = vpop.f32.mrf.mxu0
    %414 = vmatprep.mubr.f32.mxu0 0.0
    %415 = vmatmul.mubr.f32.gmra.mxu0 %v301
    %v416 = vpop.f32.mrf.mxu0
    %v417 = vadd.f32 0.0, %v416
    %v418 = vpop.f32.mrf.mxu0
    %419 = vmatprep.mubr.f32.mxu0 0.0
    %420 = vmatmul.mubr.f32.gmra.mxu0 %v302
    %v421 = vpop.f32.mrf.mxu0
    %v422 = vadd.f32 0.0, %v421
    %v423 = vpop.f32.mrf.mxu0
    %424 = vdwg.mxu0
    %v425 = vadd.f32 %v257, %v387
    %v426 = vadd.f32 %v262, %v392
    %v427 = vadd.f32 %v267, %v397
    %v428 = vadd.f32 %v272, %v402
    %v429 = vadd.f32 %v277, %v407
    %v430 = vadd.f32 %v282, %v412
    %v431 = vadd.f32 %v287, %v417
    %v432 = vadd.f32 %v292, %v422
    %v433 = vld [vmem:[#allocation2 + $0x3] sm:$0xff]
    %v434 = vld [vmem:[#allocation2 + $0xb] sm:$0xff]
    %v435 = vld [vmem:[#allocation2 + $0x13] sm:$0xff]
    %v436 = vld [vmem:[#allocation2 + $0x1b] sm:$0xff]
    %v437 = vld [vmem:[#allocation2 + $0x2b] sm:$0xff]
    %v438 = vld [vmem:[#allocation2 + $0x33] sm:$0xff]
    %v439 = vld [vmem:[#allocation2 + $0x3b] sm:$0xff]
    %v440 = vld [vmem:[#allocation2 + $0x43] sm:$0xff]
    %s441 = scalar_lea.vmem %s1, 384
    %v442 = vld [vmem:[%s441] sm:$0xff]
    %v443 = vld [vmem:[%s441 + $0x8] sm:$0xff]
    %v444 = vld [vmem:[%s441 + $0x10] sm:$0xff]
    %v445 = vld [vmem:[%s441 + $0x18] sm:$0xff]
    %v446 = vld [vmem:[%s441 + $0x20] sm:$0xff]
    %v447 = vld [vmem:[%s441 + $0x28] sm:$0xff]
    %v448 = vld [vmem:[%s441 + $0x30] sm:$0xff]
    %v449 = vld [vmem:[%s441 + $0x38] sm:$0xff]
    %v450 = vld [vmem:[%s441 + $0x40] sm:$0xff]
    %v451 = vld [vmem:[%s441 + $0x48] sm:$0xff]
    %v452 = vld [vmem:[%s441 + $0x50] sm:$0xff]
    %v453 = vld [vmem:[%s441 + $0x58] sm:$0xff]
    %v454 = vld [vmem:[%s441 + $0x60] sm:$0xff]
    %v455 = vld [vmem:[%s441 + $0x68] sm:$0xff]
    %v456 = vld [vmem:[%s441 + $0x70] sm:$0xff]
    %v457 = vld [vmem:[%s441 + $0x78] sm:$0xff]
    %458 = vmatprep.subr.mxu0 0.0
    %459 = vmatpush1.msra.mxu0 %v457
    %460 = vmatprep.subr.mxu0 0.0
    %461 = vmatpush1.msra.mxu0 %v456
    %462 = vmatprep.subr.mxu0 0.0
    %463 = vmatpush1.msra.mxu0 %v455
    %464 = vmatprep.subr.mxu0 0.0
    %465 = vmatpush1.msra.mxu0 %v454
    %466 = vmatprep.subr.mxu0 0.0
    %467 = vmatpush1.msra.mxu0 %v453
    %468 = vmatprep.subr.mxu0 0.0
    %469 = vmatpush1.msra.mxu0 %v452
    %470 = vmatprep.subr.mxu0 0.0
    %471 = vmatpush1.msra.mxu0 %v451
    %472 = vmatprep.subr.mxu0 0.0
    %473 = vmatpush1.msra.mxu0 %v450
    %474 = vmatprep.subr.mxu0 0.0
    %475 = vmatpush1.msra.mxu0 %v449
    %476 = vmatprep.subr.mxu0 0.0
    %477 = vmatpush1.msra.mxu0 %v448
    %478 = vmatprep.subr.mxu0 0.0
    %479 = vmatpush1.msra.mxu0 %v447
    %480 = vmatprep.subr.mxu0 0.0
    %481 = vmatpush1.msra.mxu0 %v446
    %482 = vmatprep.subr.mxu0 0.0
    %483 = vmatpush1.msra.mxu0 %v445
    %484 = vmatprep.subr.mxu0 0.0
    %485 = vmatpush1.msra.mxu0 %v444
    %486 = vmatprep.subr.mxu0 0.0
    %487 = vmatpush1.msra.mxu0 %v443
    %488 = vmatprep.subr.mxu0 0.0
    %489 = vmatpush1.msra.mxu0 %v442
    %490 = vmatprep.subr.mxu0 0.0
    %491 = vmatpush2.msra.mxu0 0.0
    %492 = vmatprep.subr.mxu0 0.0
    %493 = vmatpush2.msra.mxu0 0.0
    %494 = vmatprep.subr.mxu0 0.0
    %495 = vmatpush2.msra.mxu0 0.0
    %496 = vmatprep.subr.mxu0 0.0
    %497 = vmatpush2.msra.mxu0 0.0
    %498 = vmatprep.subr.mxu0 0.0
    %499 = vmatpush2.msra.mxu0 0.0
    %500 = vmatprep.subr.mxu0 0.0
    %501 = vmatpush2.msra.mxu0 0.0
    %502 = vmatprep.subr.mxu0 0.0
    %503 = vmatpush2.msra.mxu0 0.0
    %504 = vmatprep.subr.mxu0 0.0
    %505 = vmatpush2.msra.mxu0 0.0
    %506 = vmatprep.subr.mxu0 0.0
    %507 = vmatpush2.msra.mxu0 0.0
    %508 = vmatprep.subr.mxu0 0.0
    %509 = vmatpush2.msra.mxu0 0.0
    %510 = vmatprep.subr.mxu0 0.0
    %511 = vmatpush2.msra.mxu0 0.0
    %512 = vmatprep.subr.mxu0 0.0
    %513 = vmatpush2.msra.mxu0 0.0
    %514 = vmatprep.subr.mxu0 0.0
    %515 = vmatpush2.msra.mxu0 0.0
    %516 = vmatprep.subr.mxu0 0.0
    %517 = vmatpush2.msra.mxu0 0.0
    %518 = vmatprep.subr.mxu0 0.0
    %519 = vmatpush2.msra.mxu0 0.0
    %520 = vmatprep.subr.mxu0 0.0
    %521 = vmatpush2.msra.mxu0 0.0
    %522 = vmatprep.mubr.f32.mxu0 0.0
    %523 = vmatmul.mubr.f32.gmra.mxu0 %v433
    %v524 = vpop.f32.mrf.mxu0
    %v525 = vadd.f32 0.0, %v524
    %v526 = vpop.f32.mrf.mxu0
    %527 = vmatprep.mubr.f32.mxu0 0.0
    %528 = vmatmul.mubr.f32.gmra.mxu0 %v434
    %v529 = vpop.f32.mrf.mxu0
    %v530 = vadd.f32 0.0, %v529
    %v531 = vpop.f32.mrf.mxu0
    %532 = vmatprep.mubr.f32.mxu0 0.0
    %533 = vmatmul.mubr.f32.gmra.mxu0 %v435
    %v534 = vpop.f32.mrf.mxu0
    %v535 = vadd.f32 0.0, %v534
    %v536 = vpop.f32.mrf.mxu0
    %537 = vmatprep.mubr.f32.mxu0 0.0
    %538 = vmatmul.mubr.f32.gmra.mxu0 %v436
    %v539 = vpop.f32.mrf.mxu0
    %v540 = vadd.f32 0.0, %v539
    %v541 = vpop.f32.mrf.mxu0
    %542 = vmatprep.mubr.f32.mxu0 0.0
    %543 = vmatmul.mubr.f32.gmra.mxu0 %v437
    %v544 = vpop.f32.mrf.mxu0
    %v545 = vadd.f32 0.0, %v544
    %v546 = vpop.f32.mrf.mxu0
    %547 = vmatprep.mubr.f32.mxu0 0.0
    %548 = vmatmul.mubr.f32.gmra.mxu0 %v438
    %v549 = vpop.f32.mrf.mxu0
    %v550 = vadd.f32 0.0, %v549
    %v551 = vpop.f32.mrf.mxu0
    %552 = vmatprep.mubr.f32.mxu0 0.0
    %553 = vmatmul.mubr.f32.gmra.mxu0 %v439
    %v554 = vpop.f32.mrf.mxu0
    %v555 = vadd.f32 0.0, %v554
    %v556 = vpop.f32.mrf.mxu0
    %557 = vmatprep.mubr.f32.mxu0 0.0
    %558 = vmatmul.mubr.f32.gmra.mxu0 %v440
    %v559 = vpop.f32.mrf.mxu0
    %v560 = vadd.f32 0.0, %v559
    %v561 = vpop.f32.mrf.mxu0
    %562 = vdwg.mxu0
    %v563 = vadd.f32 %v425, %v525
    %v564 = vadd.f32 %v426, %v530
    %v565 = vadd.f32 %v427, %v535
    %v566 = vadd.f32 %v428, %v540
    %v567 = vadd.f32 %v429, %v545
    %v568 = vadd.f32 %v430, %v550
    %v569 = vadd.f32 %v431, %v555
    %v570 = vadd.f32 %v432, %v560
    %v571 = vld [vmem:[#allocation2 + $0x4] sm:$0xff]
    %v572 = vld [vmem:[#allocation2 + $0xc] sm:$0xff]
    %v573 = vld [vmem:[#allocation2 + $0x14] sm:$0xff]
    %v574 = vld [vmem:[#allocation2 + $0x1c] sm:$0xff]
    %v575 = vld [vmem:[#allocation2 + $0x2c] sm:$0xff]
    %v576 = vld [vmem:[#allocation2 + $0x34] sm:$0xff]
    %v577 = vld [vmem:[#allocation2 + $0x3c] sm:$0xff]
    %v578 = vld [vmem:[#allocation2 + $0x44] sm:$0xff]
    %s579 = scalar_lea.vmem %s1, 512
    %v580 = vld [vmem:[%s579] sm:$0xff]
    %v581 = vld [vmem:[%s579 + $0x8] sm:$0xff]
    %v582 = vld [vmem:[%s579 + $0x10] sm:$0xff]
    %v583 = vld [vmem:[%s579 + $0x18] sm:$0xff]
    %v584 = vld [vmem:[%s579 + $0x20] sm:$0xff]
    %v585 = vld [vmem:[%s579 + $0x28] sm:$0xff]
    %v586 = vld [vmem:[%s579 + $0x30] sm:$0xff]
    %v587 = vld [vmem:[%s579 + $0x38] sm:$0xff]
    %v588 = vld [vmem:[%s579 + $0x40] sm:$0xff]
    %v589 = vld [vmem:[%s579 + $0x48] sm:$0xff]
    %v590 = vld [vmem:[%s579 + $0x50] sm:$0xff]
    %v591 = vld [vmem:[%s579 + $0x58] sm:$0xff]
    %v592 = vld [vmem:[%s579 + $0x60] sm:$0xff]
    %v593 = vld [vmem:[%s579 + $0x68] sm:$0xff]
    %v594 = vld [vmem:[%s579 + $0x70] sm:$0xff]
    %v595 = vld [vmem:[%s579 + $0x78] sm:$0xff]
    %596 = vmatprep.subr.mxu0 0.0
    %597 = vmatpush1.msra.mxu0 %v595
    %598 = vmatprep.subr.mxu0 0.0
    %599 = vmatpush1.msra.mxu0 %v594
    %600 = vmatprep.subr.mxu0 0.0
    %601 = vmatpush1.msra.mxu0 %v593
    %602 = vmatprep.subr.mxu0 0.0
    %603 = vmatpush1.msra.mxu0 %v592
    %604 = vmatprep.subr.mxu0 0.0
    %605 = vmatpush1.msra.mxu0 %v591
    %606 = vmatprep.subr.mxu0 0.0
    %607 = vmatpush1.msra.mxu0 %v590
    %608 = vmatprep.subr.mxu0 0.0
    %609 = vmatpush1.msra.mxu0 %v589
    %610 = vmatprep.subr.mxu0 0.0
    %611 = vmatpush1.msra.mxu0 %v588
    %612 = vmatprep.subr.mxu0 0.0
    %613 = vmatpush1.msra.mxu0 %v587
    %614 = vmatprep.subr.mxu0 0.0
    %615 = vmatpush1.msra.mxu0 %v586
    %616 = vmatprep.subr.mxu0 0.0
    %617 = vmatpush1.msra.mxu0 %v585
    %618 = vmatprep.subr.mxu0 0.0
    %619 = vmatpush1.msra.mxu0 %v584
    %620 = vmatprep.subr.mxu0 0.0
    %621 = vmatpush1.msra.mxu0 %v583
    %622 = vmatprep.subr.mxu0 0.0
    %623 = vmatpush1.msra.mxu0 %v582
    %624 = vmatprep.subr.mxu0 0.0
    %625 = vmatpush1.msra.mxu0 %v581
    %626 = vmatprep.subr.mxu0 0.0
    %627 = vmatpush1.msra.mxu0 %v580
    %628 = vmatprep.subr.mxu0 0.0
    %629 = vmatpush2.msra.mxu0 0.0
    %630 = vmatprep.subr.mxu0 0.0
    %631 = vmatpush2.msra.mxu0 0.0
    %632 = vmatprep.subr.mxu0 0.0
    %633 = vmatpush2.msra.mxu0 0.0
    %634 = vmatprep.subr.mxu0 0.0
    %635 = vmatpush2.msra.mxu0 0.0
    %636 = vmatprep.subr.mxu0 0.0
    %637 = vmatpush2.msra.mxu0 0.0
    %638 = vmatprep.subr.mxu0 0.0
    %639 = vmatpush2.msra.mxu0 0.0
    %640 = vmatprep.subr.mxu0 0.0
    %641 = vmatpush2.msra.mxu0 0.0
    %642 = vmatprep.subr.mxu0 0.0
    %643 = vmatpush2.msra.mxu0 0.0
    %644 = vmatprep.subr.mxu0 0.0
    %645 = vmatpush2.msra.mxu0 0.0
    %646 = vmatprep.subr.mxu0 0.0
    %647 = vmatpush2.msra.mxu0 0.0
    %648 = vmatprep.subr.mxu0 0.0
    %649 = vmatpush2.msra.mxu0 0.0
    %650 = vmatprep.subr.mxu0 0.0
    %651 = vmatpush2.msra.mxu0 0.0
    %652 = vmatprep.subr.mxu0 0.0
    %653 = vmatpush2.msra.mxu0 0.0
    %654 = vmatprep.subr.mxu0 0.0
    %655 = vmatpush2.msra.mxu0 0.0
    %656 = vmatprep.subr.mxu0 0.0
    %657 = vmatpush2.msra.mxu0 0.0
    %658 = vmatprep.subr.mxu0 0.0
    %659 = vmatpush2.msra.mxu0 0.0
    %660 = vmatprep.mubr.f32.mxu0 0.0
    %661 = vmatmul.mubr.f32.gmra.mxu0 %v571
    %v662 = vpop.f32.mrf.mxu0
    %v663 = vadd.f32 0.0, %v662
    %v664 = vpop.f32.mrf.mxu0
    %665 = vmatprep.mubr.f32.mxu0 0.0
    %666 = vmatmul.mubr.f32.gmra.mxu0 %v572
    %v667 = vpop.f32.mrf.mxu0
    %v668 = vadd.f32 0.0, %v667
    %v669 = vpop.f32.mrf.mxu0
    %670 = vmatprep.mubr.f32.mxu0 0.0
    %671 = vmatmul.mubr.f32.gmra.mxu0 %v573
    %v672 = vpop.f32.mrf.mxu0
    %v673 = vadd.f32 0.0, %v672
    %v674 = vpop.f32.mrf.mxu0
    %675 = vmatprep.mubr.f32.mxu0 0.0
    %676 = vmatmul.mubr.f32.gmra.mxu0 %v574
    %v677 = vpop.f32.mrf.mxu0
    %v678 = vadd.f32 0.0, %v677
    %v679 = vpop.f32.mrf.mxu0
    %680 = vmatprep.mubr.f32.mxu0 0.0
    %681 = vmatmul.mubr.f32.gmra.mxu0 %v575
    %v682 = vpop.f32.mrf.mxu0
    %v683 = vadd.f32 0.0, %v682
    %v684 = vpop.f32.mrf.mxu0
    %685 = vmatprep.mubr.f32.mxu0 0.0
    %686 = vmatmul.mubr.f32.gmra.mxu0 %v576
    %v687 = vpop.f32.mrf.mxu0
    %v688 = vadd.f32 0.0, %v687
    %v689 = vpop.f32.mrf.mxu0
    %690 = vmatprep.mubr.f32.mxu0 0.0
    %691 = vmatmul.mubr.f32.gmra.mxu0 %v577
    %v692 = vpop.f32.mrf.mxu0
    %v693 = vadd.f32 0.0, %v692
    %v694 = vpop.f32.mrf.mxu0
    %695 = vmatprep.mubr.f32.mxu0 0.0
    %696 = vmatmul.mubr.f32.gmra.mxu0 %v578
    %v697 = vpop.f32.mrf.mxu0
    %v698 = vadd.f32 0.0, %v697
    %v699 = vpop.f32.mrf.mxu0
    %700 = vdwg.mxu0
    %v701 = vadd.f32 %v563, %v663
    %v702 = vadd.f32 %v564, %v668
    %v703 = vadd.f32 %v565, %v673
    %v704 = vadd.f32 %v566, %v678
    %v705 = vadd.f32 %v567, %v683
    %v706 = vadd.f32 %v568, %v688
    %v707 = vadd.f32 %v569, %v693
    %v708 = vadd.f32 %v570, %v698
    %v709 = vld [vmem:[#allocation2 + $0x5] sm:$0xff]
    %v710 = vld [vmem:[#allocation2 + $0xd] sm:$0xff]
    %v711 = vld [vmem:[#allocation2 + $0x15] sm:$0xff]
    %v712 = vld [vmem:[#allocation2 + $0x1d] sm:$0xff]
    %v713 = vld [vmem:[#allocation2 + $0x2d] sm:$0xff]
    %v714 = vld [vmem:[#allocation2 + $0x35] sm:$0xff]
    %v715 = vld [vmem:[#allocation2 + $0x3d] sm:$0xff]
    %v716 = vld [vmem:[#allocation2 + $0x45] sm:$0xff]
    %s717 = scalar_lea.vmem %s1, 640
    %v718 = vld [vmem:[%s717] sm:$0xff]
    %v719 = vld [vmem:[%s717 + $0x8] sm:$0xff]
    %v720 = vld [vmem:[%s717 + $0x10] sm:$0xff]
    %v721 = vld [vmem:[%s717 + $0x18] sm:$0xff]
    %v722 = vld [vmem:[%s717 + $0x20] sm:$0xff]
    %v723 = vld [vmem:[%s717 + $0x28] sm:$0xff]
    %v724 = vld [vmem:[%s717 + $0x30] sm:$0xff]
    %v725 = vld [vmem:[%s717 + $0x38] sm:$0xff]
    %v726 = vld [vmem:[%s717 + $0x40] sm:$0xff]
    %v727 = vld [vmem:[%s717 + $0x48] sm:$0xff]
    %v728 = vld [vmem:[%s717 + $0x50] sm:$0xff]
    %v729 = vld [vmem:[%s717 + $0x58] sm:$0xff]
    %v730 = vld [vmem:[%s717 + $0x60] sm:$0xff]
    %v731 = vld [vmem:[%s717 + $0x68] sm:$0xff]
    %v732 = vld [vmem:[%s717 + $0x70] sm:$0xff]
    %v733 = vld [vmem:[%s717 + $0x78] sm:$0xff]
    %734 = vmatprep.subr.mxu0 0.0
    %735 = vmatpush1.msra.mxu0 %v733
    %736 = vmatprep.subr.mxu0 0.0
    %737 = vmatpush1.msra.mxu0 %v732
    %738 = vmatprep.subr.mxu0 0.0
    %739 = vmatpush1.msra.mxu0 %v731
    %740 = vmatprep.subr.mxu0 0.0
    %741 = vmatpush1.msra.mxu0 %v730
    %742 = vmatprep.subr.mxu0 0.0
    %743 = vmatpush1.msra.mxu0 %v729
    %744 = vmatprep.subr.mxu0 0.0
    %745 = vmatpush1.msra.mxu0 %v728
    %746 = vmatprep.subr.mxu0 0.0
    %747 = vmatpush1.msra.mxu0 %v727
    %748 = vmatprep.subr.mxu0 0.0
    %749 = vmatpush1.msra.mxu0 %v726
    %750 = vmatprep.subr.mxu0 0.0
    %751 = vmatpush1.msra.mxu0 %v725
    %752 = vmatprep.subr.mxu0 0.0
    %753 = vmatpush1.msra.mxu0 %v724
    %754 = vmatprep.subr.mxu0 0.0
    %755 = vmatpush1.msra.mxu0 %v723
    %756 = vmatprep.subr.mxu0 0.0
    %757 = vmatpush1.msra.mxu0 %v722
    %758 = vmatprep.subr.mxu0 0.0
    %759 = vmatpush1.msra.mxu0 %v721
    %760 = vmatprep.subr.mxu0 0.0
    %761 = vmatpush1.msra.mxu0 %v720
    %762 = vmatprep.subr.mxu0 0.0
    %763 = vmatpush1.msra.mxu0 %v719
    %764 = vmatprep.subr.mxu0 0.0
    %765 = vmatpush1.msra.mxu0 %v718
    %766 = vmatprep.subr.mxu0 0.0
    %767 = vmatpush2.msra.mxu0 0.0
    %768 = vmatprep.subr.mxu0 0.0
    %769 = vmatpush2.msra.mxu0 0.0
    %770 = vmatprep.subr.mxu0 0.0
    %771 = vmatpush2.msra.mxu0 0.0
    %772 = vmatprep.subr.mxu0 0.0
    %773 = vmatpush2.msra.mxu0 0.0
    %774 = vmatprep.subr.mxu0 0.0
    %775 = vmatpush2.msra.mxu0 0.0
    %776 = vmatprep.subr.mxu0 0.0
    %777 = vmatpush2.msra.mxu0 0.0
    %778 = vmatprep.subr.mxu0 0.0
    %779 = vmatpush2.msra.mxu0 0.0
    %780 = vmatprep.subr.mxu0 0.0
    %781 = vmatpush2.msra.mxu0 0.0
    %782 = vmatprep.subr.mxu0 0.0
    %783 = vmatpush2.msra.mxu0 0.0
    %784 = vmatprep.subr.mxu0 0.0
    %785 = vmatpush2.msra.mxu0 0.0
    %786 = vmatprep.subr.mxu0 0.0
    %787 = vmatpush2.msra.mxu0 0.0
    %788 = vmatprep.subr.mxu0 0.0
    %789 = vmatpush2.msra.mxu0 0.0
    %790 = vmatprep.subr.mxu0 0.0
    %791 = vmatpush2.msra.mxu0 0.0
    %792 = vmatprep.subr.mxu0 0.0
    %793 = vmatpush2.msra.mxu0 0.0
    %794 = vmatprep.subr.mxu0 0.0
    %795 = vmatpush2.msra.mxu0 0.0
    %796 = vmatprep.subr.mxu0 0.0
    %797 = vmatpush2.msra.mxu0 0.0
    %798 = vmatprep.mubr.f32.mxu0 0.0
    %799 = vmatmul.mubr.f32.gmra.mxu0 %v709
    %v800 = vpop.f32.mrf.mxu0
    %v801 = vadd.f32 0.0, %v800
    %v802 = vpop.f32.mrf.mxu0
    %803 = vmatprep.mubr.f32.mxu0 0.0
    %804 = vmatmul.mubr.f32.gmra.mxu0 %v710
    %v805 = vpop.f32.mrf.mxu0
    %v806 = vadd.f32 0.0, %v805
    %v807 = vpop.f32.mrf.mxu0
    %808 = vmatprep.mubr.f32.mxu0 0.0
    %809 = vmatmul.mubr.f32.gmra.mxu0 %v711
    %v810 = vpop.f32.mrf.mxu0
    %v811 = vadd.f32 0.0, %v810
    %v812 = vpop.f32.mrf.mxu0
    %813 = vmatprep.mubr.f32.mxu0 0.0
    %814 = vmatmul.mubr.f32.gmra.mxu0 %v712
    %v815 = vpop.f32.mrf.mxu0
    %v816 = vadd.f32 0.0, %v815
    %v817 = vpop.f32.mrf.mxu0
    %818 = vmatprep.mubr.f32.mxu0 0.0
    %819 = vmatmul.mubr.f32.gmra.mxu0 %v713
    %v820 = vpop.f32.mrf.mxu0
    %v821 = vadd.f32 0.0, %v820
    %v822 = vpop.f32.mrf.mxu0
    %823 = vmatprep.mubr.f32.mxu0 0.0
    %824 = vmatmul.mubr.f32.gmra.mxu0 %v714
    %v825 = vpop.f32.mrf.mxu0
    %v826 = vadd.f32 0.0, %v825
    %v827 = vpop.f32.mrf.mxu0
    %828 = vmatprep.mubr.f32.mxu0 0.0
    %829 = vmatmul.mubr.f32.gmra.mxu0 %v715
    %v830 = vpop.f32.mrf.mxu0
    %v831 = vadd.f32 0.0, %v830
    %v832 = vpop.f32.mrf.mxu0
    %833 = vmatprep.mubr.f32.mxu0 0.0
    %834 = vmatmul.mubr.f32.gmra.mxu0 %v716
    %v835 = vpop.f32.mrf.mxu0
    %v836 = vadd.f32 0.0, %v835
    %v837 = vpop.f32.mrf.mxu0
    %838 = vdwg.mxu0
    %v839 = vadd.f32 %v701, %v801
    %v840 = vadd.f32 %v702, %v806
    %v841 = vadd.f32 %v703, %v811
    %v842 = vadd.f32 %v704, %v816
    %v843 = vadd.f32 %v705, %v821
    %v844 = vadd.f32 %v706, %v826
    %v845 = vadd.f32 %v707, %v831
    %v846 = vadd.f32 %v708, %v836
    %v847 = vld [vmem:[#allocation2 + $0x6] sm:$0xff]
    %v848 = vld [vmem:[#allocation2 + $0xe] sm:$0xff]
    %v849 = vld [vmem:[#allocation2 + $0x16] sm:$0xff]
    %v850 = vld [vmem:[#allocation2 + $0x1e] sm:$0xff]
    %v851 = vld [vmem:[#allocation2 + $0x2e] sm:$0xff]
    %v852 = vld [vmem:[#allocation2 + $0x36] sm:$0xff]
    %v853 = vld [vmem:[#allocation2 + $0x3e] sm:$0xff]
    %v854 = vld [vmem:[#allocation2 + $0x46] sm:$0xff]
    %s855 = scalar_lea.vmem %s1, 768
    %v856 = vld [vmem:[%s855] sm:$0xff]
    %v857 = vld [vmem:[%s855 + $0x8] sm:$0xff]
    %v858 = vld [vmem:[%s855 + $0x10] sm:$0xff]
    %v859 = vld [vmem:[%s855 + $0x18] sm:$0xff]
    %v860 = vld [vmem:[%s855 + $0x20] sm:$0xff]
    %v861 = vld [vmem:[%s855 + $0x28] sm:$0xff]
    %v862 = vld [vmem:[%s855 + $0x30] sm:$0xff]
    %v863 = vld [vmem:[%s855 + $0x38] sm:$0xff]
    %v864 = vld [vmem:[%s855 + $0x40] sm:$0xff]
    %v865 = vld [vmem:[%s855 + $0x48] sm:$0xff]
    %v866 = vld [vmem:[%s855 + $0x50] sm:$0xff]
    %v867 = vld [vmem:[%s855 + $0x58] sm:$0xff]
    %v868 = vld [vmem:[%s855 + $0x60] sm:$0xff]
    %v869 = vld [vmem:[%s855 + $0x68] sm:$0xff]
    %v870 = vld [vmem:[%s855 + $0x70] sm:$0xff]
    %v871 = vld [vmem:[%s855 + $0x78] sm:$0xff]
    %872 = vmatprep.subr.mxu0 0.0
    %873 = vmatpush1.msra.mxu0 %v871
    %874 = vmatprep.subr.mxu0 0.0
    %875 = vmatpush1.msra.mxu0 %v870
    %876 = vmatprep.subr.mxu0 0.0
    %877 = vmatpush1.msra.mxu0 %v869
    %878 = vmatprep.subr.mxu0 0.0
    %879 = vmatpush1.msra.mxu0 %v868
    %880 = vmatprep.subr.mxu0 0.0
    %881 = vmatpush1.msra.mxu0 %v867
    %882 = vmatprep.subr.mxu0 0.0
    %883 = vmatpush1.msra.mxu0 %v866
    %884 = vmatprep.subr.mxu0 0.0
    %885 = vmatpush1.msra.mxu0 %v865
    %886 = vmatprep.subr.mxu0 0.0
    %887 = vmatpush1.msra.mxu0 %v864
    %888 = vmatprep.subr.mxu0 0.0
    %889 = vmatpush1.msra.mxu0 %v863
    %890 = vmatprep.subr.mxu0 0.0
    %891 = vmatpush1.msra.mxu0 %v862
    %892 = vmatprep.subr.mxu0 0.0
    %893 = vmatpush1.msra.mxu0 %v861
    %894 = vmatprep.subr.mxu0 0.0
    %895 = vmatpush1.msra.mxu0 %v860
    %896 = vmatprep.subr.mxu0 0.0
    %897 = vmatpush1.msra.mxu0 %v859
    %898 = vmatprep.subr.mxu0 0.0
    %899 = vmatpush1.msra.mxu0 %v858
    %900 = vmatprep.subr.mxu0 0.0
    %901 = vmatpush1.msra.mxu0 %v857
    %902 = vmatprep.subr.mxu0 0.0
    %903 = vmatpush1.msra.mxu0 %v856
    %904 = vmatprep.subr.mxu0 0.0
    %905 = vmatpush2.msra.mxu0 0.0
    %906 = vmatprep.subr.mxu0 0.0
    %907 = vmatpush2.msra.mxu0 0.0
    %908 = vmatprep.subr.mxu0 0.0
    %909 = vmatpush2.msra.mxu0 0.0
    %910 = vmatprep.subr.mxu0 0.0
    %911 = vmatpush2.msra.mxu0 0.0
    %912 = vmatprep.subr.mxu0 0.0
    %913 = vmatpush2.msra.mxu0 0.0
    %914 = vmatprep.subr.mxu0 0.0
    %915 = vmatpush2.msra.mxu0 0.0
    %916 = vmatprep.subr.mxu0 0.0
    %917 = vmatpush2.msra.mxu0 0.0
    %918 = vmatprep.subr.mxu0 0.0
    %919 = vmatpush2.msra.mxu0 0.0
    %920 = vmatprep.subr.mxu0 0.0
    %921 = vmatpush2.msra.mxu0 0.0
    %922 = vmatprep.subr.mxu0 0.0
    %923 = vmatpush2.msra.mxu0 0.0
    %924 = vmatprep.subr.mxu0 0.0
    %925 = vmatpush2.msra.mxu0 0.0
    %926 = vmatprep.subr.mxu0 0.0
    %927 = vmatpush2.msra.mxu0 0.0
    %928 = vmatprep.subr.mxu0 0.0
    %929 = vmatpush2.msra.mxu0 0.0
    %930 = vmatprep.subr.mxu0 0.0
    %931 = vmatpush2.msra.mxu0 0.0
    %932 = vmatprep.subr.mxu0 0.0
    %933 = vmatpush2.msra.mxu0 0.0
    %934 = vmatprep.subr.mxu0 0.0
    %935 = vmatpush2.msra.mxu0 0.0
    %936 = vmatprep.mubr.f32.mxu0 0.0
    %937 = vmatmul.mubr.f32.gmra.mxu0 %v847
    %v938 = vpop.f32.mrf.mxu0
    %v939 = vadd.f32 0.0, %v938
    %v940 = vpop.f32.mrf.mxu0
    %941 = vmatprep.mubr.f32.mxu0 0.0
    %942 = vmatmul.mubr.f32.gmra.mxu0 %v848
    %v943 = vpop.f32.mrf.mxu0
    %v944 = vadd.f32 0.0, %v943
    %v945 = vpop.f32.mrf.mxu0
    %946 = vmatprep.mubr.f32.mxu0 0.0
    %947 = vmatmul.mubr.f32.gmra.mxu0 %v849
    %v948 = vpop.f32.mrf.mxu0
    %v949 = vadd.f32 0.0, %v948
    %v950 = vpop.f32.mrf.mxu0
    %951 = vmatprep.mubr.f32.mxu0 0.0
    %952 = vmatmul.mubr.f32.gmra.mxu0 %v850
    %v953 = vpop.f32.mrf.mxu0
    %v954 = vadd.f32 0.0, %v953
    %v955 = vpop.f32.mrf.mxu0
    %956 = vmatprep.mubr.f32.mxu0 0.0
    %957 = vmatmul.mubr.f32.gmra.mxu0 %v851
    %v958 = vpop.f32.mrf.mxu0
    %v959 = vadd.f32 0.0, %v958
    %v960 = vpop.f32.mrf.mxu0
    %961 = vmatprep.mubr.f32.mxu0 0.0
    %962 = vmatmul.mubr.f32.gmra.mxu0 %v852
    %v963 = vpop.f32.mrf.mxu0
    %v964 = vadd.f32 0.0, %v963
    %v965 = vpop.f32.mrf.mxu0
    %966 = vmatprep.mubr.f32.mxu0 0.0
    %967 = vmatmul.mubr.f32.gmra.mxu0 %v853
    %v968 = vpop.f32.mrf.mxu0
    %v969 = vadd.f32 0.0, %v968
    %v970 = vpop.f32.mrf.mxu0
    %971 = vmatprep.mubr.f32.mxu0 0.0
    %972 = vmatmul.mubr.f32.gmra.mxu0 %v854
    %v973 = vpop.f32.mrf.mxu0
    %v974 = vadd.f32 0.0, %v973
    %v975 = vpop.f32.mrf.mxu0
    %976 = vdwg.mxu0
    %v977 = vadd.f32 %v839, %v939
    %v978 = vadd.f32 %v840, %v944
    %v979 = vadd.f32 %v841, %v949
    %v980 = vadd.f32 %v842, %v954
    %v981 = vadd.f32 %v843, %v959
    %v982 = vadd.f32 %v844, %v964
    %v983 = vadd.f32 %v845, %v969
    %v984 = vadd.f32 %v846, %v974
    %v985 = vld [vmem:[%s2] sm:$0x1]
    %v986 = vlaneseq
    %v987 = vshrl.u32 %v986, 7
    %v988 = vsub.s32 0, %v987
    %v989 = vrot.slane %v985, %v988
    %v990 = vadd.f32 %v977, %v989
    %v991 = vadd.f32 %v978, %v989
    %v992 = vadd.f32 %v979, %v989
    %v993 = vadd.f32 %v980, %v989
    %v994 = vadd.f32 %v981, %v989
    %v995 = vadd.f32 %v982, %v989
    %v996 = vadd.f32 %v983, %v989
    %v997 = vadd.f32 %v984, %v989
    %v998 = vmax.f32 %v990, 0.0
    %v999 = vmax.f32 %v991, 0.0
    %v1000 = vmax.f32 %v992, 0.0
    %v1001 = vmax.f32 %v993, 0.0
    %v1002 = vmax.f32 %v994, 0.0
    %v1003 = vmax.f32 %v995, 0.0
    %v1004 = vmax.f32 %v996, 0.0
    %v1005 = vmax.f32 %v997, 0.0
    %v1006 = vlaneseq
    %v1007 = vshrl.u32 %v1006, 7
    %v1008 = vadd.s32 %v1007, 8
    %v1009 = vadd.s32 %v1007, 16
    %v1010 = vadd.s32 %v1007, 24
    %v1011 = vlaneseq
    %v1012 = vand.u32 %v1011, 127
    %v1013 = vmul.u32 %v1007, 2
    %v1014 = vmul.u32 %v1008, 2
    %v1015 = vmul.u32 %v1009, 2
    %v1016 = vmul.u32 %v1010, 2
    %vm1017 = vcmp.eq.s32.totalorder %v1012, %v1013
    %vm1018 = vcmp.eq.s32.totalorder %v1012, %v1014
    %vm1019 = vcmp.eq.s32.totalorder %v1012, %v1015
    %vm1020 = vcmp.eq.s32.totalorder %v1012, %v1016
    %v1021 = vsel %vm1017, 1.0, 0.0
    %v1022 = vsel %vm1018, 1.0, 0.0
    %v1023 = vsel %vm1019, 1.0, 0.0
    %v1024 = vsel %vm1020, 1.0, 0.0
    %v1025 = vadd.s32 %v1013, 1
    %v1026 = vadd.s32 %v1014, 1
    %v1027 = vadd.s32 %v1015, 1
    %v1028 = vadd.s32 %v1016, 1
    %vm1029 = vcmp.eq.s32.totalorder %v1012, %v1025
    %vm1030 = vcmp.eq.s32.totalorder %v1012, %v1026
    %vm1031 = vcmp.eq.s32.totalorder %v1012, %v1027
    %vm1032 = vcmp.eq.s32.totalorder %v1012, %v1028
    %v1033 = vsel %vm1029, 1.0, 0.0
    %v1034 = vsel %vm1030, 1.0, 0.0
    %v1035 = vsel %vm1031, 1.0, 0.0
    %v1036 = vsel %vm1032, 1.0, 0.0
    %vm1037 = vcmask 523264
    %v1039 = vsel %vm1037, %v1021, 0
    %v1042 = vsel %vm1037, %v1022, 0
    %v1045 = vsel %vm1037, %v1023, 0
    %v1048 = vsel %vm1037, %v1024, 0
    %1050 = vmatprep.subr.mxu0 0.0
    %1051 = vmatpush1.msra.mxu0 0.0
    %1052 = vmatprep.subr.mxu0 0.0
    %1053 = vmatpush1.msra.mxu0 0.0
    %1054 = vmatprep.subr.mxu0 0.0
    %1055 = vmatpush1.msra.mxu0 0.0
    %1056 = vmatprep.subr.mxu0 0.0
    %1057 = vmatpush1.msra.mxu0 0.0
    %1058 = vmatprep.subr.mxu0 0.0
    %1059 = vmatpush1.msra.mxu0 0.0
    %1060 = vmatprep.subr.mxu0 0.0
    %1061 = vmatpush1.msra.mxu0 0.0
    %1062 = vmatprep.subr.mxu0 0.0
    %1063 = vmatpush1.msra.mxu0 0.0
    %1064 = vmatprep.subr.mxu0 0.0
    %1065 = vmatpush1.msra.mxu0 0.0
    %1066 = vmatprep.subr.mxu0 0.0
    %1067 = vmatpush1.msra.mxu0 %v1005
    %1068 = vmatprep.subr.mxu0 0.0
    %1069 = vmatpush1.msra.mxu0 %v1004
    %1070 = vmatprep.subr.mxu0 0.0
    %1071 = vmatpush1.msra.mxu0 %v1003
    %1072 = vmatprep.subr.mxu0 0.0
    %1073 = vmatpush1.msra.mxu0 %v1002
    %1074 = vmatprep.subr.mxu0 0.0
    %1075 = vmatpush1.msra.mxu0 %v1001
    %1076 = vmatprep.subr.mxu0 0.0
    %1077 = vmatpush1.msra.mxu0 %v1000
    %1078 = vmatprep.subr.mxu0 0.0
    %1079 = vmatpush1.msra.mxu0 %v999
    %1080 = vmatprep.subr.mxu0 0.0
    %1081 = vmatpush1.msra.mxu0 %v998
    %1082 = vmatprep.subr.mxu0 0.0
    %1083 = vmatpush2.msra.mxu0 0.0
    %1084 = vmatprep.subr.mxu0 0.0
    %1085 = vmatpush2.msra.mxu0 0.0
    %1086 = vmatprep.subr.mxu0 0.0
    %1087 = vmatpush2.msra.mxu0 0.0
    %1088 = vmatprep.subr.mxu0 0.0
    %1089 = vmatpush2.msra.mxu0 0.0
    %1090 = vmatprep.subr.mxu0 0.0
    %1091 = vmatpush2.msra.mxu0 0.0
    %1092 = vmatprep.subr.mxu0 0.0
    %1093 = vmatpush2.msra.mxu0 0.0
    %1094 = vmatprep.subr.mxu0 0.0
    %1095 = vmatpush2.msra.mxu0 0.0
    %1096 = vmatprep.subr.mxu0 0.0
    %1097 = vmatpush2.msra.mxu0 0.0
    %1098 = vmatprep.subr.mxu0 0.0
    %1099 = vmatpush2.msra.mxu0 0.0
    %1100 = vmatprep.subr.mxu0 0.0
    %1101 = vmatpush2.msra.mxu0 0.0
    %1102 = vmatprep.subr.mxu0 0.0
    %1103 = vmatpush2.msra.mxu0 0.0
    %1104 = vmatprep.subr.mxu0 0.0
    %1105 = vmatpush2.msra.mxu0 0.0
    %1106 = vmatprep.subr.mxu0 0.0
    %1107 = vmatpush2.msra.mxu0 0.0
    %1108 = vmatprep.subr.mxu0 0.0
    %1109 = vmatpush2.msra.mxu0 0.0
    %1110 = vmatprep.subr.mxu0 0.0
    %1111 = vmatpush2.msra.mxu0 0.0
    %1112 = vmatprep.subr.mxu0 0.0
    %1113 = vmatpush2.msra.mxu0 0.0
    %1114 = vmatprep.mubr.f32.mxu0 0.0
    %1115 = vmatmul.mubr.f32.gmra.mxu0 %v1039
    %v1116 = vpop.f32.mrf.mxu0
    %v1117 = vadd.f32 0.0, %v1116
    %v1118 = vpop.f32.mrf.mxu0
    %1119 = vmatprep.mubr.f32.mxu0 0.0
    %1120 = vmatmul.mubr.f32.gmra.mxu0 %v1042
    %v1121 = vpop.f32.mrf.mxu0
    %v1122 = vadd.f32 0.0, %v1121
    %v1123 = vpop.f32.mrf.mxu0
    %1124 = vmatprep.mubr.f32.mxu0 0.0
    %1125 = vmatmul.mubr.f32.gmra.mxu0 %v1045
    %v1126 = vpop.f32.mrf.mxu0
    %v1127 = vadd.f32 0.0, %v1126
    %v1128 = vpop.f32.mrf.mxu0
    %1129 = vmatprep.mubr.f32.mxu0 0.0
    %1130 = vmatmul.mubr.f32.gmra.mxu0 %v1048
    %v1131 = vpop.f32.mrf.mxu0
    %v1132 = vadd.f32 0.0, %v1131
    %v1133 = vpop.f32.mrf.mxu0
    %1134 = vdwg.mxu0
    %v1136 = vsel %vm1037, %v1033, 0
    %v1139 = vsel %vm1037, %v1034, 0
    %v1142 = vsel %vm1037, %v1035, 0
    %v1145 = vsel %vm1037, %v1036, 0
    %1147 = vmatprep.subr.mxu0 0.0
    %1148 = vmatpush1.msra.mxu0 0.0
    %1149 = vmatprep.subr.mxu0 0.0
    %1150 = vmatpush1.msra.mxu0 0.0
    %1151 = vmatprep.subr.mxu0 0.0
    %1152 = vmatpush1.msra.mxu0 0.0
    %1153 = vmatprep.subr.mxu0 0.0
    %1154 = vmatpush1.msra.mxu0 0.0
    %1155 = vmatprep.subr.mxu0 0.0
    %1156 = vmatpush1.msra.mxu0 0.0
    %1157 = vmatprep.subr.mxu0 0.0
    %1158 = vmatpush1.msra.mxu0 0.0
    %1159 = vmatprep.subr.mxu0 0.0
    %1160 = vmatpush1.msra.mxu0 0.0
    %1161 = vmatprep.subr.mxu0 0.0
    %1162 = vmatpush1.msra.mxu0 0.0
    %1163 = vmatprep.subr.mxu0 0.0
    %1164 = vmatpush1.msra.mxu0 %v1005
    %1165 = vmatprep.subr.mxu0 0.0
    %1166 = vmatpush1.msra.mxu0 %v1004
    %1167 = vmatprep.subr.mxu0 0.0
    %1168 = vmatpush1.msra.mxu0 %v1003
    %1169 = vmatprep.subr.mxu0 0.0
    %1170 = vmatpush1.msra.mxu0 %v1002
    %1171 = vmatprep.subr.mxu0 0.0
    %1172 = vmatpush1.msra.mxu0 %v1001
    %1173 = vmatprep.subr.mxu0 0.0
    %1174 = vmatpush1.msra.mxu0 %v1000
    %1175 = vmatprep.subr.mxu0 0.0
    %1176 = vmatpush1.msra.mxu0 %v999
    %1177 = vmatprep.subr.mxu0 0.0
    %1178 = vmatpush1.msra.mxu0 %v998
    %1179 = vmatprep.subr.mxu0 0.0
    %1180 = vmatpush2.msra.mxu0 0.0
    %1181 = vmatprep.subr.mxu0 0.0
    %1182 = vmatpush2.msra.mxu0 0.0
    %1183 = vmatprep.subr.mxu0 0.0
    %1184 = vmatpush2.msra.mxu0 0.0
    %1185 = vmatprep.subr.mxu0 0.0
    %1186 = vmatpush2.msra.mxu0 0.0
    %1187 = vmatprep.subr.mxu0 0.0
    %1188 = vmatpush2.msra.mxu0 0.0
    %1189 = vmatprep.subr.mxu0 0.0
    %1190 = vmatpush2.msra.mxu0 0.0
    %1191 = vmatprep.subr.mxu0 0.0
    %1192 = vmatpush2.msra.mxu0 0.0
    %1193 = vmatprep.subr.mxu0 0.0
    %1194 = vmatpush2.msra.mxu0 0.0
    %1195 = vmatprep.subr.mxu0 0.0
    %1196 = vmatpush2.msra.mxu0 0.0
    %1197 = vmatprep.subr.mxu0 0.0
    %1198 = vmatpush2.msra.mxu0 0.0
    %1199 = vmatprep.subr.mxu0 0.0
    %1200 = vmatpush2.msra.mxu0 0.0
    %1201 = vmatprep.subr.mxu0 0.0
    %1202 = vmatpush2.msra.mxu0 0.0
    %1203 = vmatprep.subr.mxu0 0.0
    %1204 = vmatpush2.msra.mxu0 0.0
    %1205 = vmatprep.subr.mxu0 0.0
    %1206 = vmatpush2.msra.mxu0 0.0
    %1207 = vmatprep.subr.mxu0 0.0
    %1208 = vmatpush2.msra.mxu0 0.0
    %1209 = vmatprep.subr.mxu0 0.0
    %1210 = vmatpush2.msra.mxu0 0.0
    %1211 = vmatprep.mubr.f32.mxu0 0.0
    %1212 = vmatmul.mubr.f32.gmra.mxu0 %v1136
    %v1213 = vpop.f32.mrf.mxu0
    %v1214 = vadd.f32 0.0, %v1213
    %v1215 = vpop.f32.mrf.mxu0
    %1216 = vmatprep.mubr.f32.mxu0 0.0
    %1217 = vmatmul.mubr.f32.gmra.mxu0 %v1139
    %v1218 = vpop.f32.mrf.mxu0
    %v1219 = vadd.f32 0.0, %v1218
    %v1220 = vpop.f32.mrf.mxu0
    %1221 = vmatprep.mubr.f32.mxu0 0.0
    %1222 = vmatmul.mubr.f32.gmra.mxu0 %v1142
    %v1223 = vpop.f32.mrf.mxu0
    %v1224 = vadd.f32 0.0, %v1223
    %v1225 = vpop.f32.mrf.mxu0
    %1226 = vmatprep.mubr.f32.mxu0 0.0
    %1227 = vmatmul.mubr.f32.gmra.mxu0 %v1145
    %v1228 = vpop.f32.mrf.mxu0
    %v1229 = vadd.f32 0.0, %v1228
    %v1230 = vpop.f32.mrf.mxu0
    %1231 = vdwg.mxu0
    %v1232 = vmax.f32 %v1117, %v1214
    %v1233 = vmax.f32 %v1122, %v1219
    %v1234 = vmax.f32 %v1127, %v1224
    %v1235 = vmax.f32 %v1132, %v1229
    %1236 = vst [vmem:[#allocation2] sm:$0x1] 0.0
    %1237 = vst [vmem:[#allocation2 + $0x28] sm:$0x1] 0.0
    %1238 = vst [vmem:[#allocation2 + $0x11] sm:$0x1] 0.0
    %1239 = vst [vmem:[#allocation2 + $0x39] sm:$0x1] 0.0
    %1240 = vst [vmem:[#allocation2 + $0x1] sm:$0xff] %v1232
    %1241 = vst [vmem:[#allocation2 + $0x9] sm:$0xff] %v1233
    %1242 = vst [vmem:[%s31 + $0x1] sm:$0xff] %v1234
    %1243 = vst [vmem:[%s31 + $0x9] sm:$0xff] %v1235
    %v1244 = vld [vmem:[#allocation2] sm:$0xff]
    %v1245 = vld [vmem:[#allocation2 + $0x8] sm:$0xff]
    %v1246 = vld [vmem:[#allocation2 + $0x28] sm:$0xff]
    %v1247 = vld [vmem:[#allocation2 + $0x30] sm:$0xff]
    %s1248 = scalar_lea.vmem %s1, 896
    %v1249 = vld [vmem:[%s1248] sm:$0xff]
    %v1250 = vld [vmem:[%s1248 + $0x8] sm:$0xff]
    %v1251 = vld [vmem:[%s1248 + $0x10] sm:$0xff]
    %v1252 = vld [vmem:[%s1248 + $0x18] sm:$0xff]
    %v1253 = vld [vmem:[%s1248 + $0x20] sm:$0xff]
    %v1254 = vld [vmem:[%s1248 + $0x28] sm:$0xff]
    %v1255 = vld [vmem:[%s1248 + $0x30] sm:$0xff]
    %v1256 = vld [vmem:[%s1248 + $0x38] sm:$0xff]
    %v1257 = vld [vmem:[%s1248 + $0x40] sm:$0xff]
    %v1258 = vld [vmem:[%s1248 + $0x48] sm:$0xff]
    %v1259 = vld [vmem:[%s1248 + $0x50] sm:$0xff]
    %v1260 = vld [vmem:[%s1248 + $0x58] sm:$0xff]
    %v1261 = vld [vmem:[%s1248 + $0x60] sm:$0xff]
    %v1262 = vld [vmem:[%s1248 + $0x68] sm:$0xff]
    %v1263 = vld [vmem:[%s1248 + $0x70] sm:$0xff]
    %v1264 = vld [vmem:[%s1248 + $0x78] sm:$0xff]
    %v1265 = vld [vmem:[#allocation2 + $0x1] sm:$0xff]
    %v1266 = vld [vmem:[#allocation2 + $0x9] sm:$0xff]
    %v1267 = vld [vmem:[#allocation2 + $0x29] sm:$0xff]
    %v1268 = vld [vmem:[#allocation2 + $0x31] sm:$0xff]
    %s1269 = scalar_lea.vmem %s1, 1024
    %v1270 = vld [vmem:[%s1269] sm:$0xff]
    %v1271 = vld [vmem:[%s1269 + $0x8] sm:$0xff]
    %v1272 = vld [vmem:[%s1269 + $0x10] sm:$0xff]
    %v1273 = vld [vmem:[%s1269 + $0x18] sm:$0xff]
    %v1274 = vld [vmem:[%s1269 + $0x20] sm:$0xff]
    %v1275 = vld [vmem:[%s1269 + $0x28] sm:$0xff]
    %v1276 = vld [vmem:[%s1269 + $0x30] sm:$0xff]
    %v1277 = vld [vmem:[%s1269 + $0x38] sm:$0xff]
    %v1278 = vld [vmem:[%s1269 + $0x40] sm:$0xff]
    %v1279 = vld [vmem:[%s1269 + $0x48] sm:$0xff]
    %v1280 = vld [vmem:[%s1269 + $0x50] sm:$0xff]
    %v1281 = vld [vmem:[%s1269 + $0x58] sm:$0xff]
    %v1282 = vld [vmem:[%s1269 + $0x60] sm:$0xff]
    %v1283 = vld [vmem:[%s1269 + $0x68] sm:$0xff]
    %v1284 = vld [vmem:[%s1269 + $0x70] sm:$0xff]
    %v1285 = vld [vmem:[%s1269 + $0x78] sm:$0xff]
    %1286 = vmatprep.subr.mxu0 0.0
    %1287 = vmatpush1.msra.mxu0 %v1285
    %1288 = vmatprep.subr.mxu0 0.0
    %1289 = vmatpush1.msra.mxu0 %v1284
    %1290 = vmatprep.subr.mxu0 0.0
    %1291 = vmatpush1.msra.mxu0 %v1283
    %1292 = vmatprep.subr.mxu0 0.0
    %1293 = vmatpush1.msra.mxu0 %v1282
    %1294 = vmatprep.subr.mxu0 0.0
    %1295 = vmatpush1.msra.mxu0 %v1281
    %1296 = vmatprep.subr.mxu0 0.0
    %1297 = vmatpush1.msra.mxu0 %v1280
    %1298 = vmatprep.subr.mxu0 0.0
    %1299 = vmatpush1.msra.mxu0 %v1279
    %1300 = vmatprep.subr.mxu0 0.0
    %1301 = vmatpush1.msra.mxu0 %v1278
    %1302 = vmatprep.subr.mxu0 0.0
    %1303 = vmatpush1.msra.mxu0 %v1277
    %1304 = vmatprep.subr.mxu0 0.0
    %1305 = vmatpush1.msra.mxu0 %v1276
    %1306 = vmatprep.subr.mxu0 0.0
    %1307 = vmatpush1.msra.mxu0 %v1275
    %1308 = vmatprep.subr.mxu0 0.0
    %1309 = vmatpush1.msra.mxu0 %v1274
    %1310 = vmatprep.subr.mxu0 0.0
    %1311 = vmatpush1.msra.mxu0 %v1273
    %1312 = vmatprep.subr.mxu0 0.0
    %1313 = vmatpush1.msra.mxu0 %v1272
    %1314 = vmatprep.subr.mxu0 0.0
    %1315 = vmatpush1.msra.mxu0 %v1271
    %1316 = vmatprep.subr.mxu0 0.0
    %1317 = vmatpush1.msra.mxu0 %v1270
    %1318 = vmatprep.subr.mxu0 0.0
    %1319 = vmatpush2.msra.mxu0 0.0
    %1320 = vmatprep.subr.mxu0 0.0
    %1321 = vmatpush2.msra.mxu0 0.0
    %1322 = vmatprep.subr.mxu0 0.0
    %1323 = vmatpush2.msra.mxu0 0.0
    %1324 = vmatprep.subr.mxu0 0.0
    %1325 = vmatpush2.msra.mxu0 0.0
    %1326 = vmatprep.subr.mxu0 0.0
    %1327 = vmatpush2.msra.mxu0 0.0
    %1328 = vmatprep.subr.mxu0 0.0
    %1329 = vmatpush2.msra.mxu0 0.0
    %1330 = vmatprep.subr.mxu0 0.0
    %1331 = vmatpush2.msra.mxu0 0.0
    %1332 = vmatprep.subr.mxu0 0.0
    %1333 = vmatpush2.msra.mxu0 0.0
    %1334 = vmatprep.subr.mxu0 0.0
    %1335 = vmatpush2.msra.mxu0 0.0
    %1336 = vmatprep.subr.mxu0 0.0
    %1337 = vmatpush2.msra.mxu0 0.0
    %1338 = vmatprep.subr.mxu0 0.0
    %1339 = vmatpush2.msra.mxu0 0.0
    %1340 = vmatprep.subr.mxu0 0.0
    %1341 = vmatpush2.msra.mxu0 0.0
    %1342 = vmatprep.subr.mxu0 0.0
    %1343 = vmatpush2.msra.mxu0 0.0
    %1344 = vmatprep.subr.mxu0 0.0
    %1345 = vmatpush2.msra.mxu0 0.0
    %1346 = vmatprep.subr.mxu0 0.0
    %1347 = vmatpush2.msra.mxu0 0.0
    %1348 = vmatprep.subr.mxu0 0.0
    %1349 = vmatpush2.msra.mxu0 0.0
    %1350 = vmatprep.mubr.f32.mxu0 0.0
    %1351 = vmatmul.mubr.f32.gmra.mxu0 %v1265
    %v1352 = vpop.f32.mrf.mxu0
    %v1353 = vadd.f32 0.0, %v1352
    %v1354 = vpop.f32.mrf.mxu0
    %1355 = vmatprep.mubr.f32.mxu0 0.0
    %1356 = vmatmul.mubr.f32.gmra.mxu0 %v1266
    %v1357 = vpop.f32.mrf.mxu0
    %v1358 = vadd.f32 0.0, %v1357
    %v1359 = vpop.f32.mrf.mxu0
    %1360 = vmatprep.mubr.f32.mxu0 0.0
    %1361 = vmatmul.mubr.f32.gmra.mxu0 %v1267
    %v1362 = vpop.f32.mrf.mxu0
    %v1363 = vadd.f32 0.0, %v1362
    %v1364 = vpop.f32.mrf.mxu0
    %1365 = vmatprep.mubr.f32.mxu0 0.0
    %1366 = vmatmul.mubr.f32.gmra.mxu0 %v1268
    %v1367 = vpop.f32.mrf.mxu0
    %v1368 = vadd.f32 0.0, %v1367
    %v1369 = vpop.f32.mrf.mxu0
    %1370 = vdwg.mxu0
    %1371 = vmatprep.subr.mxu0 0.0
    %1372 = vmatpush1.msra.mxu0 %v1264
    %1373 = vmatprep.subr.mxu0 0.0
    %1374 = vmatpush1.msra.mxu0 %v1263
    %1375 = vmatprep.subr.mxu0 0.0
    %1376 = vmatpush1.msra.mxu0 %v1262
    %1377 = vmatprep.subr.mxu0 0.0
    %1378 = vmatpush1.msra.mxu0 %v1261
    %1379 = vmatprep.subr.mxu0 0.0
    %1380 = vmatpush1.msra.mxu0 %v1260
    %1381 = vmatprep.subr.mxu0 0.0
    %1382 = vmatpush1.msra.mxu0 %v1259
    %1383 = vmatprep.subr.mxu0 0.0
    %1384 = vmatpush1.msra.mxu0 %v1258
    %1385 = vmatprep.subr.mxu0 0.0
    %1386 = vmatpush1.msra.mxu0 %v1257
    %1387 = vmatprep.subr.mxu0 0.0
    %1388 = vmatpush1.msra.mxu0 %v1256
    %1389 = vmatprep.subr.mxu0 0.0
    %1390 = vmatpush1.msra.mxu0 %v1255
    %1391 = vmatprep.subr.mxu0 0.0
    %1392 = vmatpush1.msra.mxu0 %v1254
    %1393 = vmatprep.subr.mxu0 0.0
    %1394 = vmatpush1.msra.mxu0 %v1253
    %1395 = vmatprep.subr.mxu0 0.0
    %1396 = vmatpush1.msra.mxu0 %v1252
    %1397 = vmatprep.subr.mxu0 0.0
    %1398 = vmatpush1.msra.mxu0 %v1251
    %1399 = vmatprep.subr.mxu0 0.0
    %1400 = vmatpush1.msra.mxu0 %v1250
    %1401 = vmatprep.subr.mxu0 0.0
    %1402 = vmatpush1.msra.mxu0 %v1249
    %1403 = vmatprep.subr.mxu0 0.0
    %1404 = vmatpush2.msra.mxu0 0.0
    %1405 = vmatprep.subr.mxu0 0.0
    %1406 = vmatpush2.msra.mxu0 0.0
    %1407 = vmatprep.subr.mxu0 0.0
    %1408 = vmatpush2.msra.mxu0 0.0
    %1409 = vmatprep.subr.mxu0 0.0
    %1410 = vmatpush2.msra.mxu0 0.0
    %1411 = vmatprep.subr.mxu0 0.0
    %1412 = vmatpush2.msra.mxu0 0.0
    %1413 = vmatprep.subr.mxu0 0.0
    %1414 = vmatpush2.msra.mxu0 0.0
    %1415 = vmatprep.subr.mxu0 0.0
    %1416 = vmatpush2.msra.mxu0 0.0
    %1417 = vmatprep.subr.mxu0 0.0
    %1418 = vmatpush2.msra.mxu0 0.0
    %1419 = vmatprep.subr.mxu0 0.0
    %1420 = vmatpush2.msra.mxu0 0.0
    %1421 = vmatprep.subr.mxu0 0.0
    %1422 = vmatpush2.msra.mxu0 0.0
    %1423 = vmatprep.subr.mxu0 0.0
    %1424 = vmatpush2.msra.mxu0 0.0
    %1425 = vmatprep.subr.mxu0 0.0
    %1426 = vmatpush2.msra.mxu0 0.0
    %1427 = vmatprep.subr.mxu0 0.0
    %1428 = vmatpush2.msra.mxu0 0.0
    %1429 = vmatprep.subr.mxu0 0.0
    %1430 = vmatpush2.msra.mxu0 0.0
    %1431 = vmatprep.subr.mxu0 0.0
    %1432 = vmatpush2.msra.mxu0 0.0
    %1433 = vmatprep.subr.mxu0 0.0
    %1434 = vmatpush2.msra.mxu0 0.0
    %1435 = vmatprep.mubr.f32.mxu0 0.0
    %1436 = vmatmul.mubr.f32.gmra.mxu0 %v1244
    %v1437 = vpop.f32.mrf.mxu0
    %v1438 = vadd.f32 %v1353, %v1437
    %v1439 = vpop.f32.mrf.mxu0
    %1440 = vmatprep.mubr.f32.mxu0 0.0
    %1441 = vmatmul.mubr.f32.gmra.mxu0 %v1245
    %v1442 = vpop.f32.mrf.mxu0
    %v1443 = vadd.f32 %v1358, %v1442
    %v1444 = vpop.f32.mrf.mxu0
    %1445 = vmatprep.mubr.f32.mxu0 0.0
    %1446 = vmatmul.mubr.f32.gmra.mxu0 %v1246
    %v1447 = vpop.f32.mrf.mxu0
    %v1448 = vadd.f32 %v1363, %v1447
    %v1449 = vpop.f32.mrf.mxu0
    %1450 = vmatprep.mubr.f32.mxu0 0.0
    %1451 = vmatmul.mubr.f32.gmra.mxu0 %v1247
    %v1452 = vpop.f32.mrf.mxu0
    %v1453 = vadd.f32 %v1368, %v1452
    %v1454 = vpop.f32.mrf.mxu0
    %1455 = vdwg.mxu0
    %v1456 = vld [vmem:[#allocation2 + $0x2] sm:$0xff]
    %v1457 = vld [vmem:[#allocation2 + $0xa] sm:$0xff]
    %v1458 = vld [vmem:[#allocation2 + $0x2a] sm:$0xff]
    %v1459 = vld [vmem:[#allocation2 + $0x32] sm:$0xff]
    %s1460 = scalar_lea.vmem %s1, 1152
    %v1461 = vld [vmem:[%s1460] sm:$0xff]
    %v1462 = vld [vmem:[%s1460 + $0x8] sm:$0xff]
    %v1463 = vld [vmem:[%s1460 + $0x10] sm:$0xff]
    %v1464 = vld [vmem:[%s1460 + $0x18] sm:$0xff]
    %v1465 = vld [vmem:[%s1460 + $0x20] sm:$0xff]
    %v1466 = vld [vmem:[%s1460 + $0x28] sm:$0xff]
    %v1467 = vld [vmem:[%s1460 + $0x30] sm:$0xff]
    %v1468 = vld [vmem:[%s1460 + $0x38] sm:$0xff]
    %v1469 = vld [vmem:[%s1460 + $0x40] sm:$0xff]
    %v1470 = vld [vmem:[%s1460 + $0x48] sm:$0xff]
    %v1471 = vld [vmem:[%s1460 + $0x50] sm:$0xff]
    %v1472 = vld [vmem:[%s1460 + $0x58] sm:$0xff]
    %v1473 = vld [vmem:[%s1460 + $0x60] sm:$0xff]
    %v1474 = vld [vmem:[%s1460 + $0x68] sm:$0xff]
    %v1475 = vld [vmem:[%s1460 + $0x70] sm:$0xff]
    %v1476 = vld [vmem:[%s1460 + $0x78] sm:$0xff]
    %1477 = vmatprep.subr.mxu0 0.0
    %1478 = vmatpush1.msra.mxu0 %v1476
    %1479 = vmatprep.subr.mxu0 0.0
    %1480 = vmatpush1.msra.mxu0 %v1475
    %1481 = vmatprep.subr.mxu0 0.0
    %1482 = vmatpush1.msra.mxu0 %v1474
    %1483 = vmatprep.subr.mxu0 0.0
    %1484 = vmatpush1.msra.mxu0 %v1473
    %1485 = vmatprep.subr.mxu0 0.0
    %1486 = vmatpush1.msra.mxu0 %v1472
    %1487 = vmatprep.subr.mxu0 0.0
    %1488 = vmatpush1.msra.mxu0 %v1471
    %1489 = vmatprep.subr.mxu0 0.0
    %1490 = vmatpush1.msra.mxu0 %v1470
    %1491 = vmatprep.subr.mxu0 0.0
    %1492 = vmatpush1.msra.mxu0 %v1469
    %1493 = vmatprep.subr.mxu0 0.0
    %1494 = vmatpush1.msra.mxu0 %v1468
    %1495 = vmatprep.subr.mxu0 0.0
    %1496 = vmatpush1.msra.mxu0 %v1467
    %1497 = vmatprep.subr.mxu0 0.0
    %1498 = vmatpush1.msra.mxu0 %v1466
    %1499 = vmatprep.subr.mxu0 0.0
    %1500 = vmatpush1.msra.mxu0 %v1465
    %1501 = vmatprep.subr.mxu0 0.0
    %1502 = vmatpush1.msra.mxu0 %v1464
    %1503 = vmatprep.subr.mxu0 0.0
    %1504 = vmatpush1.msra.mxu0 %v1463
    %1505 = vmatprep.subr.mxu0 0.0
    %1506 = vmatpush1.msra.mxu0 %v1462
    %1507 = vmatprep.subr.mxu0 0.0
    %1508 = vmatpush1.msra.mxu0 %v1461
    %1509 = vmatprep.subr.mxu0 0.0
    %1510 = vmatpush2.msra.mxu0 0.0
    %1511 = vmatprep.subr.mxu0 0.0
    %1512 = vmatpush2.msra.mxu0 0.0
    %1513 = vmatprep.subr.mxu0 0.0
    %1514 = vmatpush2.msra.mxu0 0.0
    %1515 = vmatprep.subr.mxu0 0.0
    %1516 = vmatpush2.msra.mxu0 0.0
    %1517 = vmatprep.subr.mxu0 0.0
    %1518 = vmatpush2.msra.mxu0 0.0
    %1519 = vmatprep.subr.mxu0 0.0
    %1520 = vmatpush2.msra.mxu0 0.0
    %1521 = vmatprep.subr.mxu0 0.0
    %1522 = vmatpush2.msra.mxu0 0.0
    %1523 = vmatprep.subr.mxu0 0.0
    %1524 = vmatpush2.msra.mxu0 0.0
    %1525 = vmatprep.subr.mxu0 0.0
    %1526 = vmatpush2.msra.mxu0 0.0
    %1527 = vmatprep.subr.mxu0 0.0
    %1528 = vmatpush2.msra.mxu0 0.0
    %1529 = vmatprep.subr.mxu0 0.0
    %1530 = vmatpush2.msra.mxu0 0.0
    %1531 = vmatprep.subr.mxu0 0.0
    %1532 = vmatpush2.msra.mxu0 0.0
    %1533 = vmatprep.subr.mxu0 0.0
    %1534 = vmatpush2.msra.mxu0 0.0
    %1535 = vmatprep.subr.mxu0 0.0
    %1536 = vmatpush2.msra.mxu0 0.0
    %1537 = vmatprep.subr.mxu0 0.0
    %1538 = vmatpush2.msra.mxu0 0.0
    %1539 = vmatprep.subr.mxu0 0.0
    %1540 = vmatpush2.msra.mxu0 0.0
    %1541 = vmatprep.mubr.f32.mxu0 0.0
    %1542 = vmatmul.mubr.f32.gmra.mxu0 %v1456
    %v1543 = vpop.f32.mrf.mxu0
    %v1544 = vadd.f32 0.0, %v1543
    %v1545 = vpop.f32.mrf.mxu0
    %1546 = vmatprep.mubr.f32.mxu0 0.0
    %1547 = vmatmul.mubr.f32.gmra.mxu0 %v1457
    %v1548 = vpop.f32.mrf.mxu0
    %v1549 = vadd.f32 0.0, %v1548
    %v1550 = vpop.f32.mrf.mxu0
    %1551 = vmatprep.mubr.f32.mxu0 0.0
    %1552 = vmatmul.mubr.f32.gmra.mxu0 %v1458
    %v1553 = vpop.f32.mrf.mxu0
    %v1554 = vadd.f32 0.0, %v1553
    %v1555 = vpop.f32.mrf.mxu0
    %1556 = vmatprep.mubr.f32.mxu0 0.0
    %1557 = vmatmul.mubr.f32.gmra.mxu0 %v1459
    %v1558 = vpop.f32.mrf.mxu0
    %v1559 = vadd.f32 0.0, %v1558
    %v1560 = vpop.f32.mrf.mxu0
    %1561 = vdwg.mxu0
    %v1562 = vadd.f32 %v1438, %v1544
    %v1563 = vadd.f32 %v1443, %v1549
    %v1564 = vadd.f32 %v1448, %v1554
    %v1565 = vadd.f32 %v1453, %v1559
    %v1566 = vld [vmem:[%s2 + $0x1] sm:$0x1]
    %v1567 = vlaneseq
    %v1568 = vshrl.u32 %v1567, 7
    %v1569 = vsub.s32 0, %v1568
    %v1570 = vrot.slane %v1566, %v1569
    %v1571 = vadd.f32 %v1562, %v1570
    %v1572 = vadd.f32 %v1563, %v1570
    %v1573 = vadd.f32 %v1564, %v1570
    %v1574 = vadd.f32 %v1565, %v1570
    %v1575 = vmax.f32 %v1571, 0.0
    %v1576 = vmax.f32 %v1572, 0.0
    %v1577 = vmax.f32 %v1573, 0.0
    %v1578 = vmax.f32 %v1574, 0.0
    %1579 = vst [vmem:[#allocation2] sm:$0x1] 0.0
    %1580 = vst [vmem:[#allocation2 + $0x28] sm:$0x1] 0.0
    %1581 = vst [vmem:[#allocation2 + $0x11] sm:$0x1] 0.0
    %1582 = vst [vmem:[#allocation2 + $0x39] sm:$0x1] 0.0
    %1583 = vst [vmem:[#allocation2 + $0x1] sm:$0xff] %v1575
    %1584 = vst [vmem:[#allocation2 + $0x9] sm:$0xff] %v1576
    %1585 = vst [vmem:[%s31 + $0x1] sm:$0xff] %v1577
    %1586 = vst [vmem:[%s31 + $0x9] sm:$0xff] %v1578
    %v1587 = vld [vmem:[#allocation2] sm:$0xff]
    %v1588 = vld [vmem:[#allocation2 + $0x8] sm:$0xff]
    %v1589 = vld [vmem:[#allocation2 + $0x28] sm:$0xff]
    %v1590 = vld [vmem:[#allocation2 + $0x30] sm:$0xff]
    %s1591 = scalar_lea.vmem %s1, 1280
    %v1592 = vld [vmem:[%s1591] sm:$0xff]
    %v1593 = vld [vmem:[%s1591 + $0x8] sm:$0xff]
    %v1594 = vld [vmem:[%s1591 + $0x10] sm:$0xff]
    %v1595 = vld [vmem:[%s1591 + $0x18] sm:$0xff]
    %v1596 = vld [vmem:[%s1591 + $0x20] sm:$0xff]
    %v1597 = vld [vmem:[%s1591 + $0x28] sm:$0xff]
    %v1598 = vld [vmem:[%s1591 + $0x30] sm:$0xff]
    %v1599 = vld [vmem:[%s1591 + $0x38] sm:$0xff]
    %v1600 = vld [vmem:[%s1591 + $0x40] sm:$0xff]
    %v1601 = vld [vmem:[%s1591 + $0x48] sm:$0xff]
    %v1602 = vld [vmem:[%s1591 + $0x50] sm:$0xff]
    %v1603 = vld [vmem:[%s1591 + $0x58] sm:$0xff]
    %v1604 = vld [vmem:[%s1591 + $0x60] sm:$0xff]
    %v1605 = vld [vmem:[%s1591 + $0x68] sm:$0xff]
    %v1606 = vld [vmem:[%s1591 + $0x70] sm:$0xff]
    %v1607 = vld [vmem:[%s1591 + $0x78] sm:$0xff]
    %v1608 = vld [vmem:[#allocation2 + $0x1] sm:$0xff]
    %v1609 = vld [vmem:[#allocation2 + $0x9] sm:$0xff]
    %v1610 = vld [vmem:[#allocation2 + $0x29] sm:$0xff]
    %v1611 = vld [vmem:[#allocation2 + $0x31] sm:$0xff]
    %s1612 = scalar_lea.vmem %s1, 1408
    %v1613 = vld [vmem:[%s1612] sm:$0xff]
    %v1614 = vld [vmem:[%s1612 + $0x8] sm:$0xff]
    %v1615 = vld [vmem:[%s1612 + $0x10] sm:$0xff]
    %v1616 = vld [vmem:[%s1612 + $0x18] sm:$0xff]
    %v1617 = vld [vmem:[%s1612 + $0x20] sm:$0xff]
    %v1618 = vld [vmem:[%s1612 + $0x28] sm:$0xff]
    %v1619 = vld [vmem:[%s1612 + $0x30] sm:$0xff]
    %v1620 = vld [vmem:[%s1612 + $0x38] sm:$0xff]
    %v1621 = vld [vmem:[%s1612 + $0x40] sm:$0xff]
    %v1622 = vld [vmem:[%s1612 + $0x48] sm:$0xff]
    %v1623 = vld [vmem:[%s1612 + $0x50] sm:$0xff]
    %v1624 = vld [vmem:[%s1612 + $0x58] sm:$0xff]
    %v1625 = vld [vmem:[%s1612 + $0x60] sm:$0xff]
    %v1626 = vld [vmem:[%s1612 + $0x68] sm:$0xff]
    %v1627 = vld [vmem:[%s1612 + $0x70] sm:$0xff]
    %v1628 = vld [vmem:[%s1612 + $0x78] sm:$0xff]
    %1629 = vmatprep.subr.mxu0 0.0
    %1630 = vmatpush1.msra.mxu0 %v1628
    %1631 = vmatprep.subr.mxu0 0.0
    %1632 = vmatpush1.msra.mxu0 %v1627
    %1633 = vmatprep.subr.mxu0 0.0
    %1634 = vmatpush1.msra.mxu0 %v1626
    %1635 = vmatprep.subr.mxu0 0.0
    %1636 = vmatpush1.msra.mxu0 %v1625
    %1637 = vmatprep.subr.mxu0 0.0
    %1638 = vmatpush1.msra.mxu0 %v1624
    %1639 = vmatprep.subr.mxu0 0.0
    %1640 = vmatpush1.msra.mxu0 %v1623
    %1641 = vmatprep.subr.mxu0 0.0
    %1642 = vmatpush1.msra.mxu0 %v1622
    %1643 = vmatprep.subr.mxu0 0.0
    %1644 = vmatpush1.msra.mxu0 %v1621
    %1645 = vmatprep.subr.mxu0 0.0
    %1646 = vmatpush1.msra.mxu0 %v1620
    %1647 = vmatprep.subr.mxu0 0.0
    %1648 = vmatpush1.msra.mxu0 %v1619
    %1649 = vmatprep.subr.mxu0 0.0
    %1650 = vmatpush1.msra.mxu0 %v1618
    %1651 = vmatprep.subr.mxu0 0.0
    %1652 = vmatpush1.msra.mxu0 %v1617
    %1653 = vmatprep.subr.mxu0 0.0
    %1654 = vmatpush1.msra.mxu0 %v1616
    %1655 = vmatprep.subr.mxu0 0.0
    %1656 = vmatpush1.msra.mxu0 %v1615
    %1657 = vmatprep.subr.mxu0 0.0
    %1658 = vmatpush1.msra.mxu0 %v1614
    %1659 = vmatprep.subr.mxu0 0.0
    %1660 = vmatpush1.msra.mxu0 %v1613
    %1661 = vmatprep.subr.mxu0 0.0
    %1662 = vmatpush2.msra.mxu0 0.0
    %1663 = vmatprep.subr.mxu0 0.0
    %1664 = vmatpush2.msra.mxu0 0.0
    %1665 = vmatprep.subr.mxu0 0.0
    %1666 = vmatpush2.msra.mxu0 0.0
    %1667 = vmatprep.subr.mxu0 0.0
    %1668 = vmatpush2.msra.mxu0 0.0
    %1669 = vmatprep.subr.mxu0 0.0
    %1670 = vmatpush2.msra.mxu0 0.0
    %1671 = vmatprep.subr.mxu0 0.0
    %1672 = vmatpush2.msra.mxu0 0.0
    %1673 = vmatprep.subr.mxu0 0.0
    %1674 = vmatpush2.msra.mxu0 0.0
    %1675 = vmatprep.subr.mxu0 0.0
    %1676 = vmatpush2.msra.mxu0 0.0
    %1677 = vmatprep.subr.mxu0 0.0
    %1678 = vmatpush2.msra.mxu0 0.0
    %1679 = vmatprep.subr.mxu0 0.0
    %1680 = vmatpush2.msra.mxu0 0.0
    %1681 = vmatprep.subr.mxu0 0.0
    %1682 = vmatpush2.msra.mxu0 0.0
    %1683 = vmatprep.subr.mxu0 0.0
    %1684 = vmatpush2.msra.mxu0 0.0
    %1685 = vmatprep.subr.mxu0 0.0
    %1686 = vmatpush2.msra.mxu0 0.0
    %1687 = vmatprep.subr.mxu0 0.0
    %1688 = vmatpush2.msra.mxu0 0.0
    %1689 = vmatprep.subr.mxu0 0.0
    %1690 = vmatpush2.msra.mxu0 0.0
    %1691 = vmatprep.subr.mxu0 0.0
    %1692 = vmatpush2.msra.mxu0 0.0
    %1693 = vmatprep.mubr.f32.mxu0 0.0
    %1694 = vmatmul.mubr.f32.gmra.mxu0 %v1608
    %v1695 = vpop.f32.mrf.mxu0
    %v1696 = vadd.f32 0.0, %v1695
    %v1697 = vpop.f32.mrf.mxu0
    %1698 = vmatprep.mubr.f32.mxu0 0.0
    %1699 = vmatmul.mubr.f32.gmra.mxu0 %v1609
    %v1700 = vpop.f32.mrf.mxu0
    %v1701 = vadd.f32 0.0, %v1700
    %v1702 = vpop.f32.mrf.mxu0
    %1703 = vmatprep.mubr.f32.mxu0 0.0
    %1704 = vmatmul.mubr.f32.gmra.mxu0 %v1610
    %v1705 = vpop.f32.mrf.mxu0
    %v1706 = vadd.f32 0.0, %v1705
    %v1707 = vpop.f32.mrf.mxu0
    %1708 = vmatprep.mubr.f32.mxu0 0.0
    %1709 = vmatmul.mubr.f32.gmra.mxu0 %v1611
    %v1710 = vpop.f32.mrf.mxu0
    %v1711 = vadd.f32 0.0, %v1710
    %v1712 = vpop.f32.mrf.mxu0
    %1713 = vdwg.mxu0
    %1714 = vmatprep.subr.mxu0 0.0
    %1715 = vmatpush1.msra.mxu0 %v1607
    %1716 = vmatprep.subr.mxu0 0.0
    %1717 = vmatpush1.msra.mxu0 %v1606
    %1718 = vmatprep.subr.mxu0 0.0
    %1719 = vmatpush1.msra.mxu0 %v1605
    %1720 = vmatprep.subr.mxu0 0.0
    %1721 = vmatpush1.msra.mxu0 %v1604
    %1722 = vmatprep.subr.mxu0 0.0
    %1723 = vmatpush1.msra.mxu0 %v1603
    %1724 = vmatprep.subr.mxu0 0.0
    %1725 = vmatpush1.msra.mxu0 %v1602
    %1726 = vmatprep.subr.mxu0 0.0
    %1727 = vmatpush1.msra.mxu0 %v1601
    %1728 = vmatprep.subr.mxu0 0.0
    %1729 = vmatpush1.msra.mxu0 %v1600
    %1730 = vmatprep.subr.mxu0 0.0
    %1731 = vmatpush1.msra.mxu0 %v1599
    %1732 = vmatprep.subr.mxu0 0.0
    %1733 = vmatpush1.msra.mxu0 %v1598
    %1734 = vmatprep.subr.mxu0 0.0
    %1735 = vmatpush1.msra.mxu0 %v1597
    %1736 = vmatprep.subr.mxu0 0.0
    %1737 = vmatpush1.msra.mxu0 %v1596
    %1738 = vmatprep.subr.mxu0 0.0
    %1739 = vmatpush1.msra.mxu0 %v1595
    %1740 = vmatprep.subr.mxu0 0.0
    %1741 = vmatpush1.msra.mxu0 %v1594
    %1742 = vmatprep.subr.mxu0 0.0
    %1743 = vmatpush1.msra.mxu0 %v1593
    %1744 = vmatprep.subr.mxu0 0.0
    %1745 = vmatpush1.msra.mxu0 %v1592
    %1746 = vmatprep.subr.mxu0 0.0
    %1747 = vmatpush2.msra.mxu0 0.0
    %1748 = vmatprep.subr.mxu0 0.0
    %1749 = vmatpush2.msra.mxu0 0.0
    %1750 = vmatprep.subr.mxu0 0.0
    %1751 = vmatpush2.msra.mxu0 0.0
    %1752 = vmatprep.subr.mxu0 0.0
    %1753 = vmatpush2.msra.mxu0 0.0
    %1754 = vmatprep.subr.mxu0 0.0
    %1755 = vmatpush2.msra.mxu0 0.0
    %1756 = vmatprep.subr.mxu0 0.0
    %1757 = vmatpush2.msra.mxu0 0.0
    %1758 = vmatprep.subr.mxu0 0.0
    %1759 = vmatpush2.msra.mxu0 0.0
    %1760 = vmatprep.subr.mxu0 0.0
    %1761 = vmatpush2.msra.mxu0 0.0
    %1762 = vmatprep.subr.mxu0 0.0
    %1763 = vmatpush2.msra.mxu0 0.0
    %1764 = vmatprep.subr.mxu0 0.0
    %1765 = vmatpush2.msra.mxu0 0.0
    %1766 = vmatprep.subr.mxu0 0.0
    %1767 = vmatpush2.msra.mxu0 0.0
    %1768 = vmatprep.subr.mxu0 0.0
    %1769 = vmatpush2.msra.mxu0 0.0
    %1770 = vmatprep.subr.mxu0 0.0
    %1771 = vmatpush2.msra.mxu0 0.0
    %1772 = vmatprep.subr.mxu0 0.0
    %1773 = vmatpush2.msra.mxu0 0.0
    %1774 = vmatprep.subr.mxu0 0.0
    %1775 = vmatpush2.msra.mxu0 0.0
    %1776 = vmatprep.subr.mxu0 0.0
    %1777 = vmatpush2.msra.mxu0 0.0
    %1778 = vmatprep.mubr.f32.mxu0 0.0
    %1779 = vmatmul.mubr.f32.gmra.mxu0 %v1587
    %v1780 = vpop.f32.mrf.mxu0
    %v1781 = vadd.f32 %v1696, %v1780
    %v1782 = vpop.f32.mrf.mxu0
    %1783 = vmatprep.mubr.f32.mxu0 0.0
    %1784 = vmatmul.mubr.f32.gmra.mxu0 %v1588
    %v1785 = vpop.f32.mrf.mxu0
    %v1786 = vadd.f32 %v1701, %v1785
    %v1787 = vpop.f32.mrf.mxu0
    %1788 = vmatprep.mubr.f32.mxu0 0.0
    %1789 = vmatmul.mubr.f32.gmra.mxu0 %v1589
    %v1790 = vpop.f32.mrf.mxu0
    %v1791 = vadd.f32 %v1706, %v1790
    %v1792 = vpop.f32.mrf.mxu0
    %1793 = vmatprep.mubr.f32.mxu0 0.0
    %1794 = vmatmul.mubr.f32.gmra.mxu0 %v1590
    %v1795 = vpop.f32.mrf.mxu0
    %v1796 = vadd.f32 %v1711, %v1795
    %v1797 = vpop.f32.mrf.mxu0
    %1798 = vdwg.mxu0
    %v1799 = vld [vmem:[#allocation2 + $0x2] sm:$0xff]
    %v1800 = vld [vmem:[#allocation2 + $0xa] sm:$0xff]
    %v1801 = vld [vmem:[#allocation2 + $0x2a] sm:$0xff]
    %v1802 = vld [vmem:[#allocation2 + $0x32] sm:$0xff]
    %s1803 = scalar_lea.vmem %s1, 1536
    %v1804 = vld [vmem:[%s1803] sm:$0xff]
    %v1805 = vld [vmem:[%s1803 + $0x8] sm:$0xff]
    %v1806 = vld [vmem:[%s1803 + $0x10] sm:$0xff]
    %v1807 = vld [vmem:[%s1803 + $0x18] sm:$0xff]
    %v1808 = vld [vmem:[%s1803 + $0x20] sm:$0xff]
    %v1809 = vld [vmem:[%s1803 + $0x28] sm:$0xff]
    %v1810 = vld [vmem:[%s1803 + $0x30] sm:$0xff]
    %v1811 = vld [vmem:[%s1803 + $0x38] sm:$0xff]
    %v1812 = vld [vmem:[%s1803 + $0x40] sm:$0xff]
    %v1813 = vld [vmem:[%s1803 + $0x48] sm:$0xff]
    %v1814 = vld [vmem:[%s1803 + $0x50] sm:$0xff]
    %v1815 = vld [vmem:[%s1803 + $0x58] sm:$0xff]
    %v1816 = vld [vmem:[%s1803 + $0x60] sm:$0xff]
    %v1817 = vld [vmem:[%s1803 + $0x68] sm:$0xff]
    %v1818 = vld [vmem:[%s1803 + $0x70] sm:$0xff]
    %v1819 = vld [vmem:[%s1803 + $0x78] sm:$0xff]
    %1820 = vmatprep.subr.mxu0 0.0
    %1821 = vmatpush1.msra.mxu0 %v1819
    %1822 = vmatprep.subr.mxu0 0.0
    %1823 = vmatpush1.msra.mxu0 %v1818
    %1824 = vmatprep.subr.mxu0 0.0
    %1825 = vmatpush1.msra.mxu0 %v1817
    %1826 = vmatprep.subr.mxu0 0.0
    %1827 = vmatpush1.msra.mxu0 %v1816
    %1828 = vmatprep.subr.mxu0 0.0
    %1829 = vmatpush1.msra.mxu0 %v1815
    %1830 = vmatprep.subr.mxu0 0.0
    %1831 = vmatpush1.msra.mxu0 %v1814
    %1832 = vmatprep.subr.mxu0 0.0
    %1833 = vmatpush1.msra.mxu0 %v1813
    %1834 = vmatprep.subr.mxu0 0.0
    %1835 = vmatpush1.msra.mxu0 %v1812
    %1836 = vmatprep.subr.mxu0 0.0
    %1837 = vmatpush1.msra.mxu0 %v1811
    %1838 = vmatprep.subr.mxu0 0.0
    %1839 = vmatpush1.msra.mxu0 %v1810
    %1840 = vmatprep.subr.mxu0 0.0
    %1841 = vmatpush1.msra.mxu0 %v1809
    %1842 = vmatprep.subr.mxu0 0.0
    %1843 = vmatpush1.msra.mxu0 %v1808
    %1844 = vmatprep.subr.mxu0 0.0
    %1845 = vmatpush1.msra.mxu0 %v1807
    %1846 = vmatprep.subr.mxu0 0.0
    %1847 = vmatpush1.msra.mxu0 %v1806
    %1848 = vmatprep.subr.mxu0 0.0
    %1849 = vmatpush1.msra.mxu0 %v1805
    %1850 = vmatprep.subr.mxu0 0.0
    %1851 = vmatpush1.msra.mxu0 %v1804
    %1852 = vmatprep.subr.mxu0 0.0
    %1853 = vmatpush2.msra.mxu0 0.0
    %1854 = vmatprep.subr.mxu0 0.0
    %1855 = vmatpush2.msra.mxu0 0.0
    %1856 = vmatprep.subr.mxu0 0.0
    %1857 = vmatpush2.msra.mxu0 0.0
    %1858 = vmatprep.subr.mxu0 0.0
    %1859 = vmatpush2.msra.mxu0 0.0
    %1860 = vmatprep.subr.mxu0 0.0
    %1861 = vmatpush2.msra.mxu0 0.0
    %1862 = vmatprep.subr.mxu0 0.0
    %1863 = vmatpush2.msra.mxu0 0.0
    %1864 = vmatprep.subr.mxu0 0.0
    %1865 = vmatpush2.msra.mxu0 0.0
    %1866 = vmatprep.subr.mxu0 0.0
    %1867 = vmatpush2.msra.mxu0 0.0
    %1868 = vmatprep.subr.mxu0 0.0
    %1869 = vmatpush2.msra.mxu0 0.0
    %1870 = vmatprep.subr.mxu0 0.0
    %1871 = vmatpush2.msra.mxu0 0.0
    %1872 = vmatprep.subr.mxu0 0.0
    %1873 = vmatpush2.msra.mxu0 0.0
    %1874 = vmatprep.subr.mxu0 0.0
    %1875 = vmatpush2.msra.mxu0 0.0
    %1876 = vmatprep.subr.mxu0 0.0
    %1877 = vmatpush2.msra.mxu0 0.0
    %1878 = vmatprep.subr.mxu0 0.0
    %1879 = vmatpush2.msra.mxu0 0.0
    %1880 = vmatprep.subr.mxu0 0.0
    %1881 = vmatpush2.msra.mxu0 0.0
    %1882 = vmatprep.subr.mxu0 0.0
    %1883 = vmatpush2.msra.mxu0 0.0
    %1884 = vmatprep.mubr.f32.mxu0 0.0
    %1885 = vmatmul.mubr.f32.gmra.mxu0 %v1799
    %v1886 = vpop.f32.mrf.mxu0
    %v1887 = vadd.f32 0.0, %v1886
    %v1888 = vpop.f32.mrf.mxu0
    %1889 = vmatprep.mubr.f32.mxu0 0.0
    %1890 = vmatmul.mubr.f32.gmra.mxu0 %v1800
    %v1891 = vpop.f32.mrf.mxu0
    %v1892 = vadd.f32 0.0, %v1891
    %v1893 = vpop.f32.mrf.mxu0
    %1894 = vmatprep.mubr.f32.mxu0 0.0
    %1895 = vmatmul.mubr.f32.gmra.mxu0 %v1801
    %v1896 = vpop.f32.mrf.mxu0
    %v1897 = vadd.f32 0.0, %v1896
    %v1898 = vpop.f32.mrf.mxu0
    %1899 = vmatprep.mubr.f32.mxu0 0.0
    %1900 = vmatmul.mubr.f32.gmra.mxu0 %v1802
    %v1901 = vpop.f32.mrf.mxu0
    %v1902 = vadd.f32 0.0, %v1901
    %v1903 = vpop.f32.mrf.mxu0
    %1904 = vdwg.mxu0
    %v1905 = vadd.f32 %v1781, %v1887
    %v1906 = vadd.f32 %v1786, %v1892
    %v1907 = vadd.f32 %v1791, %v1897
    %v1908 = vadd.f32 %v1796, %v1902
    %v1909 = vld [vmem:[%s2 + $0x2] sm:$0x1]
    %v1910 = vlaneseq
    %v1911 = vshrl.u32 %v1910, 7
    %v1912 = vsub.s32 0, %v1911
    %v1913 = vrot.slane %v1909, %v1912
    %v1914 = vadd.f32 %v1905, %v1913
    %v1915 = vadd.f32 %v1906, %v1913
    %v1916 = vadd.f32 %v1907, %v1913
    %v1917 = vadd.f32 %v1908, %v1913
    %v1918 = vmax.f32 %v1914, 0.0
    %v1919 = vmax.f32 %v1915, 0.0
    %v1920 = vmax.f32 %v1916, 0.0
    %v1921 = vmax.f32 %v1917, 0.0
    %s1922 = scalar_lea.vmem %s1, 1664
    %v1923 = vld [vmem:[%s1922] sm:$0xff]
    %v1924 = vld [vmem:[%s1922 + $0x8] sm:$0xff]
    %v1925 = vld [vmem:[%s1922 + $0x10] sm:$0xff]
    %v1926 = vld [vmem:[%s1922 + $0x18] sm:$0xff]
    %v1927 = vld [vmem:[%s1922 + $0x20] sm:$0xff]
    %v1928 = vld [vmem:[%s1922 + $0x28] sm:$0xff]
    %v1929 = vld [vmem:[%s1922 + $0x30] sm:$0xff]
    %v1930 = vld [vmem:[%s1922 + $0x38] sm:$0xff]
    %v1931 = vld [vmem:[%s1922 + $0x40] sm:$0xff]
    %v1932 = vld [vmem:[%s1922 + $0x48] sm:$0xff]
    %v1933 = vld [vmem:[%s1922 + $0x50] sm:$0xff]
    %v1934 = vld [vmem:[%s1922 + $0x58] sm:$0xff]
    %v1935 = vld [vmem:[%s1922 + $0x60] sm:$0xff]
    %v1936 = vld [vmem:[%s1922 + $0x68] sm:$0xff]
    %v1937 = vld [vmem:[%s1922 + $0x70] sm:$0xff]
    %v1938 = vld [vmem:[%s1922 + $0x78] sm:$0xff]
    %s1939 = scalar_lea.vmem %s1, 1792
    %v1940 = vld [vmem:[%s1939] sm:$0xff]
    %v1941 = vld [vmem:[%s1939 + $0x8] sm:$0xff]
    %v1942 = vld [vmem:[%s1939 + $0x10] sm:$0xff]
    %v1943 = vld [vmem:[%s1939 + $0x18] sm:$0xff]
    %v1944 = vld [vmem:[%s1939 + $0x20] sm:$0xff]
    %v1945 = vld [vmem:[%s1939 + $0x28] sm:$0xff]
    %v1946 = vld [vmem:[%s1939 + $0x30] sm:$0xff]
    %v1947 = vld [vmem:[%s1939 + $0x38] sm:$0xff]
    %v1948 = vld [vmem:[%s1939 + $0x40] sm:$0xff]
    %v1949 = vld [vmem:[%s1939 + $0x48] sm:$0xff]
    %v1950 = vld [vmem:[%s1939 + $0x50] sm:$0xff]
    %v1951 = vld [vmem:[%s1939 + $0x58] sm:$0xff]
    %v1952 = vld [vmem:[%s1939 + $0x60] sm:$0xff]
    %v1953 = vld [vmem:[%s1939 + $0x68] sm:$0xff]
    %v1954 = vld [vmem:[%s1939 + $0x70] sm:$0xff]
    %v1955 = vld [vmem:[%s1939 + $0x78] sm:$0xff]
    %1956 = vmatprep.subr.mxu0 0.0
    %1957 = vmatpush1.msra.mxu0 %v1955
    %1958 = vmatprep.subr.mxu0 0.0
    %1959 = vmatpush1.msra.mxu0 %v1954
    %1960 = vmatprep.subr.mxu0 0.0
    %1961 = vmatpush1.msra.mxu0 %v1953
    %1962 = vmatprep.subr.mxu0 0.0
    %1963 = vmatpush1.msra.mxu0 %v1952
    %1964 = vmatprep.subr.mxu0 0.0
    %1965 = vmatpush1.msra.mxu0 %v1951
    %1966 = vmatprep.subr.mxu0 0.0
    %1967 = vmatpush1.msra.mxu0 %v1950
    %1968 = vmatprep.subr.mxu0 0.0
    %1969 = vmatpush1.msra.mxu0 %v1949
    %1970 = vmatprep.subr.mxu0 0.0
    %1971 = vmatpush1.msra.mxu0 %v1948
    %1972 = vmatprep.subr.mxu0 0.0
    %1973 = vmatpush1.msra.mxu0 %v1947
    %1974 = vmatprep.subr.mxu0 0.0
    %1975 = vmatpush1.msra.mxu0 %v1946
    %1976 = vmatprep.subr.mxu0 0.0
    %1977 = vmatpush1.msra.mxu0 %v1945
    %1978 = vmatprep.subr.mxu0 0.0
    %1979 = vmatpush1.msra.mxu0 %v1944
    %1980 = vmatprep.subr.mxu0 0.0
    %1981 = vmatpush1.msra.mxu0 %v1943
    %1982 = vmatprep.subr.mxu0 0.0
    %1983 = vmatpush1.msra.mxu0 %v1942
    %1984 = vmatprep.subr.mxu0 0.0
    %1985 = vmatpush1.msra.mxu0 %v1941
    %1986 = vmatprep.subr.mxu0 0.0
    %1987 = vmatpush1.msra.mxu0 %v1940
    %1988 = vmatprep.subr.mxu0 0.0
    %1989 = vmatpush2.msra.mxu0 0.0
    %1990 = vmatprep.subr.mxu0 0.0
    %1991 = vmatpush2.msra.mxu0 0.0
    %1992 = vmatprep.subr.mxu0 0.0
    %1993 = vmatpush2.msra.mxu0 0.0
    %1994 = vmatprep.subr.mxu0 0.0
    %1995 = vmatpush2.msra.mxu0 0.0
    %1996 = vmatprep.subr.mxu0 0.0
    %1997 = vmatpush2.msra.mxu0 0.0
    %1998 = vmatprep.subr.mxu0 0.0
    %1999 = vmatpush2.msra.mxu0 0.0
    %2000 = vmatprep.subr.mxu0 0.0
    %2001 = vmatpush2.msra.mxu0 0.0
    %2002 = vmatprep.subr.mxu0 0.0
    %2003 = vmatpush2.msra.mxu0 0.0
    %2004 = vmatprep.subr.mxu0 0.0
    %2005 = vmatpush2.msra.mxu0 0.0
    %2006 = vmatprep.subr.mxu0 0.0
    %2007 = vmatpush2.msra.mxu0 0.0
    %2008 = vmatprep.subr.mxu0 0.0
    %2009 = vmatpush2.msra.mxu0 0.0
    %2010 = vmatprep.subr.mxu0 0.0
    %2011 = vmatpush2.msra.mxu0 0.0
    %2012 = vmatprep.subr.mxu0 0.0
    %2013 = vmatpush2.msra.mxu0 0.0
    %2014 = vmatprep.subr.mxu0 0.0
    %2015 = vmatpush2.msra.mxu0 0.0
    %2016 = vmatprep.subr.mxu0 0.0
    %2017 = vmatpush2.msra.mxu0 0.0
    %2018 = vmatprep.subr.mxu0 0.0
    %2019 = vmatpush2.msra.mxu0 0.0
    %2020 = vmatprep.mubr.f32.mxu0 0.0
    %2021 = vmatmul.mubr.f32.gmra.mxu0 %v1918
    %v2022 = vpop.f32.mrf.mxu0
    %v2023 = vadd.f32 0.0, %v2022
    %v2024 = vpop.f32.mrf.mxu0
    %2025 = vmatprep.mubr.f32.mxu0 0.0
    %2026 = vmatmul.mubr.f32.gmra.mxu0 %v1919
    %v2027 = vpop.f32.mrf.mxu0
    %v2028 = vadd.f32 0.0, %v2027
    %v2029 = vpop.f32.mrf.mxu0
    %2030 = vmatprep.mubr.f32.mxu0 0.0
    %2031 = vmatmul.mubr.f32.gmra.mxu0 %v1920
    %v2032 = vpop.f32.mrf.mxu0
    %v2033 = vadd.f32 0.0, %v2032
    %v2034 = vpop.f32.mrf.mxu0
    %2035 = vmatprep.mubr.f32.mxu0 0.0
    %2036 = vmatmul.mubr.f32.gmra.mxu0 %v1921
    %v2037 = vpop.f32.mrf.mxu0
    %v2038 = vadd.f32 0.0, %v2037
    %v2039 = vpop.f32.mrf.mxu0
    %2040 = vdwg.mxu0
    %2041 = vmatprep.subr.mxu0 0.0
    %2042 = vmatpush1.msra.mxu0 %v1938
    %2043 = vmatprep.subr.mxu0 0.0
    %2044 = vmatpush1.msra.mxu0 %v1937
    %2045 = vmatprep.subr.mxu0 0.0
    %2046 = vmatpush1.msra.mxu0 %v1936
    %2047 = vmatprep.subr.mxu0 0.0
    %2048 = vmatpush1.msra.mxu0 %v1935
    %2049 = vmatprep.subr.mxu0 0.0
    %2050 = vmatpush1.msra.mxu0 %v1934
    %2051 = vmatprep.subr.mxu0 0.0
    %2052 = vmatpush1.msra.mxu0 %v1933
    %2053 = vmatprep.subr.mxu0 0.0
    %2054 = vmatpush1.msra.mxu0 %v1932
    %2055 = vmatprep.subr.mxu0 0.0
    %2056 = vmatpush1.msra.mxu0 %v1931
    %2057 = vmatprep.subr.mxu0 0.0
    %2058 = vmatpush1.msra.mxu0 %v1930
    %2059 = vmatprep.subr.mxu0 0.0
    %2060 = vmatpush1.msra.mxu0 %v1929
    %2061 = vmatprep.subr.mxu0 0.0
    %2062 = vmatpush1.msra.mxu0 %v1928
    %2063 = vmatprep.subr.mxu0 0.0
    %2064 = vmatpush1.msra.mxu0 %v1927
    %2065 = vmatprep.subr.mxu0 0.0
    %2066 = vmatpush1.msra.mxu0 %v1926
    %2067 = vmatprep.subr.mxu0 0.0
    %2068 = vmatpush1.msra.mxu0 %v1925
    %2069 = vmatprep.subr.mxu0 0.0
    %2070 = vmatpush1.msra.mxu0 %v1924
    %2071 = vmatprep.subr.mxu0 0.0
    %2072 = vmatpush1.msra.mxu0 %v1923
    %2073 = vmatprep.subr.mxu0 0.0
    %2074 = vmatpush2.msra.mxu0 0.0
    %2075 = vmatprep.subr.mxu0 0.0
    %2076 = vmatpush2.msra.mxu0 0.0
    %2077 = vmatprep.subr.mxu0 0.0
    %2078 = vmatpush2.msra.mxu0 0.0
    %2079 = vmatprep.subr.mxu0 0.0
    %2080 = vmatpush2.msra.mxu0 0.0
    %2081 = vmatprep.subr.mxu0 0.0
    %2082 = vmatpush2.msra.mxu0 0.0
    %2083 = vmatprep.subr.mxu0 0.0
    %2084 = vmatpush2.msra.mxu0 0.0
    %2085 = vmatprep.subr.mxu0 0.0
    %2086 = vmatpush2.msra.mxu0 0.0
    %2087 = vmatprep.subr.mxu0 0.0
    %2088 = vmatpush2.msra.mxu0 0.0
    %2089 = vmatprep.subr.mxu0 0.0
    %2090 = vmatpush2.msra.mxu0 0.0
    %2091 = vmatprep.subr.mxu0 0.0
    %2092 = vmatpush2.msra.mxu0 0.0
    %2093 = vmatprep.subr.mxu0 0.0
    %2094 = vmatpush2.msra.mxu0 0.0
    %2095 = vmatprep.subr.mxu0 0.0
    %2096 = vmatpush2.msra.mxu0 0.0
    %2097 = vmatprep.subr.mxu0 0.0
    %2098 = vmatpush2.msra.mxu0 0.0
    %2099 = vmatprep.subr.mxu0 0.0
    %2100 = vmatpush2.msra.mxu0 0.0
    %2101 = vmatprep.subr.mxu0 0.0
    %2102 = vmatpush2.msra.mxu0 0.0
    %2103 = vmatprep.subr.mxu0 0.0
    %2104 = vmatpush2.msra.mxu0 0.0
    %2105 = vmatprep.mubr.f32.mxu0 0.0
    %2106 = vmatmul.mubr.f32.gmra.mxu0 %v1232
    %v2107 = vpop.f32.mrf.mxu0
    %v2108 = vadd.f32 %v2023, %v2107
    %v2109 = vpop.f32.mrf.mxu0
    %2110 = vmatprep.mubr.f32.mxu0 0.0
    %2111 = vmatmul.mubr.f32.gmra.mxu0 %v1233
    %v2112 = vpop.f32.mrf.mxu0
    %v2113 = vadd.f32 %v2028, %v2112
    %v2114 = vpop.f32.mrf.mxu0
    %2115 = vmatprep.mubr.f32.mxu0 0.0
    %2116 = vmatmul.mubr.f32.gmra.mxu0 %v1234
    %v2117 = vpop.f32.mrf.mxu0
    %v2118 = vadd.f32 %v2033, %v2117
    %v2119 = vpop.f32.mrf.mxu0
    %2120 = vmatprep.mubr.f32.mxu0 0.0
    %2121 = vmatmul.mubr.f32.gmra.mxu0 %v1235
    %v2122 = vpop.f32.mrf.mxu0
    %v2123 = vadd.f32 %v2038, %v2122
    %v2124 = vpop.f32.mrf.mxu0
    %2125 = vdwg.mxu0
    %v2126 = vld [vmem:[%s2 + $0x3] sm:$0x1]
    %v2127 = vlaneseq
    %v2128 = vshrl.u32 %v2127, 7
    %v2129 = vsub.s32 0, %v2128
    %v2130 = vrot.slane %v2126, %v2129
    %v2131 = vadd.f32 %v2108, %v2130
    %v2132 = vadd.f32 %v2113, %v2130
    %v2133 = vadd.f32 %v2118, %v2130
    %v2134 = vadd.f32 %v2123, %v2130
    %v2135 = vmax.f32 %v2131, 0.0
    %v2136 = vmax.f32 %v2132, 0.0
    %v2137 = vmax.f32 %v2133, 0.0
    %v2138 = vmax.f32 %v2134, 0.0
    %vm2139 = vcmask 261120
    %v2140 = vsel %vm2139, %v1021, 0
    %v2142 = vsel %vm2139, %v1022, 0
    %2144 = vmatprep.subr.mxu0 0.0
    %2145 = vmatpush1.msra.mxu0 0.0
    %2146 = vmatprep.subr.mxu0 0.0
    %2147 = vmatpush1.msra.mxu0 0.0
    %2148 = vmatprep.subr.mxu0 0.0
    %2149 = vmatpush1.msra.mxu0 0.0
    %2150 = vmatprep.subr.mxu0 0.0
    %2151 = vmatpush1.msra.mxu0 0.0
    %2152 = vmatprep.subr.mxu0 0.0
    %2153 = vmatpush1.msra.mxu0 0.0
    %2154 = vmatprep.subr.mxu0 0.0
    %2155 = vmatpush1.msra.mxu0 0.0
    %2156 = vmatprep.subr.mxu0 0.0
    %2157 = vmatpush1.msra.mxu0 0.0
    %2158 = vmatprep.subr.mxu0 0.0
    %2159 = vmatpush1.msra.mxu0 0.0
    %2160 = vmatprep.subr.mxu0 0.0
    %2161 = vmatpush1.msra.mxu0 0.0
    %2162 = vmatprep.subr.mxu0 0.0
    %2163 = vmatpush1.msra.mxu0 0.0
    %2164 = vmatprep.subr.mxu0 0.0
    %2165 = vmatpush1.msra.mxu0 0.0
    %2166 = vmatprep.subr.mxu0 0.0
    %2167 = vmatpush1.msra.mxu0 0.0
    %2168 = vmatprep.subr.mxu0 0.0
    %2169 = vmatpush1.msra.mxu0 %v2138
    %2170 = vmatprep.subr.mxu0 0.0
    %2171 = vmatpush1.msra.mxu0 %v2137
    %2172 = vmatprep.subr.mxu0 0.0
    %2173 = vmatpush1.msra.mxu0 %v2136
    %2174 = vmatprep.subr.mxu0 0.0
    %2175 = vmatpush1.msra.mxu0 %v2135
    %2176 = vmatprep.subr.mxu0 0.0
    %2177 = vmatpush2.msra.mxu0 0.0
    %2178 = vmatprep.subr.mxu0 0.0
    %2179 = vmatpush2.msra.mxu0 0.0
    %2180 = vmatprep.subr.mxu0 0.0
    %2181 = vmatpush2.msra.mxu0 0.0
    %2182 = vmatprep.subr.mxu0 0.0
    %2183 = vmatpush2.msra.mxu0 0.0
    %2184 = vmatprep.subr.mxu0 0.0
    %2185 = vmatpush2.msra.mxu0 0.0
    %2186 = vmatprep.subr.mxu0 0.0
    %2187 = vmatpush2.msra.mxu0 0.0
    %2188 = vmatprep.subr.mxu0 0.0
    %2189 = vmatpush2.msra.mxu0 0.0
    %2190 = vmatprep.subr.mxu0 0.0
    %2191 = vmatpush2.msra.mxu0 0.0
    %2192 = vmatprep.subr.mxu0 0.0
    %2193 = vmatpush2.msra.mxu0 0.0
    %2194 = vmatprep.subr.mxu0 0.0
    %2195 = vmatpush2.msra.mxu0 0.0
    %2196 = vmatprep.subr.mxu0 0.0
    %2197 = vmatpush2.msra.mxu0 0.0
    %2198 = vmatprep.subr.mxu0 0.0
    %2199 = vmatpush2.msra.mxu0 0.0
    %2200 = vmatprep.subr.mxu0 0.0
    %2201 = vmatpush2.msra.mxu0 0.0
    %2202 = vmatprep.subr.mxu0 0.0
    %2203 = vmatpush2.msra.mxu0 0.0
    %2204 = vmatprep.subr.mxu0 0.0
    %2205 = vmatpush2.msra.mxu0 0.0
    %2206 = vmatprep.subr.mxu0 0.0
    %2207 = vmatpush2.msra.mxu0 0.0
    %2208 = vmatprep.mubr.f32.mxu0 0.0
    %2209 = vmatmul.mubr.f32.gmra.mxu0 %v2140
    %v2210 = vpop.f32.mrf.mxu0
    %v2211 = vadd.f32 0.0, %v2210
    %v2212 = vpop.f32.mrf.mxu0
    %2213 = vmatprep.mubr.f32.mxu0 0.0
    %2214 = vmatmul.mubr.f32.gmra.mxu0 %v2142
    %v2215 = vpop.f32.mrf.mxu0
    %v2216 = vadd.f32 0.0, %v2215
    %v2217 = vpop.f32.mrf.mxu0
    %2218 = vdwg.mxu0
    %v2219 = vsel %vm2139, %v1033, 0
    %v2221 = vsel %vm2139, %v1034, 0
    %2223 = vmatprep.subr.mxu0 0.0
    %2224 = vmatpush1.msra.mxu0 0.0
    %2225 = vmatprep.subr.mxu0 0.0
    %2226 = vmatpush1.msra.mxu0 0.0
    %2227 = vmatprep.subr.mxu0 0.0
    %2228 = vmatpush1.msra.mxu0 0.0
    %2229 = vmatprep.subr.mxu0 0.0
    %2230 = vmatpush1.msra.mxu0 0.0
    %2231 = vmatprep.subr.mxu0 0.0
    %2232 = vmatpush1.msra.mxu0 0.0
    %2233 = vmatprep.subr.mxu0 0.0
    %2234 = vmatpush1.msra.mxu0 0.0
    %2235 = vmatprep.subr.mxu0 0.0
    %2236 = vmatpush1.msra.mxu0 0.0
    %2237 = vmatprep.subr.mxu0 0.0
    %2238 = vmatpush1.msra.mxu0 0.0
    %2239 = vmatprep.subr.mxu0 0.0
    %2240 = vmatpush1.msra.mxu0 0.0
    %2241 = vmatprep.subr.mxu0 0.0
    %2242 = vmatpush1.msra.mxu0 0.0
    %2243 = vmatprep.subr.mxu0 0.0
    %2244 = vmatpush1.msra.mxu0 0.0
    %2245 = vmatprep.subr.mxu0 0.0
    %2246 = vmatpush1.msra.mxu0 0.0
    %2247 = vmatprep.subr.mxu0 0.0
    %2248 = vmatpush1.msra.mxu0 %v2138
    %2249 = vmatprep.subr.mxu0 0.0
    %2250 = vmatpush1.msra.mxu0 %v2137
    %2251 = vmatprep.subr.mxu0 0.0
    %2252 = vmatpush1.msra.mxu0 %v2136
    %2253 = vmatprep.subr.mxu0 0.0
    %2254 = vmatpush1.msra.mxu0 %v2135
    %2255 = vmatprep.subr.mxu0 0.0
    %2256 = vmatpush2.msra.mxu0 0.0
    %2257 = vmatprep.subr.mxu0 0.0
    %2258 = vmatpush2.msra.mxu0 0.0
    %2259 = vmatprep.subr.mxu0 0.0
    %2260 = vmatpush2.msra.mxu0 0.0
    %2261 = vmatprep.subr.mxu0 0.0
    %2262 = vmatpush2.msra.mxu0 0.0
    %2263 = vmatprep.subr.mxu0 0.0
    %2264 = vmatpush2.msra.mxu0 0.0
    %2265 = vmatprep.subr.mxu0 0.0
    %2266 = vmatpush2.msra.mxu0 0.0
    %2267 = vmatprep.subr.mxu0 0.0
    %2268 = vmatpush2.msra.mxu0 0.0
    %2269 = vmatprep.subr.mxu0 0.0
    %2270 = vmatpush2.msra.mxu0 0.0
    %2271 = vmatprep.subr.mxu0 0.0
    %2272 = vmatpush2.msra.mxu0 0.0
    %2273 = vmatprep.subr.mxu0 0.0
    %2274 = vmatpush2.msra.mxu0 0.0
    %2275 = vmatprep.subr.mxu0 0.0
    %2276 = vmatpush2.msra.mxu0 0.0
    %2277 = vmatprep.subr.mxu0 0.0
    %2278 = vmatpush2.msra.mxu0 0.0
    %2279 = vmatprep.subr.mxu0 0.0
    %2280 = vmatpush2.msra.mxu0 0.0
    %2281 = vmatprep.subr.mxu0 0.0
    %2282 = vmatpush2.msra.mxu0 0.0
    %2283 = vmatprep.subr.mxu0 0.0
    %2284 = vmatpush2.msra.mxu0 0.0
    %2285 = vmatprep.subr.mxu0 0.0
    %2286 = vmatpush2.msra.mxu0 0.0
    %2287 = vmatprep.mubr.f32.mxu0 0.0
    %2288 = vmatmul.mubr.f32.gmra.mxu0 %v2219
    %v2289 = vpop.f32.mrf.mxu0
    %v2290 = vadd.f32 0.0, %v2289
    %v2291 = vpop.f32.mrf.mxu0
    %2292 = vmatprep.mubr.f32.mxu0 0.0
    %2293 = vmatmul.mubr.f32.gmra.mxu0 %v2221
    %v2294 = vpop.f32.mrf.mxu0
    %v2295 = vadd.f32 0.0, %v2294
    %v2296 = vpop.f32.mrf.mxu0
    %2297 = vdwg.mxu0
    %v2298 = vmax.f32 %v2211, %v2290
    %v2299 = vmax.f32 %v2216, %v2295
    %2300 = vst [vmem:[#allocation2] sm:$0x1] 0.0
    %2301 = vst [vmem:[#allocation2 + $0x28] sm:$0x1] 0.0
    %2302 = vst [vmem:[#allocation2 + $0x9] sm:$0x1] 0.0
    %2303 = vst [vmem:[#allocation2 + $0x31] sm:$0x1] 0.0
    %2304 = vst [vmem:[#allocation2 + $0x1] sm:$0xff] %v2298
    %2305 = vst [vmem:[%s31 + $0x1] sm:$0xff] %v2299
    %v2306 = vld [vmem:[#allocation2] sm:$0xff]
    %v2307 = vld [vmem:[#allocation2 + $0x28] sm:$0xff]
    %s2308 = scalar_lea.vmem %s1, 1920
    %v2309 = vld [vmem:[%s2308] sm:$0xff]
    %v2310 = vld [vmem:[%s2308 + $0x8] sm:$0xff]
    %v2311 = vld [vmem:[%s2308 + $0x10] sm:$0xff]
    %v2312 = vld [vmem:[%s2308 + $0x18] sm:$0xff]
    %v2313 = vld [vmem:[%s2308 + $0x20] sm:$0xff]
    %v2314 = vld [vmem:[%s2308 + $0x28] sm:$0xff]
    %v2315 = vld [vmem:[%s2308 + $0x30] sm:$0xff]
    %v2316 = vld [vmem:[%s2308 + $0x38] sm:$0xff]
    %v2317 = vld [vmem:[%s2308 + $0x40] sm:$0xff]
    %v2318 = vld [vmem:[%s2308 + $0x48] sm:$0xff]
    %v2319 = vld [vmem:[%s2308 + $0x50] sm:$0xff]
    %v2320 = vld [vmem:[%s2308 + $0x58] sm:$0xff]
    %v2321 = vld [vmem:[%s2308 + $0x60] sm:$0xff]
    %v2322 = vld [vmem:[%s2308 + $0x68] sm:$0xff]
    %v2323 = vld [vmem:[%s2308 + $0x70] sm:$0xff]
    %v2324 = vld [vmem:[%s2308 + $0x78] sm:$0xff]
    %v2325 = vld [vmem:[#allocation2 + $0x1] sm:$0xff]
    %v2326 = vld [vmem:[#allocation2 + $0x29] sm:$0xff]
    %s2327 = scalar_lea.vmem %s1, 2048
    %v2328 = vld [vmem:[%s2327] sm:$0xff]
    %v2329 = vld [vmem:[%s2327 + $0x8] sm:$0xff]
    %v2330 = vld [vmem:[%s2327 + $0x10] sm:$0xff]
    %v2331 = vld [vmem:[%s2327 + $0x18] sm:$0xff]
    %v2332 = vld [vmem:[%s2327 + $0x20] sm:$0xff]
    %v2333 = vld [vmem:[%s2327 + $0x28] sm:$0xff]
    %v2334 = vld [vmem:[%s2327 + $0x30] sm:$0xff]
    %v2335 = vld [vmem:[%s2327 + $0x38] sm:$0xff]
    %v2336 = vld [vmem:[%s2327 + $0x40] sm:$0xff]
    %v2337 = vld [vmem:[%s2327 + $0x48] sm:$0xff]
    %v2338 = vld [vmem:[%s2327 + $0x50] sm:$0xff]
    %v2339 = vld [vmem:[%s2327 + $0x58] sm:$0xff]
    %v2340 = vld [vmem:[%s2327 + $0x60] sm:$0xff]
    %v2341 = vld [vmem:[%s2327 + $0x68] sm:$0xff]
    %v2342 = vld [vmem:[%s2327 + $0x70] sm:$0xff]
    %v2343 = vld [vmem:[%s2327 + $0x78] sm:$0xff]
    %2344 = vmatprep.subr.mxu0 0.0
    %2345 = vmatpush1.msra.mxu0 %v2343
    %2346 = vmatprep.subr.mxu0 0.0
    %2347 = vmatpush1.msra.mxu0 %v2342
    %2348 = vmatprep.subr.mxu0 0.0
    %2349 = vmatpush1.msra.mxu0 %v2341
    %2350 = vmatprep.subr.mxu0 0.0
    %2351 = vmatpush1.msra.mxu0 %v2340
    %2352 = vmatprep.subr.mxu0 0.0
    %2353 = vmatpush1.msra.mxu0 %v2339
    %2354 = vmatprep.subr.mxu0 0.0
    %2355 = vmatpush1.msra.mxu0 %v2338
    %2356 = vmatprep.subr.mxu0 0.0
    %2357 = vmatpush1.msra.mxu0 %v2337
    %2358 = vmatprep.subr.mxu0 0.0
    %2359 = vmatpush1.msra.mxu0 %v2336
    %2360 = vmatprep.subr.mxu0 0.0
    %2361 = vmatpush1.msra.mxu0 %v2335
    %2362 = vmatprep.subr.mxu0 0.0
    %2363 = vmatpush1.msra.mxu0 %v2334
    %2364 = vmatprep.subr.mxu0 0.0
    %2365 = vmatpush1.msra.mxu0 %v2333
    %2366 = vmatprep.subr.mxu0 0.0
    %2367 = vmatpush1.msra.mxu0 %v2332
    %2368 = vmatprep.subr.mxu0 0.0
    %2369 = vmatpush1.msra.mxu0 %v2331
    %2370 = vmatprep.subr.mxu0 0.0
    %2371 = vmatpush1.msra.mxu0 %v2330
    %2372 = vmatprep.subr.mxu0 0.0
    %2373 = vmatpush1.msra.mxu0 %v2329
    %2374 = vmatprep.subr.mxu0 0.0
    %2375 = vmatpush1.msra.mxu0 %v2328
    %2376 = vmatprep.subr.mxu0 0.0
    %2377 = vmatpush2.msra.mxu0 0.0
    %2378 = vmatprep.subr.mxu0 0.0
    %2379 = vmatpush2.msra.mxu0 0.0
    %2380 = vmatprep.subr.mxu0 0.0
    %2381 = vmatpush2.msra.mxu0 0.0
    %2382 = vmatprep.subr.mxu0 0.0
    %2383 = vmatpush2.msra.mxu0 0.0
    %2384 = vmatprep.subr.mxu0 0.0
    %2385 = vmatpush2.msra.mxu0 0.0
    %2386 = vmatprep.subr.mxu0 0.0
    %2387 = vmatpush2.msra.mxu0 0.0
    %2388 = vmatprep.subr.mxu0 0.0
    %2389 = vmatpush2.msra.mxu0 0.0
    %2390 = vmatprep.subr.mxu0 0.0
    %2391 = vmatpush2.msra.mxu0 0.0
    %2392 = vmatprep.subr.mxu0 0.0
    %2393 = vmatpush2.msra.mxu0 0.0
    %2394 = vmatprep.subr.mxu0 0.0
    %2395 = vmatpush2.msra.mxu0 0.0
    %2396 = vmatprep.subr.mxu0 0.0
    %2397 = vmatpush2.msra.mxu0 0.0
    %2398 = vmatprep.subr.mxu0 0.0
    %2399 = vmatpush2.msra.mxu0 0.0
    %2400 = vmatprep.subr.mxu0 0.0
    %2401 = vmatpush2.msra.mxu0 0.0
    %2402 = vmatprep.subr.mxu0 0.0
    %2403 = vmatpush2.msra.mxu0 0.0
    %2404 = vmatprep.subr.mxu0 0.0
    %2405 = vmatpush2.msra.mxu0 0.0
    %2406 = vmatprep.subr.mxu0 0.0
    %2407 = vmatpush2.msra.mxu0 0.0
    %2408 = vmatprep.mubr.f32.mxu0 0.0
    %2409 = vmatmul.mubr.f32.gmra.mxu0 %v2325
    %v2410 = vpop.f32.mrf.mxu0
    %v2411 = vadd.f32 0.0, %v2410
    %v2412 = vpop.f32.mrf.mxu0
    %2413 = vmatprep.mubr.f32.mxu0 0.0
    %2414 = vmatmul.mubr.f32.gmra.mxu0 %v2326
    %v2415 = vpop.f32.mrf.mxu0
    %v2416 = vadd.f32 0.0, %v2415
    %v2417 = vpop.f32.mrf.mxu0
    %2418 = vdwg.mxu0
    %2419 = vmatprep.subr.mxu0 0.0
    %2420 = vmatpush1.msra.mxu0 %v2324
    %2421 = vmatprep.subr.mxu0 0.0
    %2422 = vmatpush1.msra.mxu0 %v2323
    %2423 = vmatprep.subr.mxu0 0.0
    %2424 = vmatpush1.msra.mxu0 %v2322
    %2425 = vmatprep.subr.mxu0 0.0
    %2426 = vmatpush1.msra.mxu0 %v2321
    %2427 = vmatprep.subr.mxu0 0.0
    %2428 = vmatpush1.msra.mxu0 %v2320
    %2429 = vmatprep.subr.mxu0 0.0
    %2430 = vmatpush1.msra.mxu0 %v2319
    %2431 = vmatprep.subr.mxu0 0.0
    %2432 = vmatpush1.msra.mxu0 %v2318
    %2433 = vmatprep.subr.mxu0 0.0
    %2434 = vmatpush1.msra.mxu0 %v2317
    %2435 = vmatprep.subr.mxu0 0.0
    %2436 = vmatpush1.msra.mxu0 %v2316
    %2437 = vmatprep.subr.mxu0 0.0
    %2438 = vmatpush1.msra.mxu0 %v2315
    %2439 = vmatprep.subr.mxu0 0.0
    %2440 = vmatpush1.msra.mxu0 %v2314
    %2441 = vmatprep.subr.mxu0 0.0
    %2442 = vmatpush1.msra.mxu0 %v2313
    %2443 = vmatprep.subr.mxu0 0.0
    %2444 = vmatpush1.msra.mxu0 %v2312
    %2445 = vmatprep.subr.mxu0 0.0
    %2446 = vmatpush1.msra.mxu0 %v2311
    %2447 = vmatprep.subr.mxu0 0.0
    %2448 = vmatpush1.msra.mxu0 %v2310
    %2449 = vmatprep.subr.mxu0 0.0
    %2450 = vmatpush1.msra.mxu0 %v2309
    %2451 = vmatprep.subr.mxu0 0.0
    %2452 = vmatpush2.msra.mxu0 0.0
    %2453 = vmatprep.subr.mxu0 0.0
    %2454 = vmatpush2.msra.mxu0 0.0
    %2455 = vmatprep.subr.mxu0 0.0
    %2456 = vmatpush2.msra.mxu0 0.0
    %2457 = vmatprep.subr.mxu0 0.0
    %2458 = vmatpush2.msra.mxu0 0.0
    %2459 = vmatprep.subr.mxu0 0.0
    %2460 = vmatpush2.msra.mxu0 0.0
    %2461 = vmatprep.subr.mxu0 0.0
    %2462 = vmatpush2.msra.mxu0 0.0
    %2463 = vmatprep.subr.mxu0 0.0
    %2464 = vmatpush2.msra.mxu0 0.0
    %2465 = vmatprep.subr.mxu0 0.0
    %2466 = vmatpush2.msra.mxu0 0.0
    %2467 = vmatprep.subr.mxu0 0.0
    %2468 = vmatpush2.msra.mxu0 0.0
    %2469 = vmatprep.subr.mxu0 0.0
    %2470 = vmatpush2.msra.mxu0 0.0
    %2471 = vmatprep.subr.mxu0 0.0
    %2472 = vmatpush2.msra.mxu0 0.0
    %2473 = vmatprep.subr.mxu0 0.0
    %2474 = vmatpush2.msra.mxu0 0.0
    %2475 = vmatprep.subr.mxu0 0.0
    %2476 = vmatpush2.msra.mxu0 0.0
    %2477 = vmatprep.subr.mxu0 0.0
    %2478 = vmatpush2.msra.mxu0 0.0
    %2479 = vmatprep.subr.mxu0 0.0
    %2480 = vmatpush2.msra.mxu0 0.0
    %2481 = vmatprep.subr.mxu0 0.0
    %2482 = vmatpush2.msra.mxu0 0.0
    %2483 = vmatprep.mubr.f32.mxu0 0.0
    %2484 = vmatmul.mubr.f32.gmra.mxu0 %v2306
    %v2485 = vpop.f32.mrf.mxu0
    %v2486 = vadd.f32 %v2411, %v2485
    %v2487 = vpop.f32.mrf.mxu0
    %2488 = vmatprep.mubr.f32.mxu0 0.0
    %2489 = vmatmul.mubr.f32.gmra.mxu0 %v2307
    %v2490 = vpop.f32.mrf.mxu0
    %v2491 = vadd.f32 %v2416, %v2490
    %v2492 = vpop.f32.mrf.mxu0
    %2493 = vdwg.mxu0
    %v2494 = vld [vmem:[#allocation2 + $0x2] sm:$0xff]
    %v2495 = vld [vmem:[#allocation2 + $0x2a] sm:$0xff]
    %s2496 = scalar_lea.vmem %s1, 2176
    %v2497 = vld [vmem:[%s2496] sm:$0xff]
    %v2498 = vld [vmem:[%s2496 + $0x8] sm:$0xff]
    %v2499 = vld [vmem:[%s2496 + $0x10] sm:$0xff]
    %v2500 = vld [vmem:[%s2496 + $0x18] sm:$0xff]
    %v2501 = vld [vmem:[%s2496 + $0x20] sm:$0xff]
    %v2502 = vld [vmem:[%s2496 + $0x28] sm:$0xff]
    %v2503 = vld [vmem:[%s2496 + $0x30] sm:$0xff]
    %v2504 = vld [vmem:[%s2496 + $0x38] sm:$0xff]
    %v2505 = vld [vmem:[%s2496 + $0x40] sm:$0xff]
    %v2506 = vld [vmem:[%s2496 + $0x48] sm:$0xff]
    %v2507 = vld [vmem:[%s2496 + $0x50] sm:$0xff]
    %v2508 = vld [vmem:[%s2496 + $0x58] sm:$0xff]
    %v2509 = vld [vmem:[%s2496 + $0x60] sm:$0xff]
    %v2510 = vld [vmem:[%s2496 + $0x68] sm:$0xff]
    %v2511 = vld [vmem:[%s2496 + $0x70] sm:$0xff]
    %v2512 = vld [vmem:[%s2496 + $0x78] sm:$0xff]
    %2513 = vmatprep.subr.mxu0 0.0
    %2514 = vmatpush1.msra.mxu0 %v2512
    %2515 = vmatprep.subr.mxu0 0.0
    %2516 = vmatpush1.msra.mxu0 %v2511
    %2517 = vmatprep.subr.mxu0 0.0
    %2518 = vmatpush1.msra.mxu0 %v2510
    %2519 = vmatprep.subr.mxu0 0.0
    %2520 = vmatpush1.msra.mxu0 %v2509
    %2521 = vmatprep.subr.mxu0 0.0
    %2522 = vmatpush1.msra.mxu0 %v2508
    %2523 = vmatprep.subr.mxu0 0.0
    %2524 = vmatpush1.msra.mxu0 %v2507
    %2525 = vmatprep.subr.mxu0 0.0
    %2526 = vmatpush1.msra.mxu0 %v2506
    %2527 = vmatprep.subr.mxu0 0.0
    %2528 = vmatpush1.msra.mxu0 %v2505
    %2529 = vmatprep.subr.mxu0 0.0
    %2530 = vmatpush1.msra.mxu0 %v2504
    %2531 = vmatprep.subr.mxu0 0.0
    %2532 = vmatpush1.msra.mxu0 %v2503
    %2533 = vmatprep.subr.mxu0 0.0
    %2534 = vmatpush1.msra.mxu0 %v2502
    %2535 = vmatprep.subr.mxu0 0.0
    %2536 = vmatpush1.msra.mxu0 %v2501
    %2537 = vmatprep.subr.mxu0 0.0
    %2538 = vmatpush1.msra.mxu0 %v2500
    %2539 = vmatprep.subr.mxu0 0.0
    %2540 = vmatpush1.msra.mxu0 %v2499
    %2541 = vmatprep.subr.mxu0 0.0
    %2542 = vmatpush1.msra.mxu0 %v2498
    %2543 = vmatprep.subr.mxu0 0.0
    %2544 = vmatpush1.msra.mxu0 %v2497
    %2545 = vmatprep.subr.mxu0 0.0
    %2546 = vmatpush2.msra.mxu0 0.0
    %2547 = vmatprep.subr.mxu0 0.0
    %2548 = vmatpush2.msra.mxu0 0.0
    %2549 = vmatprep.subr.mxu0 0.0
    %2550 = vmatpush2.msra.mxu0 0.0
    %2551 = vmatprep.subr.mxu0 0.0
    %2552 = vmatpush2.msra.mxu0 0.0
    %2553 = vmatprep.subr.mxu0 0.0
    %2554 = vmatpush2.msra.mxu0 0.0
    %2555 = vmatprep.subr.mxu0 0.0
    %2556 = vmatpush2.msra.mxu0 0.0
    %2557 = vmatprep.subr.mxu0 0.0
    %2558 = vmatpush2.msra.mxu0 0.0
    %2559 = vmatprep.subr.mxu0 0.0
    %2560 = vmatpush2.msra.mxu0 0.0
    %2561 = vmatprep.subr.mxu0 0.0
    %2562 = vmatpush2.msra.mxu0 0.0
    %2563 = vmatprep.subr.mxu0 0.0
    %2564 = vmatpush2.msra.mxu0 0.0
    %2565 = vmatprep.subr.mxu0 0.0
    %2566 = vmatpush2.msra.mxu0 0.0
    %2567 = vmatprep.subr.mxu0 0.0
    %2568 = vmatpush2.msra.mxu0 0.0
    %2569 = vmatprep.subr.mxu0 0.0
    %2570 = vmatpush2.msra.mxu0 0.0
    %2571 = vmatprep.subr.mxu0 0.0
    %2572 = vmatpush2.msra.mxu0 0.0
    %2573 = vmatprep.subr.mxu0 0.0
    %2574 = vmatpush2.msra.mxu0 0.0
    %2575 = vmatprep.subr.mxu0 0.0
    %2576 = vmatpush2.msra.mxu0 0.0
    %2577 = vmatprep.mubr.f32.mxu0 0.0
    %2578 = vmatmul.mubr.f32.gmra.mxu0 %v2494
    %v2579 = vpop.f32.mrf.mxu0
    %v2580 = vadd.f32 0.0, %v2579
    %v2581 = vpop.f32.mrf.mxu0
    %2582 = vmatprep.mubr.f32.mxu0 0.0
    %2583 = vmatmul.mubr.f32.gmra.mxu0 %v2495
    %v2584 = vpop.f32.mrf.mxu0
    %v2585 = vadd.f32 0.0, %v2584
    %v2586 = vpop.f32.mrf.mxu0
    %2587 = vdwg.mxu0
    %v2588 = vadd.f32 %v2486, %v2580
    %v2589 = vadd.f32 %v2491, %v2585
    %v2590 = vld [vmem:[%s2 + $0x4] sm:$0x1]
    %v2591 = vlaneseq
    %v2592 = vshrl.u32 %v2591, 7
    %v2593 = vsub.s32 0, %v2592
    %v2594 = vrot.slane %v2590, %v2593
    %v2595 = vadd.f32 %v2588, %v2594
    %v2596 = vadd.f32 %v2589, %v2594
    %v2597 = vmax.f32 %v2595, 0.0
    %v2598 = vmax.f32 %v2596, 0.0
    %2599 = vst [vmem:[#allocation2] sm:$0x1] 0.0
    %2600 = vst [vmem:[#allocation2 + $0x28] sm:$0x1] 0.0
    %2601 = vst [vmem:[#allocation2 + $0x9] sm:$0x1] 0.0
    %2602 = vst [vmem:[#allocation2 + $0x31] sm:$0x1] 0.0
    %2603 = vst [vmem:[#allocation2 + $0x1] sm:$0xff] %v2597
    %2604 = vst [vmem:[%s31 + $0x1] sm:$0xff] %v2598
    %v2605 = vld [vmem:[#allocation2] sm:$0xff]
    %v2606 = vld [vmem:[#allocation2 + $0x28] sm:$0xff]
    %s2607 = scalar_lea.vmem %s1, 2304
    %v2608 = vld [vmem:[%s2607] sm:$0xff]
    %v2609 = vld [vmem:[%s2607 + $0x8] sm:$0xff]
    %v2610 = vld [vmem:[%s2607 + $0x10] sm:$0xff]
    %v2611 = vld [vmem:[%s2607 + $0x18] sm:$0xff]
    %v2612 = vld [vmem:[%s2607 + $0x20] sm:$0xff]
    %v2613 = vld [vmem:[%s2607 + $0x28] sm:$0xff]
    %v2614 = vld [vmem:[%s2607 + $0x30] sm:$0xff]
    %v2615 = vld [vmem:[%s2607 + $0x38] sm:$0xff]
    %v2616 = vld [vmem:[%s2607 + $0x40] sm:$0xff]
    %v2617 = vld [vmem:[%s2607 + $0x48] sm:$0xff]
    %v2618 = vld [vmem:[%s2607 + $0x50] sm:$0xff]
    %v2619 = vld [vmem:[%s2607 + $0x58] sm:$0xff]
    %v2620 = vld [vmem:[%s2607 + $0x60] sm:$0xff]
    %v2621 = vld [vmem:[%s2607 + $0x68] sm:$0xff]
    %v2622 = vld [vmem:[%s2607 + $0x70] sm:$0xff]
    %v2623 = vld [vmem:[%s2607 + $0x78] sm:$0xff]
    %v2624 = vld [vmem:[#allocation2 + $0x1] sm:$0xff]
    %v2625 = vld [vmem:[#allocation2 + $0x29] sm:$0xff]
    %s2626 = scalar_lea.vmem %s1, 2432
    %v2627 = vld [vmem:[%s2626] sm:$0xff]
    %v2628 = vld [vmem:[%s2626 + $0x8] sm:$0xff]
    %v2629 = vld [vmem:[%s2626 + $0x10] sm:$0xff]
    %v2630 = vld [vmem:[%s2626 + $0x18] sm:$0xff]
    %v2631 = vld [vmem:[%s2626 + $0x20] sm:$0xff]
    %v2632 = vld [vmem:[%s2626 + $0x28] sm:$0xff]
    %v2633 = vld [vmem:[%s2626 + $0x30] sm:$0xff]
    %v2634 = vld [vmem:[%s2626 + $0x38] sm:$0xff]
    %v2635 = vld [vmem:[%s2626 + $0x40] sm:$0xff]
    %v2636 = vld [vmem:[%s2626 + $0x48] sm:$0xff]
    %v2637 = vld [vmem:[%s2626 + $0x50] sm:$0xff]
    %v2638 = vld [vmem:[%s2626 + $0x58] sm:$0xff]
    %v2639 = vld [vmem:[%s2626 + $0x60] sm:$0xff]
    %v2640 = vld [vmem:[%s2626 + $0x68] sm:$0xff]
    %v2641 = vld [vmem:[%s2626 + $0x70] sm:$0xff]
    %v2642 = vld [vmem:[%s2626 + $0x78] sm:$0xff]
    %2643 = vmatprep.subr.mxu0 0.0
    %2644 = vmatpush1.msra.mxu0 %v2642
    %2645 = vmatprep.subr.mxu0 0.0
    %2646 = vmatpush1.msra.mxu0 %v2641
    %2647 = vmatprep.subr.mxu0 0.0
    %2648 = vmatpush1.msra.mxu0 %v2640
    %2649 = vmatprep.subr.mxu0 0.0
    %2650 = vmatpush1.msra.mxu0 %v2639
    %2651 = vmatprep.subr.mxu0 0.0
    %2652 = vmatpush1.msra.mxu0 %v2638
    %2653 = vmatprep.subr.mxu0 0.0
    %2654 = vmatpush1.msra.mxu0 %v2637
    %2655 = vmatprep.subr.mxu0 0.0
    %2656 = vmatpush1.msra.mxu0 %v2636
    %2657 = vmatprep.subr.mxu0 0.0
    %2658 = vmatpush1.msra.mxu0 %v2635
    %2659 = vmatprep.subr.mxu0 0.0
    %2660 = vmatpush1.msra.mxu0 %v2634
    %2661 = vmatprep.subr.mxu0 0.0
    %2662 = vmatpush1.msra.mxu0 %v2633
    %2663 = vmatprep.subr.mxu0 0.0
    %2664 = vmatpush1.msra.mxu0 %v2632
    %2665 = vmatprep.subr.mxu0 0.0
    %2666 = vmatpush1.msra.mxu0 %v2631
    %2667 = vmatprep.subr.mxu0 0.0
    %2668 = vmatpush1.msra.mxu0 %v2630
    %2669 = vmatprep.subr.mxu0 0.0
    %2670 = vmatpush1.msra.mxu0 %v2629
    %2671 = vmatprep.subr.mxu0 0.0
    %2672 = vmatpush1.msra.mxu0 %v2628
    %2673 = vmatprep.subr.mxu0 0.0
    %2674 = vmatpush1.msra.mxu0 %v2627
    %2675 = vmatprep.subr.mxu0 0.0
    %2676 = vmatpush2.msra.mxu0 0.0
    %2677 = vmatprep.subr.mxu0 0.0
    %2678 = vmatpush2.msra.mxu0 0.0
    %2679 = vmatprep.subr.mxu0 0.0
    %2680 = vmatpush2.msra.mxu0 0.0
    %2681 = vmatprep.subr.mxu0 0.0
    %2682 = vmatpush2.msra.mxu0 0.0
    %2683 = vmatprep.subr.mxu0 0.0
    %2684 = vmatpush2.msra.mxu0 0.0
    %2685 = vmatprep.subr.mxu0 0.0
    %2686 = vmatpush2.msra.mxu0 0.0
    %2687 = vmatprep.subr.mxu0 0.0
    %2688 = vmatpush2.msra.mxu0 0.0
    %2689 = vmatprep.subr.mxu0 0.0
    %2690 = vmatpush2.msra.mxu0 0.0
    %2691 = vmatprep.subr.mxu0 0.0
    %2692 = vmatpush2.msra.mxu0 0.0
    %2693 = vmatprep.subr.mxu0 0.0
    %2694 = vmatpush2.msra.mxu0 0.0
    %2695 = vmatprep.subr.mxu0 0.0
    %2696 = vmatpush2.msra.mxu0 0.0
    %2697 = vmatprep.subr.mxu0 0.0
    %2698 = vmatpush2.msra.mxu0 0.0
    %2699 = vmatprep.subr.mxu0 0.0
    %2700 = vmatpush2.msra.mxu0 0.0
    %2701 = vmatprep.subr.mxu0 0.0
    %2702 = vmatpush2.msra.mxu0 0.0
    %2703 = vmatprep.subr.mxu0 0.0
    %2704 = vmatpush2.msra.mxu0 0.0
    %2705 = vmatprep.subr.mxu0 0.0
    %2706 = vmatpush2.msra.mxu0 0.0
    %2707 = vmatprep.mubr.f32.mxu0 0.0
    %2708 = vmatmul.mubr.f32.gmra.mxu0 %v2624
    %v2709 = vpop.f32.mrf.mxu0
    %v2710 = vadd.f32 0.0, %v2709
    %v2711 = vpop.f32.mrf.mxu0
    %2712 = vmatprep.mubr.f32.mxu0 0.0
    %2713 = vmatmul.mubr.f32.gmra.mxu0 %v2625
    %v2714 = vpop.f32.mrf.mxu0
    %v2715 = vadd.f32 0.0, %v2714
    %v2716 = vpop.f32.mrf.mxu0
    %2717 = vdwg.mxu0
    %2718 = vmatprep.subr.mxu0 0.0
    %2719 = vmatpush1.msra.mxu0 %v2623
    %2720 = vmatprep.subr.mxu0 0.0
    %2721 = vmatpush1.msra.mxu0 %v2622
    %2722 = vmatprep.subr.mxu0 0.0
    %2723 = vmatpush1.msra.mxu0 %v2621
    %2724 = vmatprep.subr.mxu0 0.0
    %2725 = vmatpush1.msra.mxu0 %v2620
    %2726 = vmatprep.subr.mxu0 0.0
    %2727 = vmatpush1.msra.mxu0 %v2619
    %2728 = vmatprep.subr.mxu0 0.0
    %2729 = vmatpush1.msra.mxu0 %v2618
    %2730 = vmatprep.subr.mxu0 0.0
    %2731 = vmatpush1.msra.mxu0 %v2617
    %2732 = vmatprep.subr.mxu0 0.0
    %2733 = vmatpush1.msra.mxu0 %v2616
    %2734 = vmatprep.subr.mxu0 0.0
    %2735 = vmatpush1.msra.mxu0 %v2615
    %2736 = vmatprep.subr.mxu0 0.0
    %2737 = vmatpush1.msra.mxu0 %v2614
    %2738 = vmatprep.subr.mxu0 0.0
    %2739 = vmatpush1.msra.mxu0 %v2613
    %2740 = vmatprep.subr.mxu0 0.0
    %2741 = vmatpush1.msra.mxu0 %v2612
    %2742 = vmatprep.subr.mxu0 0.0
    %2743 = vmatpush1.msra.mxu0 %v2611
    %2744 = vmatprep.subr.mxu0 0.0
    %2745 = vmatpush1.msra.mxu0 %v2610
    %2746 = vmatprep.subr.mxu0 0.0
    %2747 = vmatpush1.msra.mxu0 %v2609
    %2748 = vmatprep.subr.mxu0 0.0
    %2749 = vmatpush1.msra.mxu0 %v2608
    %2750 = vmatprep.subr.mxu0 0.0
    %2751 = vmatpush2.msra.mxu0 0.0
    %2752 = vmatprep.subr.mxu0 0.0
    %2753 = vmatpush2.msra.mxu0 0.0
    %2754 = vmatprep.subr.mxu0 0.0
    %2755 = vmatpush2.msra.mxu0 0.0
    %2756 = vmatprep.subr.mxu0 0.0
    %2757 = vmatpush2.msra.mxu0 0.0
    %2758 = vmatprep.subr.mxu0 0.0
    %2759 = vmatpush2.msra.mxu0 0.0
    %2760 = vmatprep.subr.mxu0 0.0
    %2761 = vmatpush2.msra.mxu0 0.0
    %2762 = vmatprep.subr.mxu0 0.0
    %2763 = vmatpush2.msra.mxu0 0.0
    %2764 = vmatprep.subr.mxu0 0.0
    %2765 = vmatpush2.msra.mxu0 0.0
    %2766 = vmatprep.subr.mxu0 0.0
    %2767 = vmatpush2.msra.mxu0 0.0
    %2768 = vmatprep.subr.mxu0 0.0
    %2769 = vmatpush2.msra.mxu0 0.0
    %2770 = vmatprep.subr.mxu0 0.0
    %2771 = vmatpush2.msra.mxu0 0.0
    %2772 = vmatprep.subr.mxu0 0.0
    %2773 = vmatpush2.msra.mxu0 0.0
    %2774 = vmatprep.subr.mxu0 0.0
    %2775 = vmatpush2.msra.mxu0 0.0
    %2776 = vmatprep.subr.mxu0 0.0
    %2777 = vmatpush2.msra.mxu0 0.0
    %2778 = vmatprep.subr.mxu0 0.0
    %2779 = vmatpush2.msra.mxu0 0.0
    %2780 = vmatprep.subr.mxu0 0.0
    %2781 = vmatpush2.msra.mxu0 0.0
    %2782 = vmatprep.mubr.f32.mxu0 0.0
    %2783 = vmatmul.mubr.f32.gmra.mxu0 %v2605
    %v2784 = vpop.f32.mrf.mxu0
    %v2785 = vadd.f32 %v2710, %v2784
    %v2786 = vpop.f32.mrf.mxu0
    %2787 = vmatprep.mubr.f32.mxu0 0.0
    %2788 = vmatmul.mubr.f32.gmra.mxu0 %v2606
    %v2789 = vpop.f32.mrf.mxu0
    %v2790 = vadd.f32 %v2715, %v2789
    %v2791 = vpop.f32.mrf.mxu0
    %2792 = vdwg.mxu0
    %v2793 = vld [vmem:[#allocation2 + $0x2] sm:$0xff]
    %v2794 = vld [vmem:[#allocation2 + $0x2a] sm:$0xff]
    %s2795 = scalar_lea.vmem %s1, 2560
    %v2796 = vld [vmem:[%s2795] sm:$0xff]
    %v2797 = vld [vmem:[%s2795 + $0x8] sm:$0xff]
    %v2798 = vld [vmem:[%s2795 + $0x10] sm:$0xff]
    %v2799 = vld [vmem:[%s2795 + $0x18] sm:$0xff]
    %v2800 = vld [vmem:[%s2795 + $0x20] sm:$0xff]
    %v2801 = vld [vmem:[%s2795 + $0x28] sm:$0xff]
    %v2802 = vld [vmem:[%s2795 + $0x30] sm:$0xff]
    %v2803 = vld [vmem:[%s2795 + $0x38] sm:$0xff]
    %v2804 = vld [vmem:[%s2795 + $0x40] sm:$0xff]
    %v2805 = vld [vmem:[%s2795 + $0x48] sm:$0xff]
    %v2806 = vld [vmem:[%s2795 + $0x50] sm:$0xff]
    %v2807 = vld [vmem:[%s2795 + $0x58] sm:$0xff]
    %v2808 = vld [vmem:[%s2795 + $0x60] sm:$0xff]
    %v2809 = vld [vmem:[%s2795 + $0x68] sm:$0xff]
    %v2810 = vld [vmem:[%s2795 + $0x70] sm:$0xff]
    %v2811 = vld [vmem:[%s2795 + $0x78] sm:$0xff]
    %2812 = vmatprep.subr.mxu0 0.0
    %2813 = vmatpush1.msra.mxu0 %v2811
    %2814 = vmatprep.subr.mxu0 0.0
    %2815 = vmatpush1.msra.mxu0 %v2810
    %2816 = vmatprep.subr.mxu0 0.0
    %2817 = vmatpush1.msra.mxu0 %v2809
    %2818 = vmatprep.subr.mxu0 0.0
    %2819 = vmatpush1.msra.mxu0 %v2808
    %2820 = vmatprep.subr.mxu0 0.0
    %2821 = vmatpush1.msra.mxu0 %v2807
    %2822 = vmatprep.subr.mxu0 0.0
    %2823 = vmatpush1.msra.mxu0 %v2806
    %2824 = vmatprep.subr.mxu0 0.0
    %2825 = vmatpush1.msra.mxu0 %v2805
    %2826 = vmatprep.subr.mxu0 0.0
    %2827 = vmatpush1.msra.mxu0 %v2804
    %2828 = vmatprep.subr.mxu0 0.0
    %2829 = vmatpush1.msra.mxu0 %v2803
    %2830 = vmatprep.subr.mxu0 0.0
    %2831 = vmatpush1.msra.mxu0 %v2802
    %2832 = vmatprep.subr.mxu0 0.0
    %2833 = vmatpush1.msra.mxu0 %v2801
    %2834 = vmatprep.subr.mxu0 0.0
    %2835 = vmatpush1.msra.mxu0 %v2800
    %2836 = vmatprep.subr.mxu0 0.0
    %2837 = vmatpush1.msra.mxu0 %v2799
    %2838 = vmatprep.subr.mxu0 0.0
    %2839 = vmatpush1.msra.mxu0 %v2798
    %2840 = vmatprep.subr.mxu0 0.0
    %2841 = vmatpush1.msra.mxu0 %v2797
    %2842 = vmatprep.subr.mxu0 0.0
    %2843 = vmatpush1.msra.mxu0 %v2796
    %2844 = vmatprep.subr.mxu0 0.0
    %2845 = vmatpush2.msra.mxu0 0.0
    %2846 = vmatprep.subr.mxu0 0.0
    %2847 = vmatpush2.msra.mxu0 0.0
    %2848 = vmatprep.subr.mxu0 0.0
    %2849 = vmatpush2.msra.mxu0 0.0
    %2850 = vmatprep.subr.mxu0 0.0
    %2851 = vmatpush2.msra.mxu0 0.0
    %2852 = vmatprep.subr.mxu0 0.0
    %2853 = vmatpush2.msra.mxu0 0.0
    %2854 = vmatprep.subr.mxu0 0.0
    %2855 = vmatpush2.msra.mxu0 0.0
    %2856 = vmatprep.subr.mxu0 0.0
    %2857 = vmatpush2.msra.mxu0 0.0
    %2858 = vmatprep.subr.mxu0 0.0
    %2859 = vmatpush2.msra.mxu0 0.0
    %2860 = vmatprep.subr.mxu0 0.0
    %2861 = vmatpush2.msra.mxu0 0.0
    %2862 = vmatprep.subr.mxu0 0.0
    %2863 = vmatpush2.msra.mxu0 0.0
    %2864 = vmatprep.subr.mxu0 0.0
    %2865 = vmatpush2.msra.mxu0 0.0
    %2866 = vmatprep.subr.mxu0 0.0
    %2867 = vmatpush2.msra.mxu0 0.0
    %2868 = vmatprep.subr.mxu0 0.0
    %2869 = vmatpush2.msra.mxu0 0.0
    %2870 = vmatprep.subr.mxu0 0.0
    %2871 = vmatpush2.msra.mxu0 0.0
    %2872 = vmatprep.subr.mxu0 0.0
    %2873 = vmatpush2.msra.mxu0 0.0
    %2874 = vmatprep.subr.mxu0 0.0
    %2875 = vmatpush2.msra.mxu0 0.0
    %2876 = vmatprep.mubr.f32.mxu0 0.0
    %2877 = vmatmul.mubr.f32.gmra.mxu0 %v2793
    %v2878 = vpop.f32.mrf.mxu0
    %v2879 = vadd.f32 0.0, %v2878
    %v2880 = vpop.f32.mrf.mxu0
    %2881 = vmatprep.mubr.f32.mxu0 0.0
    %2882 = vmatmul.mubr.f32.gmra.mxu0 %v2794
    %v2883 = vpop.f32.mrf.mxu0
    %v2884 = vadd.f32 0.0, %v2883
    %v2885 = vpop.f32.mrf.mxu0
    %2886 = vdwg.mxu0
    %v2887 = vadd.f32 %v2785, %v2879
    %v2888 = vadd.f32 %v2790, %v2884
    %v2889 = vld [vmem:[%s2 + $0x5] sm:$0x1]
    %v2890 = vlaneseq
    %v2891 = vshrl.u32 %v2890, 7
    %v2892 = vsub.s32 0, %v2891
    %v2893 = vrot.slane %v2889, %v2892
    %v2894 = vadd.f32 %v2887, %v2893
    %v2895 = vadd.f32 %v2888, %v2893
    %v2896 = vmax.f32 %v2894, 0.0
    %v2897 = vmax.f32 %v2895, 0.0
    %v2898 = vmul.u32 %v1007, 8
    %vm2899 = vcmp.ge.s32.totalorder %v1012, %v2898
    %v2900 = vadd.s32 %v2898, 8
    %vm2901 = vcmp.lt.s32.totalorder %v1012, %v2900
    %vm2902 = vmand %vm2899, %vm2901
    %v2903 = vsel %vm2902, 0.125, 0.0
    %vm2904 = vcmask 130048
    %v2906 = vsel %vm2904, %v2903, 0
    %2908 = vmatprep.subr.mxu0 0.0
    %2909 = vmatpush1.msra.mxu0 0.0
    %2910 = vmatprep.subr.mxu0 0.0
    %2911 = vmatpush1.msra.mxu0 0.0
    %2912 = vmatprep.subr.mxu0 0.0
    %2913 = vmatpush1.msra.mxu0 0.0
    %2914 = vmatprep.subr.mxu0 0.0
    %2915 = vmatpush1.msra.mxu0 0.0
    %2916 = vmatprep.subr.mxu0 0.0
    %2917 = vmatpush1.msra.mxu0 0.0
    %2918 = vmatprep.subr.mxu0 0.0
    %2919 = vmatpush1.msra.mxu0 0.0
    %2920 = vmatprep.subr.mxu0 0.0
    %2921 = vmatpush1.msra.mxu0 0.0
    %2922 = vmatprep.subr.mxu0 0.0
    %2923 = vmatpush1.msra.mxu0 0.0
    %2924 = vmatprep.subr.mxu0 0.0
    %2925 = vmatpush1.msra.mxu0 0.0
    %2926 = vmatprep.subr.mxu0 0.0
    %2927 = vmatpush1.msra.mxu0 0.0
    %2928 = vmatprep.subr.mxu0 0.0
    %2929 = vmatpush1.msra.mxu0 0.0
    %2930 = vmatprep.subr.mxu0 0.0
    %2931 = vmatpush1.msra.mxu0 0.0
    %2932 = vmatprep.subr.mxu0 0.0
    %2933 = vmatpush1.msra.mxu0 0.0
    %2934 = vmatprep.subr.mxu0 0.0
    %2935 = vmatpush1.msra.mxu0 0.0
    %2936 = vmatprep.subr.mxu0 0.0
    %2937 = vmatpush1.msra.mxu0 %v2299
    %2938 = vmatprep.subr.mxu0 0.0
    %2939 = vmatpush1.msra.mxu0 %v2298
    %2940 = vmatprep.subr.mxu0 0.0
    %2941 = vmatpush2.msra.mxu0 0.0
    %2942 = vmatprep.subr.mxu0 0.0
    %2943 = vmatpush2.msra.mxu0 0.0
    %2944 = vmatprep.subr.mxu0 0.0
    %2945 = vmatpush2.msra.mxu0 0.0
    %2946 = vmatprep.subr.mxu0 0.0
    %2947 = vmatpush2.msra.mxu0 0.0
    %2948 = vmatprep.subr.mxu0 0.0
    %2949 = vmatpush2.msra.mxu0 0.0
    %2950 = vmatprep.subr.mxu0 0.0
    %2951 = vmatpush2.msra.mxu0 0.0
    %2952 = vmatprep.subr.mxu0 0.0
    %2953 = vmatpush2.msra.mxu0 0.0
    %2954 = vmatprep.subr.mxu0 0.0
    %2955 = vmatpush2.msra.mxu0 0.0
    %2956 = vmatprep.subr.mxu0 0.0
    %2957 = vmatpush2.msra.mxu0 0.0
    %2958 = vmatprep.subr.mxu0 0.0
    %2959 = vmatpush2.msra.mxu0 0.0
    %2960 = vmatprep.subr.mxu0 0.0
    %2961 = vmatpush2.msra.mxu0 0.0
    %2962 = vmatprep.subr.mxu0 0.0
    %2963 = vmatpush2.msra.mxu0 0.0
    %2964 = vmatprep.subr.mxu0 0.0
    %2965 = vmatpush2.msra.mxu0 0.0
    %2966 = vmatprep.subr.mxu0 0.0
    %2967 = vmatpush2.msra.mxu0 0.0
    %2968 = vmatprep.subr.mxu0 0.0
    %2969 = vmatpush2.msra.mxu0 0.0
    %2970 = vmatprep.subr.mxu0 0.0
    %2971 = vmatpush2.msra.mxu0 0.0
    %2972 = vmatprep.mubr.f32.mxu0 0.0
    %2973 = vmatmul.mubr.f32.gmra.mxu0 %v2906
    %v2974 = vpop.f32.mrf.mxu0
    %v2975 = vadd.f32 0.0, %v2974
    %v2976 = vpop.f32.mrf.mxu0
    %2977 = vdwg.mxu0
    %2978 = vmatprep.subr.mxu0 0.0
    %2979 = vmatpush1.msra.mxu0 0.0
    %2980 = vmatprep.subr.mxu0 0.0
    %2981 = vmatpush1.msra.mxu0 0.0
    %2982 = vmatprep.subr.mxu0 0.0
    %2983 = vmatpush1.msra.mxu0 0.0
    %2984 = vmatprep.subr.mxu0 0.0
    %2985 = vmatpush1.msra.mxu0 0.0
    %2986 = vmatprep.subr.mxu0 0.0
    %2987 = vmatpush1.msra.mxu0 0.0
    %2988 = vmatprep.subr.mxu0 0.0
    %2989 = vmatpush1.msra.mxu0 0.0
    %2990 = vmatprep.subr.mxu0 0.0
    %2991 = vmatpush1.msra.mxu0 0.0
    %2992 = vmatprep.subr.mxu0 0.0
    %2993 = vmatpush1.msra.mxu0 0.0
    %2994 = vmatprep.subr.mxu0 0.0
    %2995 = vmatpush1.msra.mxu0 0.0
    %2996 = vmatprep.subr.mxu0 0.0
    %2997 = vmatpush1.msra.mxu0 0.0
    %2998 = vmatprep.subr.mxu0 0.0
    %2999 = vmatpush1.msra.mxu0 0.0
    %3000 = vmatprep.subr.mxu0 0.0
    %3001 = vmatpush1.msra.mxu0 0.0
    %3002 = vmatprep.subr.mxu0 0.0
    %3003 = vmatpush1.msra.mxu0 0.0
    %3004 = vmatprep.subr.mxu0 0.0
    %3005 = vmatpush1.msra.mxu0 0.0
    %3006 = vmatprep.subr.mxu0 0.0
    %3007 = vmatpush1.msra.mxu0 %v2897
    %3008 = vmatprep.subr.mxu0 0.0
    %3009 = vmatpush1.msra.mxu0 %v2896
    %3010 = vmatprep.subr.mxu0 0.0
    %3011 = vmatpush2.msra.mxu0 0.0
    %3012 = vmatprep.subr.mxu0 0.0
    %3013 = vmatpush2.msra.mxu0 0.0
    %3014 = vmatprep.subr.mxu0 0.0
    %3015 = vmatpush2.msra.mxu0 0.0
    %3016 = vmatprep.subr.mxu0 0.0
    %3017 = vmatpush2.msra.mxu0 0.0
    %3018 = vmatprep.subr.mxu0 0.0
    %3019 = vmatpush2.msra.mxu0 0.0
    %3020 = vmatprep.subr.mxu0 0.0
    %3021 = vmatpush2.msra.mxu0 0.0
    %3022 = vmatprep.subr.mxu0 0.0
    %3023 = vmatpush2.msra.mxu0 0.0
    %3024 = vmatprep.subr.mxu0 0.0
    %3025 = vmatpush2.msra.mxu0 0.0
    %3026 = vmatprep.subr.mxu0 0.0
    %3027 = vmatpush2.msra.mxu0 0.0
    %3028 = vmatprep.subr.mxu0 0.0
    %3029 = vmatpush2.msra.mxu0 0.0
    %3030 = vmatprep.subr.mxu0 0.0
    %3031 = vmatpush2.msra.mxu0 0.0
    %3032 = vmatprep.subr.mxu0 0.0
    %3033 = vmatpush2.msra.mxu0 0.0
    %3034 = vmatprep.subr.mxu0 0.0
    %3035 = vmatpush2.msra.mxu0 0.0
    %3036 = vmatprep.subr.mxu0 0.0
    %3037 = vmatpush2.msra.mxu0 0.0
    %3038 = vmatprep.subr.mxu0 0.0
    %3039 = vmatpush2.msra.mxu0 0.0
    %3040 = vmatprep.subr.mxu0 0.0
    %3041 = vmatpush2.msra.mxu0 0.0
    %3042 = vmatprep.mubr.f32.mxu0 0.0
    %3043 = vmatmul.mubr.f32.gmra.mxu0 %v2906
    %v3044 = vpop.f32.mrf.mxu0
    %v3045 = vadd.f32 0.0, %v3044
    %v3046 = vpop.f32.mrf.mxu0
    %3047 = vdwg.mxu0
    %v3048 = vld [vmem:[%s2 + $0x6] sm:$0x1]
    %v3049 = vlaneseq
    %v3050 = vshrl.u32 %v3049, 7
    %v3051 = vsub.s32 0, %v3050
    %v3052 = vrot.slane %v3048, %v3051
    %v3053 = vmul.f32 %v2975, %v3052
    %v3054 = vld [vmem:[%s2 + $0x7] sm:$0x1]
    %v3055 = vlaneseq
    %v3056 = vshrl.u32 %v3055, 7
    %v3057 = vsub.s32 0, %v3056
    %v3058 = vrot.slane %v3054, %v3057
    %v3059 = vadd.f32 %v3053, %v3058
    %s3060 = scalar_lea.vmem %s1, 2688
    %v3061 = vld [vmem:[%s3060] sm:$0xff]
    %v3062 = vld [vmem:[%s3060 + $0x8] sm:$0xff]
    %v3063 = vld [vmem:[%s3060 + $0x10] sm:$0xff]
    %v3064 = vld [vmem:[%s3060 + $0x18] sm:$0xff]
    %v3065 = vld [vmem:[%s3060 + $0x20] sm:$0xff]
    %v3066 = vld [vmem:[%s3060 + $0x28] sm:$0xff]
    %v3067 = vld [vmem:[%s3060 + $0x30] sm:$0xff]
    %v3068 = vld [vmem:[%s3060 + $0x38] sm:$0xff]
    %v3069 = vld [vmem:[%s3060 + $0x40] sm:$0xff]
    %v3070 = vld [vmem:[%s3060 + $0x48] sm:$0xff]
    %v3071 = vld [vmem:[%s3060 + $0x50] sm:$0xff]
    %v3072 = vld [vmem:[%s3060 + $0x58] sm:$0xff]
    %v3073 = vld [vmem:[%s3060 + $0x60] sm:$0xff]
    %v3074 = vld [vmem:[%s3060 + $0x68] sm:$0xff]
    %v3075 = vld [vmem:[%s3060 + $0x70] sm:$0xff]
    %v3076 = vld [vmem:[%s3060 + $0x78] sm:$0xff]
    %v3077 = vld [vmem:[%s2 + $0x8] sm:$0x1]
    %v3078 = vlaneseq
    %v3079 = vshrl.u32 %v3078, 7
    %v3080 = vsub.s32 0, %v3079
    %v3081 = vrot.slane %v3077, %v3080
    %v3082 = vmul.f32 %v3045, %v3081
    %v3083 = vld [vmem:[%s2 + $0x9] sm:$0x1]
    %v3084 = vlaneseq
    %v3085 = vshrl.u32 %v3084, 7
    %v3086 = vsub.s32 0, %v3085
    %v3087 = vrot.slane %v3083, %v3086
    %v3088 = vadd.f32 %v3082, %v3087
    %s3089 = scalar_lea.vmem %s1, 2816
    %v3090 = vld [vmem:[%s3089] sm:$0xff]
    %v3091 = vld [vmem:[%s3089 + $0x8] sm:$0xff]
    %v3092 = vld [vmem:[%s3089 + $0x10] sm:$0xff]
    %v3093 = vld [vmem:[%s3089 + $0x18] sm:$0xff]
    %v3094 = vld [vmem:[%s3089 + $0x20] sm:$0xff]
    %v3095 = vld [vmem:[%s3089 + $0x28] sm:$0xff]
    %v3096 = vld [vmem:[%s3089 + $0x30] sm:$0xff]
    %v3097 = vld [vmem:[%s3089 + $0x38] sm:$0xff]
    %v3098 = vld [vmem:[%s3089 + $0x40] sm:$0xff]
    %v3099 = vld [vmem:[%s3089 + $0x48] sm:$0xff]
    %v3100 = vld [vmem:[%s3089 + $0x50] sm:$0xff]
    %v3101 = vld [vmem:[%s3089 + $0x58] sm:$0xff]
    %v3102 = vld [vmem:[%s3089 + $0x60] sm:$0xff]
    %v3103 = vld [vmem:[%s3089 + $0x68] sm:$0xff]
    %v3104 = vld [vmem:[%s3089 + $0x70] sm:$0xff]
    %v3105 = vld [vmem:[%s3089 + $0x78] sm:$0xff]
    %3106 = vmatprep.subr.mxu0 0.0
    %3107 = vmatpush1.msra.mxu0 %v3105
    %3108 = vmatprep.subr.mxu0 0.0
    %3109 = vmatpush1.msra.mxu0 %v3104
    %3110 = vmatprep.subr.mxu0 0.0
    %3111 = vmatpush1.msra.mxu0 %v3103
    %3112 = vmatprep.subr.mxu0 0.0
    %3113 = vmatpush1.msra.mxu0 %v3102
    %3114 = vmatprep.subr.mxu0 0.0
    %3115 = vmatpush1.msra.mxu0 %v3101
    %3116 = vmatprep.subr.mxu0 0.0
    %3117 = vmatpush1.msra.mxu0 %v3100
    %3118 = vmatprep.subr.mxu0 0.0
    %3119 = vmatpush1.msra.mxu0 %v3099
    %3120 = vmatprep.subr.mxu0 0.0
    %3121 = vmatpush1.msra.mxu0 %v3098
    %3122 = vmatprep.subr.mxu0 0.0
    %3123 = vmatpush1.msra.mxu0 %v3097
    %3124 = vmatprep.subr.mxu0 0.0
    %3125 = vmatpush1.msra.mxu0 %v3096
    %3126 = vmatprep.subr.mxu0 0.0
    %3127 = vmatpush1.msra.mxu0 %v3095
    %3128 = vmatprep.subr.mxu0 0.0
    %3129 = vmatpush1.msra.mxu0 %v3094
    %3130 = vmatprep.subr.mxu0 0.0
    %3131 = vmatpush1.msra.mxu0 %v3093
    %3132 = vmatprep.subr.mxu0 0.0
    %3133 = vmatpush1.msra.mxu0 %v3092
    %3134 = vmatprep.subr.mxu0 0.0
    %3135 = vmatpush1.msra.mxu0 %v3091
    %3136 = vmatprep.subr.mxu0 0.0
    %3137 = vmatpush1.msra.mxu0 %v3090
    %3138 = vmatprep.subr.mxu0 0.0
    %3139 = vmatpush2.msra.mxu0 0.0
    %3140 = vmatprep.subr.mxu0 0.0
    %3141 = vmatpush2.msra.mxu0 0.0
    %3142 = vmatprep.subr.mxu0 0.0
    %3143 = vmatpush2.msra.mxu0 0.0
    %3144 = vmatprep.subr.mxu0 0.0
    %3145 = vmatpush2.msra.mxu0 0.0
    %3146 = vmatprep.subr.mxu0 0.0
    %3147 = vmatpush2.msra.mxu0 0.0
    %3148 = vmatprep.subr.mxu0 0.0
    %3149 = vmatpush2.msra.mxu0 0.0
    %3150 = vmatprep.subr.mxu0 0.0
    %3151 = vmatpush2.msra.mxu0 0.0
    %3152 = vmatprep.subr.mxu0 0.0
    %3153 = vmatpush2.msra.mxu0 0.0
    %3154 = vmatprep.subr.mxu0 0.0
    %3155 = vmatpush2.msra.mxu0 0.0
    %3156 = vmatprep.subr.mxu0 0.0
    %3157 = vmatpush2.msra.mxu0 0.0
    %3158 = vmatprep.subr.mxu0 0.0
    %3159 = vmatpush2.msra.mxu0 0.0
    %3160 = vmatprep.subr.mxu0 0.0
    %3161 = vmatpush2.msra.mxu0 0.0
    %3162 = vmatprep.subr.mxu0 0.0
    %3163 = vmatpush2.msra.mxu0 0.0
    %3164 = vmatprep.subr.mxu0 0.0
    %3165 = vmatpush2.msra.mxu0 0.0
    %3166 = vmatprep.subr.mxu0 0.0
    %3167 = vmatpush2.msra.mxu0 0.0
    %3168 = vmatprep.subr.mxu0 0.0
    %3169 = vmatpush2.msra.mxu0 0.0
    %3170 = vmatprep.mubr.f32.mxu0 0.0
    %3171 = vmatmul.mubr.f32.gmra.mxu0 %v3088
    %v3172 = vpop.f32.mrf.mxu0
    %v3173 = vadd.f32 0.0, %v3172
    %v3174 = vpop.f32.mrf.mxu0
    %3175 = vdwg.mxu0
    %3176 = vmatprep.subr.mxu0 0.0
    %3177 = vmatpush1.msra.mxu0 %v3076
    %3178 = vmatprep.subr.mxu0 0.0
    %3179 = vmatpush1.msra.mxu0 %v3075
    %3180 = vmatprep.subr.mxu0 0.0
    %3181 = vmatpush1.msra.mxu0 %v3074
    %3182 = vmatprep.subr.mxu0 0.0
    %3183 = vmatpush1.msra.mxu0 %v3073
    %3184 = vmatprep.subr.mxu0 0.0
    %3185 = vmatpush1.msra.mxu0 %v3072
    %3186 = vmatprep.subr.mxu0 0.0
    %3187 = vmatpush1.msra.mxu0 %v3071
    %3188 = vmatprep.subr.mxu0 0.0
    %3189 = vmatpush1.msra.mxu0 %v3070
    %3190 = vmatprep.subr.mxu0 0.0
    %3191 = vmatpush1.msra.mxu0 %v3069
    %3192 = vmatprep.subr.mxu0 0.0
    %3193 = vmatpush1.msra.mxu0 %v3068
    %3194 = vmatprep.subr.mxu0 0.0
    %3195 = vmatpush1.msra.mxu0 %v3067
    %3196 = vmatprep.subr.mxu0 0.0
    %3197 = vmatpush1.msra.mxu0 %v3066
    %3198 = vmatprep.subr.mxu0 0.0
    %3199 = vmatpush1.msra.mxu0 %v3065
    %3200 = vmatprep.subr.mxu0 0.0
    %3201 = vmatpush1.msra.mxu0 %v3064
    %3202 = vmatprep.subr.mxu0 0.0
    %3203 = vmatpush1.msra.mxu0 %v3063
    %3204 = vmatprep.subr.mxu0 0.0
    %3205 = vmatpush1.msra.mxu0 %v3062
    %3206 = vmatprep.subr.mxu0 0.0
    %3207 = vmatpush1.msra.mxu0 %v3061
    %3208 = vmatprep.subr.mxu0 0.0
    %3209 = vmatpush2.msra.mxu0 0.0
    %3210 = vmatprep.subr.mxu0 0.0
    %3211 = vmatpush2.msra.mxu0 0.0
    %3212 = vmatprep.subr.mxu0 0.0
    %3213 = vmatpush2.msra.mxu0 0.0
    %3214 = vmatprep.subr.mxu0 0.0
    %3215 = vmatpush2.msra.mxu0 0.0
    %3216 = vmatprep.subr.mxu0 0.0
    %3217 = vmatpush2.msra.mxu0 0.0
    %3218 = vmatprep.subr.mxu0 0.0
    %3219 = vmatpush2.msra.mxu0 0.0
    %3220 = vmatprep.subr.mxu0 0.0
    %3221 = vmatpush2.msra.mxu0 0.0
    %3222 = vmatprep.subr.mxu0 0.0
    %3223 = vmatpush2.msra.mxu0 0.0
    %3224 = vmatprep.subr.mxu0 0.0
    %3225 = vmatpush2.msra.mxu0 0.0
    %3226 = vmatprep.subr.mxu0 0.0
    %3227 = vmatpush2.msra.mxu0 0.0
    %3228 = vmatprep.subr.mxu0 0.0
    %3229 = vmatpush2.msra.mxu0 0.0
    %3230 = vmatprep.subr.mxu0 0.0
    %3231 = vmatpush2.msra.mxu0 0.0
    %3232 = vmatprep.subr.mxu0 0.0
    %3233 = vmatpush2.msra.mxu0 0.0
    %3234 = vmatprep.subr.mxu0 0.0
    %3235 = vmatpush2.msra.mxu0 0.0
    %3236 = vmatprep.subr.mxu0 0.0
    %3237 = vmatpush2.msra.mxu0 0.0
    %3238 = vmatprep.subr.mxu0 0.0
    %3239 = vmatpush2.msra.mxu0 0.0
    %3240 = vmatprep.mubr.f32.mxu0 0.0
    %3241 = vmatmul.mubr.f32.gmra.mxu0 %v3059
    %v3242 = vpop.f32.mrf.mxu0
    %v3243 = vadd.f32 %v3173, %v3242
    %v3244 = vpop.f32.mrf.mxu0
    %3245 = vdwg.mxu0
    %v3246 = vld [vmem:[%s2 + $0xa] sm:$0x1]
    %v3247 = vlaneseq
    %v3248 = vshrl.u32 %v3247, 7
    %v3249 = vsub.s32 0, %v3248
    %v3250 = vrot.slane %v3246, %v3249
    %v3251 = vadd.f32 %v3243, %v3250
    %3252 = vst [vmem:[#allocation3] sm:$0x3] %v3251
    // Predicated region
    $region14: #{densenet1d_forward.1} parent=1 // pred_check
      _
    $region15: #{densenet1d_forward.1} parent=1 // pred_check_branch
      %3254 = sbr.rel (0) target = $region17
    $region16: #{densenet1d_forward.1} parent=1 // pred_region
      %s3256 = ssub.s32 32, 32
      %3257 = vsyncadd [#allocation4], %s3256
      %s3259 = sshll.u32 [#allocation3], 4
      %s3260 = int_to_ptr.vmem [resolvable:$true] %s3259
      %3262 = dma.vmem_to_hbm [thread:$0]  %s3260, 32, %s3, [#allocation4]
    $region17: #{densenet1d_forward.1} parent=1 // pred_fallthru
      _
    // Predicated region
    $region18: #{densenet1d_forward.1} parent=1 // pred_check
      _
    $region19: #{densenet1d_forward.1} parent=1 // pred_check_branch
      %3264 = sbr.rel (0) target = $region21
    $region20: #{densenet1d_forward.1} parent=1 // pred_region
      %3265 = dma.done [#allocation4], 32
    $region21: #{densenet1d_forward.1} parent=1 // pred_fallthru
      _
    %3266 = vsyncpa [#allocation4], 1

</llo_original>
